<compile_context>
chip_gen: v7x
topology: tpu7x:2x2x1
jax: 0.10.0
libtpu: 0.0.40
codegen_flags: <defaults>
</compile_context>

<pallas_src>
import jax
import jax.numpy as jnp
from jax.experimental import pallas as pl

EPS = 1e-5  # nn.BatchNorm2d default eps


# --------------------------------------------------------------------------- #
# Pallas kernels                                                               #
# --------------------------------------------------------------------------- #
def _matmul_bn_relu_kernel(x_ref, w_ref, p_ref, q_ref, g_ref, b_ref, o_ref):
    """y = x @ w (bf16 in, f32 acc) + fused BatchNorm2d(train) + ReLU.

    Output columns map to channels via  channel = column % C.  The tiny
    matrices  p (N, C) with entries 1/G  and  q (C, N) with entries 1  turn the
    per-column row-means into per-channel stats and broadcast them back, so the
    kernel needs only matmuls, an axis-0 reduction and elementwise math.
    """
    y = jnp.dot(x_ref[...], w_ref[...], preferred_element_type=jnp.float32)   # (M, N)
    p = p_ref[...]
    q = q_ref[...]
    # Per-channel batch mean over all (row, phase-column) positions.
    row_mean = jnp.mean(y, axis=0, keepdims=True)                             # (1, N)
    mean_c = jnp.dot(row_mean, p, preferred_element_type=jnp.float32)         # (1, C)
    mean_bc = jnp.dot(mean_c, q, preferred_element_type=jnp.float32)          # (1, N)
    d = y - mean_bc
    # Biased variance as E[(y - mean)^2]  (numerically non-negative).
    row_var = jnp.mean(d * d, axis=0, keepdims=True)                          # (1, N)
    var_c = jnp.dot(row_var, p, preferred_element_type=jnp.float32)           # (1, C)
    scale_c = g_ref[...] * jax.lax.rsqrt(var_c + EPS)                         # (1, C)
    scale_bc = jnp.dot(scale_c, q, preferred_element_type=jnp.float32)        # (1, N)
    beta_bc = jnp.dot(b_ref[...], q, preferred_element_type=jnp.float32)      # (1, N)
    o_ref[...] = jnp.maximum(d * scale_bc + beta_bc, 0.0)


def _matmul_tanh_kernel(x_ref, w_ref, o_ref):
    y = jnp.dot(x_ref[...], w_ref[...], preferred_element_type=jnp.float32)
    o_ref[...] = jnp.tanh(y)


def _fused_matmul_bn_relu(x, w, p, q, g, b):
    M, K = x.shape
    N = w.shape[1]
    C = p.shape[1]
    return pl.pallas_call(
        _matmul_bn_relu_kernel,
        out_shape=jax.ShapeDtypeStruct((M, N), jnp.float32),
        grid=(1,),
        in_specs=[
            pl.BlockSpec((M, K), lambda i: (0, 0)),
            pl.BlockSpec((K, N), lambda i: (0, 0)),
            pl.BlockSpec((N, C), lambda i: (0, 0)),
            pl.BlockSpec((C, N), lambda i: (0, 0)),
            pl.BlockSpec((1, C), lambda i: (0, 0)),
            pl.BlockSpec((1, C), lambda i: (0, 0)),
        ],
        out_specs=pl.BlockSpec((M, N), lambda i: (0, 0)),
    )(x, w, p, q, g, b)


def _fused_matmul_tanh(x, w):
    M, K = x.shape
    N = w.shape[1]
    return pl.pallas_call(
        _matmul_tanh_kernel,
        out_shape=jax.ShapeDtypeStruct((M, N), jnp.float32),
        grid=(1,),
        in_specs=[
            pl.BlockSpec((M, K), lambda i: (0, 0)),
            pl.BlockSpec((K, N), lambda i: (0, 0)),
        ],
        out_specs=pl.BlockSpec((M, N), lambda i: (0, 0)),
    )(x, w)


# --------------------------------------------------------------------------- #
# Layout glue (pure XLA, tiny tensors)                                         #
# --------------------------------------------------------------------------- #
def _im2col_3x3(x):
    """(B, H, W, C) NHWC -> (B*H*W, 9*C) zero-padded 3x3-neighborhood patches."""
    B, H, W, C = x.shape
    xp = jnp.pad(x, ((0, 0), (1, 1), (1, 1), (0, 0)))
    slabs = [xp[:, i:i + H, j:j + W, :] for i in range(3) for j in range(3)]
    return jnp.stack(slabs, axis=3).reshape(B * H * W, 9 * C)


def _pixel_shuffle_2x(y, B, H, W, C):
    """(B*H*W, 4*C) phase-major columns -> (B, 2H, 2W, C) NHWC."""
    return (y.reshape(B, H, W, 2, 2, C)
             .transpose(0, 1, 3, 2, 4, 5)
             .reshape(B, 2 * H, 2 * W, C))


# (output parity ph, neighborhood offset index d+1) -> kernel tap; missing = zero
_PHASE_TAP = {(0, 0): 3, (0, 1): 1, (1, 1): 2, (1, 2): 0}


def _phase_weight(w):
    """ConvTranspose2d(k=4, s=2, p=1) weight (Cin, Cout, 4, 4) -> (9*Cin, 4*Cout)
    matmul weight for the 3x3-neighborhood / 4-output-phase decomposition."""
    Cin, Cout = w.shape[0], w.shape[1]
    zero = jnp.zeros((Cin, Cout), w.dtype)
    phase_cols = []
    for ph in (0, 1):
        for pw in (0, 1):
            blocks = []
            for di in range(3):            # input row offset dh = di - 1
                for dj in range(3):        # input col offset dw = dj - 1
                    kh = _PHASE_TAP.get((ph, di))
                    kw = _PHASE_TAP.get((pw, dj))
                    blocks.append(zero if kh is None or kw is None else w[:, :, kh, kw])
            phase_cols.append(jnp.concatenate(blocks, axis=0))   # (9*Cin, Cout)
    return jnp.concatenate(phase_cols, axis=1)                   # (9*Cin, 4*Cout)


def _bn_group_mats(N, C):
    """Averaging (N, C) and broadcast (C, N) matrices for channel = column % C."""
    ch = jnp.arange(N) % C
    onehot = (ch[:, None] == jnp.arange(C)[None, :]).astype(jnp.float32)
    return onehot * (C / N), onehot.T


# --------------------------------------------------------------------------- #
# Generator layers (imgSize < 64 branch)                                       #
# --------------------------------------------------------------------------- #
def _layer1(z2, w1, g1, b1):
    """ConvTranspose2d(nz, C1, 4, 1, 0) on 1x1 input + BN + ReLU -> (B, 4, 4, C1)."""
    B, nz = z2.shape
    C1 = w1.shape[1]
    # (nz, C1, 4, 4) -> (nz, 16*C1): column = (kh*4 + kw)*C1 + co  (NHWC output)
    wm = w1.transpose(0, 2, 3, 1).reshape(nz, 16 * C1)
    p, q = _bn_group_mats(16 * C1, C1)
    y = _fused_matmul_bn_relu(z2.astype(jnp.bfloat16), wm.astype(jnp.bfloat16),
                              p, q, g1.reshape(1, C1), b1.reshape(1, C1))
    return y.reshape(B, 4, 4, C1)


def _layer_up2x_bn_relu(x, w, g, b):
    """ConvTranspose2d(Cin, Cout, 4, 2, 1, bias=False) + BN + ReLU, NHWC in/out."""
    B, H, W, _ = x.shape
    Cout = w.shape[1]
    wm = _phase_weight(w)                                     # (9*Cin, 4*Cout)
    p, q = _bn_group_mats(4 * Cout, Cout)
    xcol = _im2col_3x3(x)                                     # (B*H*W, 9*Cin)
    y = _fused_matmul_bn_relu(xcol.astype(jnp.bfloat16), wm.astype(jnp.bfloat16),
                              p, q, g.reshape(1, Cout), b.reshape(1, Cout))
    return _pixel_shuffle_2x(y, B, H, W, Cout)


def _layer_up2x_tanh(x, w):
    """ConvTranspose2d(Cin, nc, 4, 2, 1, bias=False) + Tanh, NHWC in/out."""
    B, H, W, _ = x.shape
    Cout = w.shape[1]
    wm = _phase_weight(w)
    xcol = _im2col_3x3(x)
    y = _fused_matmul_tanh(xcol.astype(jnp.bfloat16), wm.astype(jnp.bfloat16))
    return _pixel_shuffle_2x(y, B, H, W, Cout)


def init_generator_params(key, nz, ngf, nc):
    k1, k2, k3, k4 = jax.random.split(key, 4)

    def convT_w(k, cin, cout):
        # DCGAN-style init, deterministic given the key; PyTorch layout (Cin, Cout, KH, KW)
        return 0.02 * jax.random.normal(k, (cin, cout, 4, 4), jnp.float32)

    def bn(c):
        # PyTorch BatchNorm2d default affine init: weight=1, bias=0
        return jnp.ones((c,), jnp.float32), jnp.zeros((c,), jnp.float32)

    g1, b1 = bn(ngf * 4)
    g2, b2 = bn(ngf * 2)
    g3, b3 = bn(ngf)
    return {
        "w1": convT_w(k1, nz, ngf * 4), "g1": g1, "b1": b1,
        "w2": convT_w(k2, ngf * 4, ngf * 2), "g2": g2, "b2": b2,
        "w3": convT_w(k3, ngf * 2, ngf), "g3": g3, "b3": b3,
        "w4": convT_w(k4, ngf, nc),
    }


def generator_forward(params, z):
    """z: (B, nz, 1, 1) NCHW -> images (B, nc, 32, 32) NCHW (matches PyTorch)."""
    B, nz = z.shape[0], z.shape[1]
    z2 = z.reshape(B, nz).astype(jnp.float32)
    x = _layer1(z2, params["w1"], params["g1"], params["b1"])              # (B, 4, 4, 4*ngf)
    x = _layer_up2x_bn_relu(x, params["w2"], params["g2"], params["b2"])   # (B, 8, 8, 2*ngf)
    x = _layer_up2x_bn_relu(x, params["w3"], params["g3"], params["b3"])   # (B, 16, 16, ngf)
    x = _layer_up2x_tanh(x, params["w4"])                                  # (B, 32, 32, nc)
    return x.transpose(0, 3, 1, 2)                                         # single NCHW convert


if __name__ == "__main__":
    # imgSize = 32 (< 64 branch), small deterministic config
    nz, ngf, nc = 32, 16, 3
    B = 2

    key = jax.random.PRNGKey(0)
    kp, kz = jax.random.split(key)
    params = init_generator_params(kp, nz, ngf, nc)
    z = jax.random.normal(kz, (B, nz, 1, 1), jnp.float32)  # latent input (NCHW)

    out = jax.jit(generator_forward)(params, z)
    out = jax.block_until_ready(out)

    assert out.shape == (B, nc, 32, 32), out.shape
    assert out.dtype == jnp.float32
    # tanh output must be bounded
    assert bool(jnp.all(jnp.abs(out) <= 1.0))
    print("KERNEL_OK")
</pallas_src>

<mosaic_0001>
module attributes {stable_mosaic.version = 11 : i64} {
  func.func @_matmul_bn_relu_kernel(%arg0: i32, %arg1: memref<2x32xbf16, #tpu.memory_space<vmem>>, %arg2: memref<32x1024xbf16, #tpu.memory_space<vmem>>, %arg3: memref<1024x64xf32, #tpu.memory_space<vmem>>, %arg4: memref<64x1024xf32, #tpu.memory_space<vmem>>, %arg5: memref<1x64xf32, #tpu.memory_space<vmem>>, %arg6: memref<1x64xf32, #tpu.memory_space<vmem>>, %arg7: memref<2x1024xf32, #tpu.memory_space<vmem>>) attributes {dimension_semantics = [#tpu.dimension_semantics<arbitrary>], iteration_bounds = array<i64: 1>, scalar_prefetch = 0 : i64, scratch_operands = 0 : i64, tpu.core_type = #tpu.core_type<tc>, window_params = [{pipeline_mode = #tpu.pipeline_mode<synchronous>, transform_indices = @transform_0, window_bounds = array<i64: 2, 32>}, {pipeline_mode = #tpu.pipeline_mode<synchronous>, transform_indices = @transform_1, window_bounds = array<i64: 32, 1024>}, {pipeline_mode = #tpu.pipeline_mode<synchronous>, transform_indices = @transform_2, window_bounds = array<i64: 1024, 64>}, {pipeline_mode = #tpu.pipeline_mode<synchronous>, transform_indices = @transform_3, window_bounds = array<i64: 64, 1024>}, {pipeline_mode = #tpu.pipeline_mode<synchronous>, transform_indices = @transform_4, window_bounds = array<i64: 1, 64>}, {pipeline_mode = #tpu.pipeline_mode<synchronous>, transform_indices = @transform_5, window_bounds = array<i64: 1, 64>}, {pipeline_mode = #tpu.pipeline_mode<synchronous>, transform_indices = @transform_6, window_bounds = array<i64: 2, 1024>}]} {
    %c0 = arith.constant 0 : index
    %c0_0 = arith.constant 0 : index
    %0 = vector.load %arg1[%c0, %c0_0] : memref<2x32xbf16, #tpu.memory_space<vmem>>, vector<2x32xbf16>
    %c0_1 = arith.constant 0 : index
    %c0_2 = arith.constant 0 : index
    %1 = vector.load %arg2[%c0_1, %c0_2] : memref<32x1024xbf16, #tpu.memory_space<vmem>>, vector<32x1024xbf16>
    %cst = arith.constant dense<0.000000e+00> : vector<2x1024xf32>
    %2 = tpu.matmul %0, %1, %cst {dimension_numbers = #tpu.dot_dimension_numbers<[1], [0], [0], [1], [0, 0, 1, 1], [], []>} : vector<2x32xbf16>, vector<32x1024xbf16>, vector<2x1024xf32> -> vector<2x1024xf32>
    %c0_3 = arith.constant 0 : index
    %c0_4 = arith.constant 0 : index
    %3 = vector.load %arg3[%c0_3, %c0_4] : memref<1024x64xf32, #tpu.memory_space<vmem>>, vector<1024x64xf32>
    %c0_5 = arith.constant 0 : index
    %c0_6 = arith.constant 0 : index
    %4 = vector.load %arg4[%c0_5, %c0_6] : memref<64x1024xf32, #tpu.memory_space<vmem>>, vector<64x1024xf32>
    %cst_7 = arith.constant dense<0.000000e+00> : vector<1024xf32>
    %5 = vector.multi_reduction <add>, %2, %cst_7 [0] : vector<2x1024xf32> to vector<1024xf32>
    %6 = vector.shape_cast %5 : vector<1024xf32> to vector<1x1024xf32>
    %cst_8 = arith.constant 2.000000e+00 : f32
    %7 = vector.broadcast %cst_8 : f32 to vector<1x1024xf32>
    %8 = arith.divf %6, %7 : vector<1x1024xf32>
    %cst_9 = arith.constant dense<0.000000e+00> : vector<1x64xf32>
    %9 = tpu.matmul %8, %3, %cst_9 {dimension_numbers = #tpu.dot_dimension_numbers<[1], [0], [0], [1], [0, 0, 1, 1], [], []>} : vector<1x1024xf32>, vector<1024x64xf32>, vector<1x64xf32> -> vector<1x64xf32>
    %cst_10 = arith.constant dense<0.000000e+00> : vector<1x1024xf32>
    %10 = tpu.matmul %9, %4, %cst_10 {dimension_numbers = #tpu.dot_dimension_numbers<[1], [0], [0], [1], [0, 0, 1, 1], [], []>} : vector<1x64xf32>, vector<64x1024xf32>, vector<1x1024xf32> -> vector<1x1024xf32>
    %11 = vector.broadcast %10 : vector<1x1024xf32> to vector<2x1024xf32>
    %12 = arith.subf %2, %11 : vector<2x1024xf32>
    %13 = arith.mulf %12, %12 : vector<2x1024xf32>
    %cst_11 = arith.constant dense<0.000000e+00> : vector<1024xf32>
    %14 = vector.multi_reduction <add>, %13, %cst_11 [0] : vector<2x1024xf32> to vector<1024xf32>
    %15 = vector.shape_cast %14 : vector<1024xf32> to vector<1x1024xf32>
    %cst_12 = arith.constant 2.000000e+00 : f32
    %16 = vector.broadcast %cst_12 : f32 to vector<1x1024xf32>
    %17 = arith.divf %15, %16 : vector<1x1024xf32>
    %cst_13 = arith.constant dense<0.000000e+00> : vector<1x64xf32>
    %18 = tpu.matmul %17, %3, %cst_13 {dimension_numbers = #tpu.dot_dimension_numbers<[1], [0], [0], [1], [0, 0, 1, 1], [], []>} : vector<1x1024xf32>, vector<1024x64xf32>, vector<1x64xf32> -> vector<1x64xf32>
    %c0_14 = arith.constant 0 : index
    %c0_15 = arith.constant 0 : index
    %19 = vector.load %arg5[%c0_14, %c0_15] : memref<1x64xf32, #tpu.memory_space<vmem>>, vector<1x64xf32>
    %cst_16 = arith.constant 9.99999974E-6 : f32
    %20 = vector.broadcast %cst_16 : f32 to vector<1x64xf32>
    %21 = arith.addf %18, %20 : vector<1x64xf32>
    %22 = math.rsqrt %21 : vector<1x64xf32>
    %23 = arith.mulf %19, %22 : vector<1x64xf32>
    %cst_17 = arith.constant dense<0.000000e+00> : vector<1x1024xf32>
    %24 = tpu.matmul %23, %4, %cst_17 {dimension_numbers = #tpu.dot_dimension_numbers<[1], [0], [0], [1], [0, 0, 1, 1], [], []>} : vector<1x64xf32>, vector<64x1024xf32>, vector<1x1024xf32> -> vector<1x1024xf32>
    %c0_18 = arith.constant 0 : index
    %c0_19 = arith.constant 0 : index
    %25 = vector.load %arg6[%c0_18, %c0_19] : memref<1x64xf32, #tpu.memory_space<vmem>>, vector<1x64xf32>
    %cst_20 = arith.constant dense<0.000000e+00> : vector<1x1024xf32>
    %26 = tpu.matmul %25, %4, %cst_20 {dimension_numbers = #tpu.dot_dimension_numbers<[1], [0], [0], [1], [0, 0, 1, 1], [], []>} : vector<1x64xf32>, vector<64x1024xf32>, vector<1x1024xf32> -> vector<1x1024xf32>
    %27 = vector.broadcast %24 : vector<1x1024xf32> to vector<2x1024xf32>
    %28 = arith.mulf %12, %27 : vector<2x1024xf32>
    %29 = vector.broadcast %26 : vector<1x1024xf32> to vector<2x1024xf32>
    %30 = arith.addf %28, %29 : vector<2x1024xf32>
    %cst_21 = arith.constant 0.000000e+00 : f32
    %31 = vector.broadcast %cst_21 : f32 to vector<2x1024xf32>
    %32 = arith.maximumf %30, %31 : vector<2x1024xf32>
    %c0_22 = arith.constant 0 : index
    %c0_23 = arith.constant 0 : index
    %33 = vector.load %arg7[%c0_22, %c0_23] : memref<2x1024xf32, #tpu.memory_space<vmem>>, vector<2x1024xf32>
    tpu.vector_store %arg7[%c0_22, %c0_23], %32 {strides = array<i32>} : memref<2x1024xf32, #tpu.memory_space<vmem>>, vector<2x1024xf32>,
    return
  }
  func.func @transform_0(%arg0: i32) -> (i32, i32) {
    %c0_i32 = arith.constant 0 : i32
    %c0_i32_0 = arith.constant 0 : i32
    %c0_i32_1 = arith.constant 0 : i32
    return %c0_i32, %c0_i32_0 : i32, i32
  }
  func.func @transform_1(%arg0: i32) -> (i32, i32) {
    %c0_i32 = arith.constant 0 : i32
    %c0_i32_0 = arith.constant 0 : i32
    %c0_i32_1 = arith.constant 0 : i32
    return %c0_i32, %c0_i32_0 : i32, i32
  }
  func.func @transform_2(%arg0: i32) -> (i32, i32) {
    %c0_i32 = arith.constant 0 : i32
    %c0_i32_0 = arith.constant 0 : i32
    %c0_i32_1 = arith.constant 0 : i32
    return %c0_i32, %c0_i32_0 : i32, i32
  }
  func.func @transform_3(%arg0: i32) -> (i32, i32) {
    %c0_i32 = arith.constant 0 : i32
    %c0_i32_0 = arith.constant 0 : i32
    %c0_i32_1 = arith.constant 0 : i32
    return %c0_i32, %c0_i32_0 : i32, i32
  }
  func.func @transform_4(%arg0: i32) -> (i32, i32) {
    %c0_i32 = arith.constant 0 : i32
    %c0_i32_0 = arith.constant 0 : i32
    %c0_i32_1 = arith.constant 0 : i32
    return %c0_i32, %c0_i32_0 : i32, i32
  }
  func.func @transform_5(%arg0: i32) -> (i32, i32) {
    %c0_i32 = arith.constant 0 : i32
    %c0_i32_0 = arith.constant 0 : i32
    %c0_i32_1 = arith.constant 0 : i32
    return %c0_i32, %c0_i32_0 : i32, i32
  }
  func.func @transform_6(%arg0: i32) -> (i32, i32) {
    %c0_i32 = arith.constant 0 : i32
    %c0_i32_0 = arith.constant 0 : i32
    %c0_i32_1 = arith.constant 0 : i32
    return %c0_i32, %c0_i32_0 : i32, i32
  }
}

module attributes {stable_mosaic.version = 11 : i64} {
  func.func @_matmul_bn_relu_kernel(%arg0: i32, %arg1: memref<32x576xbf16, #tpu.memory_space<vmem>>, %arg2: memref<576x128xbf16, #tpu.memory_space<vmem>>, %arg3: memref<128x32xf32, #tpu.memory_space<vmem>>, %arg4: memref<32x128xf32, #tpu.memory_space<vmem>>, %arg5: memref<1x32xf32, #tpu.memory_space<vmem>>, %arg6: memref<1x32xf32, #tpu.memory_space<vmem>>, %arg7: memref<32x128xf32, #tpu.memory_space<vmem>>) attributes {dimension_semantics = [#tpu.dimension_semantics<arbitrary>], iteration_bounds = array<i64: 1>, scalar_prefetch = 0 : i64, scratch_operands = 0 : i64, tpu.core_type = #tpu.core_type<tc>, window_params = [{pipeline_mode = #tpu.pipeline_mode<synchronous>, transform_indices = @transform_0, window_bounds = array<i64: 32, 576>}, {pipeline_mode = #tpu.pipeline_mode<synchronous>, transform_indices = @transform_1, window_bounds = array<i64: 576, 128>}, {pipeline_mode = #tpu.pipeline_mode<synchronous>, transform_indices = @transform_2, window_bounds = array<i64: 128, 32>}, {pipeline_mode = #tpu.pipeline_mode<synchronous>, transform_indices = @transform_3, window_bounds = array<i64: 32, 128>}, {pipeline_mode = #tpu.pipeline_mode<synchronous>, transform_indices = @transform_4, window_bounds = array<i64: 1, 32>}, {pipeline_mode = #tpu.pipeline_mode<synchronous>, transform_indices = @transform_5, window_bounds = array<i64: 1, 32>}, {pipeline_mode = #tpu.pipeline_mode<synchronous>, transform_indices = @transform_6, window_bounds = array<i64: 32, 128>}]} {
    %c0 = arith.constant 0 : index
    %c0_0 = arith.constant 0 : index
    %0 = vector.load %arg1[%c0, %c0_0] : memref<32x576xbf16, #tpu.memory_space<vmem>>, vector<32x576xbf16>
    %c0_1 = arith.constant 0 : index
    %c0_2 = arith.constant 0 : index
    %1 = vector.load %arg2[%c0_1, %c0_2] : memref<576x128xbf16, #tpu.memory_space<vmem>>, vector<576x128xbf16>
    %cst = arith.constant dense<0.000000e+00> : vector<32x128xf32>
    %2 = tpu.matmul %0, %1, %cst {dimension_numbers = #tpu.dot_dimension_numbers<[1], [0], [0], [1], [0, 0, 1, 1], [], []>} : vector<32x576xbf16>, vector<576x128xbf16>, vector<32x128xf32> -> vector<32x128xf32>
    %c0_3 = arith.constant 0 : index
    %c0_4 = arith.constant 0 : index
    %3 = vector.load %arg3[%c0_3, %c0_4] : memref<128x32xf32, #tpu.memory_space<vmem>>, vector<128x32xf32>
    %c0_5 = arith.constant 0 : index
    %c0_6 = arith.constant 0 : index
    %4 = vector.load %arg4[%c0_5, %c0_6] : memref<32x128xf32, #tpu.memory_space<vmem>>, vector<32x128xf32>
    %cst_7 = arith.constant dense<0.000000e+00> : vector<128xf32>
    %5 = vector.multi_reduction <add>, %2, %cst_7 [0] : vector<32x128xf32> to vector<128xf32>
    %6 = vector.shape_cast %5 : vector<128xf32> to vector<1x128xf32>
    %cst_8 = arith.constant 3.200000e+01 : f32
    %7 = vector.broadcast %cst_8 : f32 to vector<1x128xf32>
    %8 = arith.divf %6, %7 : vector<1x128xf32>
    %cst_9 = arith.constant dense<0.000000e+00> : vector<1x32xf32>
    %9 = tpu.matmul %8, %3, %cst_9 {dimension_numbers = #tpu.dot_dimension_numbers<[1], [0], [0], [1], [0, 0, 1, 1], [], []>} : vector<1x128xf32>, vector<128x32xf32>, vector<1x32xf32> -> vector<1x32xf32>
    %cst_10 = arith.constant dense<0.000000e+00> : vector<1x128xf32>
    %10 = tpu.matmul %9, %4, %cst_10 {dimension_numbers = #tpu.dot_dimension_numbers<[1], [0], [0], [1], [0, 0, 1, 1], [], []>} : vector<1x32xf32>, vector<32x128xf32>, vector<1x128xf32> -> vector<1x128xf32>
    %11 = vector.broadcast %10 : vector<1x128xf32> to vector<32x128xf32>
    %12 = arith.subf %2, %11 : vector<32x128xf32>
    %13 = arith.mulf %12, %12 : vector<32x128xf32>
    %cst_11 = arith.constant dense<0.000000e+00> : vector<128xf32>
    %14 = vector.multi_reduction <add>, %13, %cst_11 [0] : vector<32x128xf32> to vector<128xf32>
    %15 = vector.shape_cast %14 : vector<128xf32> to vector<1x128xf32>
    %cst_12 = arith.constant 3.200000e+01 : f32
    %16 = vector.broadcast %cst_12 : f32 to vector<1x128xf32>
    %17 = arith.divf %15, %16 : vector<1x128xf32>
    %cst_13 = arith.constant dense<0.000000e+00> : vector<1x32xf32>
    %18 = tpu.matmul %17, %3, %cst_13 {dimension_numbers = #tpu.dot_dimension_numbers<[1], [0], [0], [1], [0, 0, 1, 1], [], []>} : vector<1x128xf32>, vector<128x32xf32>, vector<1x32xf32> -> vector<1x32xf32>
    %c0_14 = arith.constant 0 : index
    %c0_15 = arith.constant 0 : index
    %19 = vector.load %arg5[%c0_14, %c0_15] : memref<1x32xf32, #tpu.memory_space<vmem>>, vector<1x32xf32>
    %cst_16 = arith.constant 9.99999974E-6 : f32
    %20 = vector.broadcast %cst_16 : f32 to vector<1x32xf32>
    %21 = arith.addf %18, %20 : vector<1x32xf32>
    %22 = math.rsqrt %21 : vector<1x32xf32>
    %23 = arith.mulf %19, %22 : vector<1x32xf32>
    %cst_17 = arith.constant dense<0.000000e+00> : vector<1x128xf32>
    %24 = tpu.matmul %23, %4, %cst_17 {dimension_numbers = #tpu.dot_dimension_numbers<[1], [0], [0], [1], [0, 0, 1, 1], [], []>} : vector<1x32xf32>, vector<32x128xf32>, vector<1x128xf32> -> vector<1x128xf32>
    %c0_18 = arith.constant 0 : index
    %c0_19 = arith.constant 0 : index
    %25 = vector.load %arg6[%c0_18, %c0_19] : memref<1x32xf32, #tpu.memory_space<vmem>>, vector<1x32xf32>
    %cst_20 = arith.constant dense<0.000000e+00> : vector<1x128xf32>
    %26 = tpu.matmul %25, %4, %cst_20 {dimension_numbers = #tpu.dot_dimension_numbers<[1], [0], [0], [1], [0, 0, 1, 1], [], []>} : vector<1x32xf32>, vector<32x128xf32>, vector<1x128xf32> -> vector<1x128xf32>
    %27 = vector.broadcast %24 : vector<1x128xf32> to vector<32x128xf32>
    %28 = arith.mulf %12, %27 : vector<32x128xf32>
    %29 = vector.broadcast %26 : vector<1x128xf32> to vector<32x128xf32>
    %30 = arith.addf %28, %29 : vector<32x128xf32>
    %cst_21 = arith.constant 0.000000e+00 : f32
    %31 = vector.broadcast %cst_21 : f32 to vector<32x128xf32>
    %32 = arith.maximumf %30, %31 : vector<32x128xf32>
    %c0_22 = arith.constant 0 : index
    %c0_23 = arith.constant 0 : index
    %33 = vector.load %arg7[%c0_22, %c0_23] : memref<32x128xf32, #tpu.memory_space<vmem>>, vector<32x128xf32>
    tpu.vector_store %arg7[%c0_22, %c0_23], %32 {strides = array<i32>} : memref<32x128xf32, #tpu.memory_space<vmem>>, vector<32x128xf32>,
    return
  }
  func.func @transform_0(%arg0: i32) -> (i32, i32) {
    %c0_i32 = arith.constant 0 : i32
    %c0_i32_0 = arith.constant 0 : i32
    %c0_i32_1 = arith.constant 0 : i32
    return %c0_i32, %c0_i32_0 : i32, i32
  }
  func.func @transform_1(%arg0: i32) -> (i32, i32) {
    %c0_i32 = arith.constant 0 : i32
    %c0_i32_0 = arith.constant 0 : i32
    %c0_i32_1 = arith.constant 0 : i32
    return %c0_i32, %c0_i32_0 : i32, i32
  }
  func.func @transform_2(%arg0: i32) -> (i32, i32) {
    %c0_i32 = arith.constant 0 : i32
    %c0_i32_0 = arith.constant 0 : i32
    %c0_i32_1 = arith.constant 0 : i32
    return %c0_i32, %c0_i32_0 : i32, i32
  }
  func.func @transform_3(%arg0: i32) -> (i32, i32) {
    %c0_i32 = arith.constant 0 : i32
    %c0_i32_0 = arith.constant 0 : i32
    %c0_i32_1 = arith.constant 0 : i32
    return %c0_i32, %c0_i32_0 : i32, i32
  }
  func.func @transform_4(%arg0: i32) -> (i32, i32) {
    %c0_i32 = arith.constant 0 : i32
    %c0_i32_0 = arith.constant 0 : i32
    %c0_i32_1 = arith.constant 0 : i32
    return %c0_i32, %c0_i32_0 : i32, i32
  }
  func.func @transform_5(%arg0: i32) -> (i32, i32) {
    %c0_i32 = arith.constant 0 : i32
    %c0_i32_0 = arith.constant 0 : i32
    %c0_i32_1 = arith.constant 0 : i32
    return %c0_i32, %c0_i32_0 : i32, i32
  }
  func.func @transform_6(%arg0: i32) -> (i32, i32) {
    %c0_i32 = arith.constant 0 : i32
    %c0_i32_0 = arith.constant 0 : i32
    %c0_i32_1 = arith.constant 0 : i32
    return %c0_i32, %c0_i32_0 : i32, i32
  }
}

module attributes {stable_mosaic.version = 11 : i64} {
  func.func @_matmul_bn_relu_kernel(%arg0: i32, %arg1: memref<128x288xbf16, #tpu.memory_space<vmem>>, %arg2: memref<288x64xbf16, #tpu.memory_space<vmem>>, %arg3: memref<64x16xf32, #tpu.memory_space<vmem>>, %arg4: memref<16x64xf32, #tpu.memory_space<vmem>>, %arg5: memref<1x16xf32, #tpu.memory_space<vmem>>, %arg6: memref<1x16xf32, #tpu.memory_space<vmem>>, %arg7: memref<128x64xf32, #tpu.memory_space<vmem>>) attributes {dimension_semantics = [#tpu.dimension_semantics<arbitrary>], iteration_bounds = array<i64: 1>, scalar_prefetch = 0 : i64, scratch_operands = 0 : i64, tpu.core_type = #tpu.core_type<tc>, window_params = [{pipeline_mode = #tpu.pipeline_mode<synchronous>, transform_indices = @transform_0, window_bounds = array<i64: 128, 288>}, {pipeline_mode = #tpu.pipeline_mode<synchronous>, transform_indices = @transform_1, window_bounds = array<i64: 288, 64>}, {pipeline_mode = #tpu.pipeline_mode<synchronous>, transform_indices = @transform_2, window_bounds = array<i64: 64, 16>}, {pipeline_mode = #tpu.pipeline_mode<synchronous>, transform_indices = @transform_3, window_bounds = array<i64: 16, 64>}, {pipeline_mode = #tpu.pipeline_mode<synchronous>, transform_indices = @transform_4, window_bounds = array<i64: 1, 16>}, {pipeline_mode = #tpu.pipeline_mode<synchronous>, transform_indices = @transform_5, window_bounds = array<i64: 1, 16>}, {pipeline_mode = #tpu.pipeline_mode<synchronous>, transform_indices = @transform_6, window_bounds = array<i64: 128, 64>}]} {
    %c0 = arith.constant 0 : index
    %c0_0 = arith.constant 0 : index
    %0 = vector.load %arg1[%c0, %c0_0] : memref<128x288xbf16, #tpu.memory_space<vmem>>, vector<128x288xbf16>
    %c0_1 = arith.constant 0 : index
    %c0_2 = arith.constant 0 : index
    %1 = vector.load %arg2[%c0_1, %c0_2] : memref<288x64xbf16, #tpu.memory_space<vmem>>, vector<288x64xbf16>
    %cst = arith.constant dense<0.000000e+00> : vector<128x64xf32>
    %2 = tpu.matmul %0, %1, %cst {dimension_numbers = #tpu.dot_dimension_numbers<[1], [0], [0], [1], [0, 0, 1, 1], [], []>} : vector<128x288xbf16>, vector<288x64xbf16>, vector<128x64xf32> -> vector<128x64xf32>
    %c0_3 = arith.constant 0 : index
    %c0_4 = arith.constant 0 : index
    %3 = vector.load %arg3[%c0_3, %c0_4] : memref<64x16xf32, #tpu.memory_space<vmem>>, vector<64x16xf32>
    %c0_5 = arith.constant 0 : index
    %c0_6 = arith.constant 0 : index
    %4 = vector.load %arg4[%c0_5, %c0_6] : memref<16x64xf32, #tpu.memory_space<vmem>>, vector<16x64xf32>
    %cst_7 = arith.constant dense<0.000000e+00> : vector<64xf32>
    %5 = vector.multi_reduction <add>, %2, %cst_7 [0] : vector<128x64xf32> to vector<64xf32>
    %6 = vector.shape_cast %5 : vector<64xf32> to vector<1x64xf32>
    %cst_8 = arith.constant 1.280000e+02 : f32
    %7 = vector.broadcast %cst_8 : f32 to vector<1x64xf32>
    %8 = arith.divf %6, %7 : vector<1x64xf32>
    %cst_9 = arith.constant dense<0.000000e+00> : vector<1x16xf32>
    %9 = tpu.matmul %8, %3, %cst_9 {dimension_numbers = #tpu.dot_dimension_numbers<[1], [0], [0], [1], [0, 0, 1, 1], [], []>} : vector<1x64xf32>, vector<64x16xf32>, vector<1x16xf32> -> vector<1x16xf32>
    %cst_10 = arith.constant dense<0.000000e+00> : vector<1x64xf32>
    %10 = tpu.matmul %9, %4, %cst_10 {dimension_numbers = #tpu.dot_dimension_numbers<[1], [0], [0], [1], [0, 0, 1, 1], [], []>} : vector<1x16xf32>, vector<16x64xf32>, vector<1x64xf32> -> vector<1x64xf32>
    %11 = vector.broadcast %10 : vector<1x64xf32> to vector<128x64xf32>
    %12 = arith.subf %2, %11 : vector<128x64xf32>
    %13 = arith.mulf %12, %12 : vector<128x64xf32>
    %cst_11 = arith.constant dense<0.000000e+00> : vector<64xf32>
    %14 = vector.multi_reduction <add>, %13, %cst_11 [0] : vector<128x64xf32> to vector<64xf32>
    %15 = vector.shape_cast %14 : vector<64xf32> to vector<1x64xf32>
    %cst_12 = arith.constant 1.280000e+02 : f32
    %16 = vector.broadcast %cst_12 : f32 to vector<1x64xf32>
    %17 = arith.divf %15, %16 : vector<1x64xf32>
    %cst_13 = arith.constant dense<0.000000e+00> : vector<1x16xf32>
    %18 = tpu.matmul %17, %3, %cst_13 {dimension_numbers = #tpu.dot_dimension_numbers<[1], [0], [0], [1], [0, 0, 1, 1], [], []>} : vector<1x64xf32>, vector<64x16xf32>, vector<1x16xf32> -> vector<1x16xf32>
    %c0_14 = arith.constant 0 : index
    %c0_15 = arith.constant 0 : index
    %19 = vector.load %arg5[%c0_14, %c0_15] : memref<1x16xf32, #tpu.memory_space<vmem>>, vector<1x16xf32>
    %cst_16 = arith.constant 9.99999974E-6 : f32
    %20 = vector.broadcast %cst_16 : f32 to vector<1x16xf32>
    %21 = arith.addf %18, %20 : vector<1x16xf32>
    %22 = math.rsqrt %21 : vector<1x16xf32>
    %23 = arith.mulf %19, %22 : vector<1x16xf32>
    %cst_17 = arith.constant dense<0.000000e+00> : vector<1x64xf32>
    %24 = tpu.matmul %23, %4, %cst_17 {dimension_numbers = #tpu.dot_dimension_numbers<[1], [0], [0], [1], [0, 0, 1, 1], [], []>} : vector<1x16xf32>, vector<16x64xf32>, vector<1x64xf32> -> vector<1x64xf32>
    %c0_18 = arith.constant 0 : index
    %c0_19 = arith.constant 0 : index
    %25 = vector.load %arg6[%c0_18, %c0_19] : memref<1x16xf32, #tpu.memory_space<vmem>>, vector<1x16xf32>
    %cst_20 = arith.constant dense<0.000000e+00> : vector<1x64xf32>
    %26 = tpu.matmul %25, %4, %cst_20 {dimension_numbers = #tpu.dot_dimension_numbers<[1], [0], [0], [1], [0, 0, 1, 1], [], []>} : vector<1x16xf32>, vector<16x64xf32>, vector<1x64xf32> -> vector<1x64xf32>
    %27 = vector.broadcast %24 : vector<1x64xf32> to vector<128x64xf32>
    %28 = arith.mulf %12, %27 : vector<128x64xf32>
    %29 = vector.broadcast %26 : vector<1x64xf32> to vector<128x64xf32>
    %30 = arith.addf %28, %29 : vector<128x64xf32>
    %cst_21 = arith.constant 0.000000e+00 : f32
    %31 = vector.broadcast %cst_21 : f32 to vector<128x64xf32>
    %32 = arith.maximumf %30, %31 : vector<128x64xf32>
    %c0_22 = arith.constant 0 : index
    %c0_23 = arith.constant 0 : index
    %33 = vector.load %arg7[%c0_22, %c0_23] : memref<128x64xf32, #tpu.memory_space<vmem>>, vector<128x64xf32>
    tpu.vector_store %arg7[%c0_22, %c0_23], %32 {strides = array<i32>} : memref<128x64xf32, #tpu.memory_space<vmem>>, vector<128x64xf32>,
    return
  }
  func.func @transform_0(%arg0: i32) -> (i32, i32) {
    %c0_i32 = arith.constant 0 : i32
    %c0_i32_0 = arith.constant 0 : i32
    %c0_i32_1 = arith.constant 0 : i32
    return %c0_i32, %c0_i32_0 : i32, i32
  }
  func.func @transform_1(%arg0: i32) -> (i32, i32) {
    %c0_i32 = arith.constant 0 : i32
    %c0_i32_0 = arith.constant 0 : i32
    %c0_i32_1 = arith.constant 0 : i32
    return %c0_i32, %c0_i32_0 : i32, i32
  }
  func.func @transform_2(%arg0: i32) -> (i32, i32) {
    %c0_i32 = arith.constant 0 : i32
    %c0_i32_0 = arith.constant 0 : i32
    %c0_i32_1 = arith.constant 0 : i32
    return %c0_i32, %c0_i32_0 : i32, i32
  }
  func.func @transform_3(%arg0: i32) -> (i32, i32) {
    %c0_i32 = arith.constant 0 : i32
    %c0_i32_0 = arith.constant 0 : i32
    %c0_i32_1 = arith.constant 0 : i32
    return %c0_i32, %c0_i32_0 : i32, i32
  }
  func.func @transform_4(%arg0: i32) -> (i32, i32) {
    %c0_i32 = arith.constant 0 : i32
    %c0_i32_0 = arith.constant 0 : i32
    %c0_i32_1 = arith.constant 0 : i32
    return %c0_i32, %c0_i32_0 : i32, i32
  }
  func.func @transform_5(%arg0: i32) -> (i32, i32) {
    %c0_i32 = arith.constant 0 : i32
    %c0_i32_0 = arith.constant 0 : i32
    %c0_i32_1 = arith.constant 0 : i32
    return %c0_i32, %c0_i32_0 : i32, i32
  }
  func.func @transform_6(%arg0: i32) -> (i32, i32) {
    %c0_i32 = arith.constant 0 : i32
    %c0_i32_0 = arith.constant 0 : i32
    %c0_i32_1 = arith.constant 0 : i32
    return %c0_i32, %c0_i32_0 : i32, i32
  }
}

module attributes {stable_mosaic.version = 11 : i64} {
  func.func @_matmul_tanh_kernel(%arg0: i32, %arg1: memref<512x144xbf16, #tpu.memory_space<vmem>>, %arg2: memref<144x12xbf16, #tpu.memory_space<vmem>>, %arg3: memref<512x12xf32, #tpu.memory_space<vmem>>) attributes {dimension_semantics = [#tpu.dimension_semantics<arbitrary>], iteration_bounds = array<i64: 1>, scalar_prefetch = 0 : i64, scratch_operands = 0 : i64, tpu.core_type = #tpu.core_type<tc>, window_params = [{pipeline_mode = #tpu.pipeline_mode<synchronous>, transform_indices = @transform_0, window_bounds = array<i64: 512, 144>}, {pipeline_mode = #tpu.pipeline_mode<synchronous>, transform_indices = @transform_1, window_bounds = array<i64: 144, 12>}, {pipeline_mode = #tpu.pipeline_mode<synchronous>, transform_indices = @transform_2, window_bounds = array<i64: 512, 12>}]} {
    %c0 = arith.constant 0 : index
    %c0_0 = arith.constant 0 : index
    %0 = vector.load %arg1[%c0, %c0_0] : memref<512x144xbf16, #tpu.memory_space<vmem>>, vector<512x144xbf16>
    %c0_1 = arith.constant 0 : index
    %c0_2 = arith.constant 0 : index
    %1 = vector.load %arg2[%c0_1, %c0_2] : memref<144x12xbf16, #tpu.memory_space<vmem>>, vector<144x12xbf16>
    %cst = arith.constant dense<0.000000e+00> : vector<512x12xf32>
    %2 = tpu.matmul %0, %1, %cst {dimension_numbers = #tpu.dot_dimension_numbers<[1], [0], [0], [1], [0, 0, 1, 1], [], []>} : vector<512x144xbf16>, vector<144x12xbf16>, vector<512x12xf32> -> vector<512x12xf32>
    %3 = math.tanh %2 : vector<512x12xf32>
    %c0_3 = arith.constant 0 : index
    %c0_4 = arith.constant 0 : index
    %4 = vector.load %arg3[%c0_3, %c0_4] : memref<512x12xf32, #tpu.memory_space<vmem>>, vector<512x12xf32>
    tpu.vector_store %arg3[%c0_3, %c0_4], %3 {strides = array<i32>} : memref<512x12xf32, #tpu.memory_space<vmem>>, vector<512x12xf32>,
    return
  }
  func.func @transform_0(%arg0: i32) -> (i32, i32) {
    %c0_i32 = arith.constant 0 : i32
    %c0_i32_0 = arith.constant 0 : i32
    %c0_i32_1 = arith.constant 0 : i32
    return %c0_i32, %c0_i32_0 : i32, i32
  }
  func.func @transform_1(%arg0: i32) -> (i32, i32) {
    %c0_i32 = arith.constant 0 : i32
    %c0_i32_0 = arith.constant 0 : i32
    %c0_i32_1 = arith.constant 0 : i32
    return %c0_i32, %c0_i32_0 : i32, i32
  }
  func.func @transform_2(%arg0: i32) -> (i32, i32) {
    %c0_i32 = arith.constant 0 : i32
    %c0_i32_0 = arith.constant 0 : i32
    %c0_i32_1 = arith.constant 0 : i32
    return %c0_i32, %c0_i32_0 : i32, i32
  }
}

</mosaic_0001>

<llo_original>
// kernel: generator_forward.4
$region0: #{generator_forward.4}
  #allocation0 [shape = 'u32[]', space=smem, size = 0x4, offset = 0x4, fixed_abs, tag = 'smem constant byte address 0x4 - core index']
  #allocation1 [shape = 'u32[144,128]{1,0:T(1,128)}', space=vmem, size = 0x12000, scoped, tag = 'internal scratch']
  %s0 = inlined_call_operand.vmem [shape: bf16[2,32], index: 0, kind: input, shape index: {}]
  %s1 = inlined_call_operand.vmem [shape: bf16[32,1024], index: 1, kind: input, shape index: {}]
  %s2 = inlined_call_operand.vmem [shape: f32[1024,64], index: 2, kind: input, shape index: {}]
  %s3 = inlined_call_operand.vmem [shape: f32[64,1024], index: 3, kind: input, shape index: {}]
  %s4 = inlined_call_operand.vmem [shape: f32[1,64], index: 4, kind: input, shape index: {}]
  %s5 = inlined_call_operand.vmem [shape: f32[1,64], index: 5, kind: input, shape index: {}]
  %s6 = inlined_call_operand.vmem [shape: f32[2,1024], index: 6, kind: output, shape index: {}]
  %s7 = sld [smem:[#allocation0]]
  $region34: #{generator_forward.4} parent=0
    _
  %s9 = ssub.s32 1, %s7
  %s10 = scalar_select 0, %s9, %s7
  // Predicated region
  $region2: #{generator_forward.4} parent=0 // pred_check
    _
  $region3: #{generator_forward.4} parent=0 // pred_check_branch
    %12 = sbr.rel (0) target = $region5
  $region4: #{generator_forward.4} parent=0 // pred_region
    _
  $region5: #{generator_forward.4} parent=0 // pred_fallthru
    _
  // Predicated region
  $region6: #{generator_forward.4} parent=0 // pred_check
    _
  $region7: #{generator_forward.4} parent=0 // pred_check_branch
    %14 = sbr.rel (0) target = $region9
  $region8: #{generator_forward.4} parent=0 // pred_region
    _
  $region9: #{generator_forward.4} parent=0 // pred_fallthru
    _
  // Predicated region
  $region10: #{generator_forward.4} parent=0 // pred_check
    _
  $region11: #{generator_forward.4} parent=0 // pred_check_branch
    %16 = sbr.rel (0) target = $region13
  $region12: #{generator_forward.4} parent=0 // pred_region
    _
  $region13: #{generator_forward.4} parent=0 // pred_fallthru
    _
  // Predicated region
  $region14: #{generator_forward.4} parent=0 // pred_check
    _
  $region15: #{generator_forward.4} parent=0 // pred_check_branch
    %18 = sbr.rel (0) target = $region17
  $region16: #{generator_forward.4} parent=0 // pred_region
    _
  $region17: #{generator_forward.4} parent=0 // pred_fallthru
    _
  // Predicated region
  $region18: #{generator_forward.4} parent=0 // pred_check
    _
  $region19: #{generator_forward.4} parent=0 // pred_check_branch
    %20 = sbr.rel (0) target = $region21
  $region20: #{generator_forward.4} parent=0 // pred_region
    _
  $region21: #{generator_forward.4} parent=0 // pred_fallthru
    _
  // Predicated region
  $region22: #{generator_forward.4} parent=0 // pred_check
    _
  $region23: #{generator_forward.4} parent=0 // pred_check_branch
    %22 = sbr.rel (0) target = $region25
  $region24: #{generator_forward.4} parent=0 // pred_region
    _
  $region25: #{generator_forward.4} parent=0 // pred_fallthru
    _
  %v24 = vld [vmem:[%s0] sm:$0x1]
  %v25 = vld [vmem:[%s1] sm:$0xff]
  %v26 = vld [vmem:[%s1 + $0x8] sm:$0xff]
  %v27 = vld [vmem:[%s1 + $0x10] sm:$0xff]
  %v28 = vld [vmem:[%s1 + $0x18] sm:$0xff]
  %v29 = vld [vmem:[%s1 + $0x20] sm:$0xff]
  %v30 = vld [vmem:[%s1 + $0x28] sm:$0xff]
  %v31 = vld [vmem:[%s1 + $0x30] sm:$0xff]
  %v32 = vld [vmem:[%s1 + $0x38] sm:$0xff]
  %v33 = vld [vmem:[%s1 + $0x40] sm:$0xff]
  %v34 = vld [vmem:[%s1 + $0x48] sm:$0xff]
  %v35 = vld [vmem:[%s1 + $0x50] sm:$0xff]
  %v36 = vld [vmem:[%s1 + $0x58] sm:$0xff]
  %v37 = vld [vmem:[%s1 + $0x60] sm:$0xff]
  %v38 = vld [vmem:[%s1 + $0x68] sm:$0xff]
  %v39 = vld [vmem:[%s1 + $0x70] sm:$0xff]
  %v40 = vld [vmem:[%s1 + $0x78] sm:$0xff]
  %v57 = vunpack.c.l.b16 %v25
  %v58 = vunpack.c.h.b16 %v25
  %v59 = vunpack.c.l.b16 %v26
  %v60 = vunpack.c.h.b16 %v26
  %v61 = vunpack.c.l.b16 %v27
  %v62 = vunpack.c.h.b16 %v27
  %v63 = vunpack.c.l.b16 %v28
  %v64 = vunpack.c.h.b16 %v28
  %v65 = vunpack.c.l.b16 %v29
  %v66 = vunpack.c.h.b16 %v29
  %v67 = vunpack.c.l.b16 %v30
  %v68 = vunpack.c.h.b16 %v30
  %v69 = vunpack.c.l.b16 %v31
  %v70 = vunpack.c.h.b16 %v31
  %v71 = vunpack.c.l.b16 %v32
  %v72 = vunpack.c.h.b16 %v32
  %v73 = vunpack.c.l.b16 %v33
  %v74 = vunpack.c.h.b16 %v33
  %v75 = vunpack.c.l.b16 %v34
  %v76 = vunpack.c.h.b16 %v34
  %v77 = vunpack.c.l.b16 %v35
  %v78 = vunpack.c.h.b16 %v35
  %v79 = vunpack.c.l.b16 %v36
  %v80 = vunpack.c.h.b16 %v36
  %v81 = vunpack.c.l.b16 %v37
  %v82 = vunpack.c.h.b16 %v37
  %v83 = vunpack.c.l.b16 %v38
  %v84 = vunpack.c.h.b16 %v38
  %v85 = vunpack.c.l.b16 %v39
  %v86 = vunpack.c.h.b16 %v39
  %v87 = vunpack.c.l.b16 %v40
  %v88 = vunpack.c.h.b16 %v40
  %v89 = vpack.c.b16 %v65, %v57
  %v90 = vpack.c.b16 %v66, %v58
  %v91 = vpack.c.b16 %v67, %v59
  %v92 = vpack.c.b16 %v68, %v60
  %v93 = vpack.c.b16 %v69, %v61
  %v94 = vpack.c.b16 %v70, %v62
  %v95 = vpack.c.b16 %v71, %v63
  %v96 = vpack.c.b16 %v72, %v64
  %v97 = vpack.c.b16 %v81, %v73
  %v98 = vpack.c.b16 %v82, %v74
  %v99 = vpack.c.b16 %v83, %v75
  %v100 = vpack.c.b16 %v84, %v76
  %v101 = vpack.c.b16 %v85, %v77
  %v102 = vpack.c.b16 %v86, %v78
  %v103 = vpack.c.b16 %v87, %v79
  %v104 = vpack.c.b16 %v88, %v80
  %vm121 = vcmask 261120
  %v123 = vsel %vm121, %v24, 0
  %125 = vmatprep.subr.bf16.mxu0 %v90
  %126 = vmatpush1.bf16.msra.mxu0 %v89
  %127 = vmatprep.subr.bf16.mxu0 %v98
  %128 = vmatpush1.bf16.msra.mxu0 %v97
  %129 = vmatprep.subr.bf16.mxu0 0
  %130 = vmatpush1.bf16.msra.mxu0 0
  %131 = vmatprep.subr.bf16.mxu0 0
  %132 = vmatpush1.bf16.msra.mxu0 0
  %133 = vmatprep.subr.bf16.mxu0 0
  %134 = vmatpush1.bf16.msra.mxu0 0
  %135 = vmatprep.subr.bf16.mxu0 0
  %136 = vmatpush1.bf16.msra.mxu0 0
  %137 = vmatprep.subr.bf16.mxu0 0
  %138 = vmatpush1.bf16.msra.mxu0 0
  %139 = vmatprep.subr.bf16.mxu0 0
  %140 = vmatpush1.bf16.msra.mxu0 0
  %141 = vmatprep.subr.bf16.mxu0 0
  %142 = vmatpush1.bf16.msra.mxu0 0
  %143 = vmatprep.subr.bf16.mxu0 0
  %144 = vmatpush1.bf16.msra.mxu0 0
  %145 = vmatprep.subr.bf16.mxu0 0
  %146 = vmatpush1.bf16.msra.mxu0 0
  %147 = vmatprep.subr.bf16.mxu0 0
  %148 = vmatpush1.bf16.msra.mxu0 0
  %149 = vmatprep.subr.bf16.mxu0 0
  %150 = vmatpush1.bf16.msra.mxu0 0
  %151 = vmatprep.subr.bf16.mxu0 0
  %152 = vmatpush1.bf16.msra.mxu0 0
  %153 = vmatprep.subr.bf16.mxu0 0
  %154 = vmatpush1.bf16.msra.mxu0 0
  %155 = vmatprep.subr.bf16.mxu0 0
  %156 = vmatpush1.bf16.msra.mxu0 0
  %157 = vmatprep.mubr.bf16.mxu0 0
  %158 = vmatmul.mubr.bf16.gmra.mrb[0].mxu0 %v123
  %v159 = vpop.f32.mrb[0].mxu0
  %v160 = vadd.f32 0.0, %v159
  %v161 = vpop.f32.mrb[0].mxu0
  %v162 = vadd.f32 0.0, %v161
  %v163 = vpop.f32.mrb[0].mxu0
  %v164 = vpop.f32.mrb[0].mxu0
  %165 = vdwg.mxu0
  %166 = vmatprep.subr.bf16.mxu0 %v92
  %167 = vmatpush1.bf16.msra.mxu0 %v91
  %168 = vmatprep.subr.bf16.mxu0 %v100
  %169 = vmatpush1.bf16.msra.mxu0 %v99
  %170 = vmatprep.subr.bf16.mxu0 0
  %171 = vmatpush1.bf16.msra.mxu0 0
  %172 = vmatprep.subr.bf16.mxu0 0
  %173 = vmatpush1.bf16.msra.mxu0 0
  %174 = vmatprep.subr.bf16.mxu0 0
  %175 = vmatpush1.bf16.msra.mxu0 0
  %176 = vmatprep.subr.bf16.mxu0 0
  %177 = vmatpush1.bf16.msra.mxu0 0
  %178 = vmatprep.subr.bf16.mxu0 0
  %179 = vmatpush1.bf16.msra.mxu0 0
  %180 = vmatprep.subr.bf16.mxu0 0
  %181 = vmatpush1.bf16.msra.mxu0 0
  %182 = vmatprep.subr.bf16.mxu0 0
  %183 = vmatpush1.bf16.msra.mxu0 0
  %184 = vmatprep.subr.bf16.mxu0 0
  %185 = vmatpush1.bf16.msra.mxu0 0
  %186 = vmatprep.subr.bf16.mxu0 0
  %187 = vmatpush1.bf16.msra.mxu0 0
  %188 = vmatprep.subr.bf16.mxu0 0
  %189 = vmatpush1.bf16.msra.mxu0 0
  %190 = vmatprep.subr.bf16.mxu0 0
  %191 = vmatpush1.bf16.msra.mxu0 0
  %192 = vmatprep.subr.bf16.mxu0 0
  %193 = vmatpush1.bf16.msra.mxu0 0
  %194 = vmatprep.subr.bf16.mxu0 0
  %195 = vmatpush1.bf16.msra.mxu0 0
  %196 = vmatprep.subr.bf16.mxu0 0
  %197 = vmatpush1.bf16.msra.mxu0 0
  %198 = vmatprep.mubr.bf16.mxu0 0
  %199 = vmatmul.mubr.bf16.gmra.mrb[0].mxu0 %v123
  %v200 = vpop.f32.mrb[0].mxu0
  %v201 = vadd.f32 0.0, %v200
  %v202 = vpop.f32.mrb[0].mxu0
  %v203 = vadd.f32 0.0, %v202
  %v204 = vpop.f32.mrb[0].mxu0
  %v205 = vpop.f32.mrb[0].mxu0
  %206 = vdwg.mxu0
  %207 = vmatprep.subr.bf16.mxu0 %v94
  %208 = vmatpush1.bf16.msra.mxu0 %v93
  %209 = vmatprep.subr.bf16.mxu0 %v102
  %210 = vmatpush1.bf16.msra.mxu0 %v101
  %211 = vmatprep.subr.bf16.mxu0 0
  %212 = vmatpush1.bf16.msra.mxu0 0
  %213 = vmatprep.subr.bf16.mxu0 0
  %214 = vmatpush1.bf16.msra.mxu0 0
  %215 = vmatprep.subr.bf16.mxu0 0
  %216 = vmatpush1.bf16.msra.mxu0 0
  %217 = vmatprep.subr.bf16.mxu0 0
  %218 = vmatpush1.bf16.msra.mxu0 0
  %219 = vmatprep.subr.bf16.mxu0 0
  %220 = vmatpush1.bf16.msra.mxu0 0
  %221 = vmatprep.subr.bf16.mxu0 0
  %222 = vmatpush1.bf16.msra.mxu0 0
  %223 = vmatprep.subr.bf16.mxu0 0
  %224 = vmatpush1.bf16.msra.mxu0 0
  %225 = vmatprep.subr.bf16.mxu0 0
  %226 = vmatpush1.bf16.msra.mxu0 0
  %227 = vmatprep.subr.bf16.mxu0 0
  %228 = vmatpush1.bf16.msra.mxu0 0
  %229 = vmatprep.subr.bf16.mxu0 0
  %230 = vmatpush1.bf16.msra.mxu0 0
  %231 = vmatprep.subr.bf16.mxu0 0
  %232 = vmatpush1.bf16.msra.mxu0 0
  %233 = vmatprep.subr.bf16.mxu0 0
  %234 = vmatpush1.bf16.msra.mxu0 0
  %235 = vmatprep.subr.bf16.mxu0 0
  %236 = vmatpush1.bf16.msra.mxu0 0
  %237 = vmatprep.subr.bf16.mxu0 0
  %238 = vmatpush1.bf16.msra.mxu0 0
  %239 = vmatprep.mubr.bf16.mxu0 0
  %240 = vmatmul.mubr.bf16.gmra.mrb[0].mxu0 %v123
  %v241 = vpop.f32.mrb[0].mxu0
  %v242 = vadd.f32 0.0, %v241
  %v243 = vpop.f32.mrb[0].mxu0
  %v244 = vadd.f32 0.0, %v243
  %v245 = vpop.f32.mrb[0].mxu0
  %v246 = vpop.f32.mrb[0].mxu0
  %247 = vdwg.mxu0
  %248 = vmatprep.subr.bf16.mxu0 %v96
  %249 = vmatpush1.bf16.msra.mxu0 %v95
  %250 = vmatprep.subr.bf16.mxu0 %v104
  %251 = vmatpush1.bf16.msra.mxu0 %v103
  %252 = vmatprep.subr.bf16.mxu0 0
  %253 = vmatpush1.bf16.msra.mxu0 0
  %254 = vmatprep.subr.bf16.mxu0 0
  %255 = vmatpush1.bf16.msra.mxu0 0
  %256 = vmatprep.subr.bf16.mxu0 0
  %257 = vmatpush1.bf16.msra.mxu0 0
  %258 = vmatprep.subr.bf16.mxu0 0
  %259 = vmatpush1.bf16.msra.mxu0 0
  %260 = vmatprep.subr.bf16.mxu0 0
  %261 = vmatpush1.bf16.msra.mxu0 0
  %262 = vmatprep.subr.bf16.mxu0 0
  %263 = vmatpush1.bf16.msra.mxu0 0
  %264 = vmatprep.subr.bf16.mxu0 0
  %265 = vmatpush1.bf16.msra.mxu0 0
  %266 = vmatprep.subr.bf16.mxu0 0
  %267 = vmatpush1.bf16.msra.mxu0 0
  %268 = vmatprep.subr.bf16.mxu0 0
  %269 = vmatpush1.bf16.msra.mxu0 0
  %270 = vmatprep.subr.bf16.mxu0 0
  %271 = vmatpush1.bf16.msra.mxu0 0
  %272 = vmatprep.subr.bf16.mxu0 0
  %273 = vmatpush1.bf16.msra.mxu0 0
  %274 = vmatprep.subr.bf16.mxu0 0
  %275 = vmatpush1.bf16.msra.mxu0 0
  %276 = vmatprep.subr.bf16.mxu0 0
  %277 = vmatpush1.bf16.msra.mxu0 0
  %278 = vmatprep.subr.bf16.mxu0 0
  %279 = vmatpush1.bf16.msra.mxu0 0
  %280 = vmatprep.mubr.bf16.mxu0 0
  %281 = vmatmul.mubr.bf16.gmra.mrb[0].mxu0 %v123
  %v282 = vpop.f32.mrb[0].mxu0
  %v283 = vadd.f32 0.0, %v282
  %v284 = vpop.f32.mrb[0].mxu0
  %v285 = vadd.f32 0.0, %v284
  %v286 = vpop.f32.mrb[0].mxu0
  %v287 = vpop.f32.mrb[0].mxu0
  %288 = vdwg.mxu0
  %v289 = vld [vmem:[%s2] sm:$0xff]
  %v290 = vld [vmem:[%s2 + $0x8] sm:$0xff]
  %v291 = vld [vmem:[%s2 + $0x10] sm:$0xff]
  %v292 = vld [vmem:[%s2 + $0x18] sm:$0xff]
  %v293 = vld [vmem:[%s2 + $0x20] sm:$0xff]
  %v294 = vld [vmem:[%s2 + $0x28] sm:$0xff]
  %v295 = vld [vmem:[%s2 + $0x30] sm:$0xff]
  %v296 = vld [vmem:[%s2 + $0x38] sm:$0xff]
  %v297 = vld [vmem:[%s2 + $0x40] sm:$0xff]
  %v298 = vld [vmem:[%s2 + $0x48] sm:$0xff]
  %v299 = vld [vmem:[%s2 + $0x50] sm:$0xff]
  %v300 = vld [vmem:[%s2 + $0x58] sm:$0xff]
  %v301 = vld [vmem:[%s2 + $0x60] sm:$0xff]
  %v302 = vld [vmem:[%s2 + $0x68] sm:$0xff]
  %v303 = vld [vmem:[%s2 + $0x70] sm:$0xff]
  %v304 = vld [vmem:[%s2 + $0x78] sm:$0xff]
  %v305 = vld [vmem:[%s2 + $0x80] sm:$0xff]
  %v306 = vld [vmem:[%s2 + $0x88] sm:$0xff]
  %v307 = vld [vmem:[%s2 + $0x90] sm:$0xff]
  %v308 = vld [vmem:[%s2 + $0x98] sm:$0xff]
  %v309 = vld [vmem:[%s2 + $0xa0] sm:$0xff]
  %v310 = vld [vmem:[%s2 + $0xa8] sm:$0xff]
  %v311 = vld [vmem:[%s2 + $0xb0] sm:$0xff]
  %v312 = vld [vmem:[%s2 + $0xb8] sm:$0xff]
  %v313 = vld [vmem:[%s2 + $0xc0] sm:$0xff]
  %v314 = vld [vmem:[%s2 + $0xc8] sm:$0xff]
  %v315 = vld [vmem:[%s2 + $0xd0] sm:$0xff]
  %v316 = vld [vmem:[%s2 + $0xd8] sm:$0xff]
  %v317 = vld [vmem:[%s2 + $0xe0] sm:$0xff]
  %v318 = vld [vmem:[%s2 + $0xe8] sm:$0xff]
  %v319 = vld [vmem:[%s2 + $0xf0] sm:$0xff]
  %v320 = vld [vmem:[%s2 + $0xf8] sm:$0xff]
  %v321 = vld [vmem:[%s2 + $0x100] sm:$0xff]
  %v322 = vld [vmem:[%s2 + $0x108] sm:$0xff]
  %v323 = vld [vmem:[%s2 + $0x110] sm:$0xff]
  %v324 = vld [vmem:[%s2 + $0x118] sm:$0xff]
  %v325 = vld [vmem:[%s2 + $0x120] sm:$0xff]
  %v326 = vld [vmem:[%s2 + $0x128] sm:$0xff]
  %v327 = vld [vmem:[%s2 + $0x130] sm:$0xff]
  %v328 = vld [vmem:[%s2 + $0x138] sm:$0xff]
  %v329 = vld [vmem:[%s2 + $0x140] sm:$0xff]
  %v330 = vld [vmem:[%s2 + $0x148] sm:$0xff]
  %v331 = vld [vmem:[%s2 + $0x150] sm:$0xff]
  %v332 = vld [vmem:[%s2 + $0x158] sm:$0xff]
  %v333 = vld [vmem:[%s2 + $0x160] sm:$0xff]
  %v334 = vld [vmem:[%s2 + $0x168] sm:$0xff]
  %v335 = vld [vmem:[%s2 + $0x170] sm:$0xff]
  %v336 = vld [vmem:[%s2 + $0x178] sm:$0xff]
  %v337 = vld [vmem:[%s2 + $0x180] sm:$0xff]
  %v338 = vld [vmem:[%s2 + $0x188] sm:$0xff]
  %v339 = vld [vmem:[%s2 + $0x190] sm:$0xff]
  %v340 = vld [vmem:[%s2 + $0x198] sm:$0xff]
  %v341 = vld [vmem:[%s2 + $0x1a0] sm:$0xff]
  %v342 = vld [vmem:[%s2 + $0x1a8] sm:$0xff]
  %v343 = vld [vmem:[%s2 + $0x1b0] sm:$0xff]
  %v344 = vld [vmem:[%s2 + $0x1b8] sm:$0xff]
  %v345 = vld [vmem:[%s2 + $0x1c0] sm:$0xff]
  %v346 = vld [vmem:[%s2 + $0x1c8] sm:$0xff]
  %v347 = vld [vmem:[%s2 + $0x1d0] sm:$0xff]
  %v348 = vld [vmem:[%s2 + $0x1d8] sm:$0xff]
  %v349 = vld [vmem:[%s2 + $0x1e0] sm:$0xff]
  %v350 = vld [vmem:[%s2 + $0x1e8] sm:$0xff]
  %v351 = vld [vmem:[%s2 + $0x1f0] sm:$0xff]
  %v352 = vld [vmem:[%s2 + $0x1f8] sm:$0xff]
  %v353 = vld [vmem:[%s2 + $0x200] sm:$0xff]
  %v354 = vld [vmem:[%s2 + $0x208] sm:$0xff]
  %v355 = vld [vmem:[%s2 + $0x210] sm:$0xff]
  %v356 = vld [vmem:[%s2 + $0x218] sm:$0xff]
  %v357 = vld [vmem:[%s2 + $0x220] sm:$0xff]
  %v358 = vld [vmem:[%s2 + $0x228] sm:$0xff]
  %v359 = vld [vmem:[%s2 + $0x230] sm:$0xff]
  %v360 = vld [vmem:[%s2 + $0x238] sm:$0xff]
  %v361 = vld [vmem:[%s2 + $0x240] sm:$0xff]
  %v362 = vld [vmem:[%s2 + $0x248] sm:$0xff]
  %v363 = vld [vmem:[%s2 + $0x250] sm:$0xff]
  %v364 = vld [vmem:[%s2 + $0x258] sm:$0xff]
  %v365 = vld [vmem:[%s2 + $0x260] sm:$0xff]
  %v366 = vld [vmem:[%s2 + $0x268] sm:$0xff]
  %v367 = vld [vmem:[%s2 + $0x270] sm:$0xff]
  %v368 = vld [vmem:[%s2 + $0x278] sm:$0xff]
  %v369 = vld [vmem:[%s2 + $0x280] sm:$0xff]
  %v370 = vld [vmem:[%s2 + $0x288] sm:$0xff]
  %v371 = vld [vmem:[%s2 + $0x290] sm:$0xff]
  %v372 = vld [vmem:[%s2 + $0x298] sm:$0xff]
  %v373 = vld [vmem:[%s2 + $0x2a0] sm:$0xff]
  %v374 = vld [vmem:[%s2 + $0x2a8] sm:$0xff]
  %v375 = vld [vmem:[%s2 + $0x2b0] sm:$0xff]
  %v376 = vld [vmem:[%s2 + $0x2b8] sm:$0xff]
  %v377 = vld [vmem:[%s2 + $0x2c0] sm:$0xff]
  %v378 = vld [vmem:[%s2 + $0x2c8] sm:$0xff]
  %v379 = vld [vmem:[%s2 + $0x2d0] sm:$0xff]
  %v380 = vld [vmem:[%s2 + $0x2d8] sm:$0xff]
  %v381 = vld [vmem:[%s2 + $0x2e0] sm:$0xff]
  %v382 = vld [vmem:[%s2 + $0x2e8] sm:$0xff]
  %v383 = vld [vmem:[%s2 + $0x2f0] sm:$0xff]
  %v384 = vld [vmem:[%s2 + $0x2f8] sm:$0xff]
  %v385 = vld [vmem:[%s2 + $0x300] sm:$0xff]
  %v386 = vld [vmem:[%s2 + $0x308] sm:$0xff]
  %v387 = vld [vmem:[%s2 + $0x310] sm:$0xff]
  %v388 = vld [vmem:[%s2 + $0x318] sm:$0xff]
  %v389 = vld [vmem:[%s2 + $0x320] sm:$0xff]
  %v390 = vld [vmem:[%s2 + $0x328] sm:$0xff]
  %v391 = vld [vmem:[%s2 + $0x330] sm:$0xff]
  %v392 = vld [vmem:[%s2 + $0x338] sm:$0xff]
  %v393 = vld [vmem:[%s2 + $0x340] sm:$0xff]
  %v394 = vld [vmem:[%s2 + $0x348] sm:$0xff]
  %v395 = vld [vmem:[%s2 + $0x350] sm:$0xff]
  %v396 = vld [vmem:[%s2 + $0x358] sm:$0xff]
  %v397 = vld [vmem:[%s2 + $0x360] sm:$0xff]
  %v398 = vld [vmem:[%s2 + $0x368] sm:$0xff]
  %v399 = vld [vmem:[%s2 + $0x370] sm:$0xff]
  %v400 = vld [vmem:[%s2 + $0x378] sm:$0xff]
  %v401 = vld [vmem:[%s2 + $0x380] sm:$0xff]
  %v402 = vld [vmem:[%s2 + $0x388] sm:$0xff]
  %v403 = vld [vmem:[%s2 + $0x390] sm:$0xff]
  %v404 = vld [vmem:[%s2 + $0x398] sm:$0xff]
  %v405 = vld [vmem:[%s2 + $0x3a0] sm:$0xff]
  %v406 = vld [vmem:[%s2 + $0x3a8] sm:$0xff]
  %v407 = vld [vmem:[%s2 + $0x3b0] sm:$0xff]
  %v408 = vld [vmem:[%s2 + $0x3b8] sm:$0xff]
  %v409 = vld [vmem:[%s2 + $0x3c0] sm:$0xff]
  %v410 = vld [vmem:[%s2 + $0x3c8] sm:$0xff]
  %v411 = vld [vmem:[%s2 + $0x3d0] sm:$0xff]
  %v412 = vld [vmem:[%s2 + $0x3d8] sm:$0xff]
  %v413 = vld [vmem:[%s2 + $0x3e0] sm:$0xff]
  %v414 = vld [vmem:[%s2 + $0x3e8] sm:$0xff]
  %v415 = vld [vmem:[%s2 + $0x3f0] sm:$0xff]
  %v416 = vld [vmem:[%s2 + $0x3f8] sm:$0xff]
  %v417 = vld [vmem:[%s3] sm:$0xff]
  %v418 = vld [vmem:[%s3 + $0x8] sm:$0xff]
  %v419 = vld [vmem:[%s3 + $0x10] sm:$0xff]
  %v420 = vld [vmem:[%s3 + $0x18] sm:$0xff]
  %v421 = vld [vmem:[%s3 + $0x20] sm:$0xff]
  %v422 = vld [vmem:[%s3 + $0x28] sm:$0xff]
  %v423 = vld [vmem:[%s3 + $0x30] sm:$0xff]
  %v424 = vld [vmem:[%s3 + $0x38] sm:$0xff]
  %v425 = vld [vmem:[%s3 + $0x40] sm:$0xff]
  %v426 = vld [vmem:[%s3 + $0x48] sm:$0xff]
  %v427 = vld [vmem:[%s3 + $0x50] sm:$0xff]
  %v428 = vld [vmem:[%s3 + $0x58] sm:$0xff]
  %v429 = vld [vmem:[%s3 + $0x60] sm:$0xff]
  %v430 = vld [vmem:[%s3 + $0x68] sm:$0xff]
  %v431 = vld [vmem:[%s3 + $0x70] sm:$0xff]
  %v432 = vld [vmem:[%s3 + $0x78] sm:$0xff]
  %v433 = vld [vmem:[%s3 + $0x80] sm:$0xff]
  %v434 = vld [vmem:[%s3 + $0x88] sm:$0xff]
  %v435 = vld [vmem:[%s3 + $0x90] sm:$0xff]
  %v436 = vld [vmem:[%s3 + $0x98] sm:$0xff]
  %v437 = vld [vmem:[%s3 + $0xa0] sm:$0xff]
  %v438 = vld [vmem:[%s3 + $0xa8] sm:$0xff]
  %v439 = vld [vmem:[%s3 + $0xb0] sm:$0xff]
  %v440 = vld [vmem:[%s3 + $0xb8] sm:$0xff]
  %v441 = vld [vmem:[%s3 + $0xc0] sm:$0xff]
  %v442 = vld [vmem:[%s3 + $0xc8] sm:$0xff]
  %v443 = vld [vmem:[%s3 + $0xd0] sm:$0xff]
  %v444 = vld [vmem:[%s3 + $0xd8] sm:$0xff]
  %v445 = vld [vmem:[%s3 + $0xe0] sm:$0xff]
  %v446 = vld [vmem:[%s3 + $0xe8] sm:$0xff]
  %v447 = vld [vmem:[%s3 + $0xf0] sm:$0xff]
  %v448 = vld [vmem:[%s3 + $0xf8] sm:$0xff]
  %v449 = vld [vmem:[%s3 + $0x100] sm:$0xff]
  %v450 = vld [vmem:[%s3 + $0x108] sm:$0xff]
  %v451 = vld [vmem:[%s3 + $0x110] sm:$0xff]
  %v452 = vld [vmem:[%s3 + $0x118] sm:$0xff]
  %v453 = vld [vmem:[%s3 + $0x120] sm:$0xff]
  %v454 = vld [vmem:[%s3 + $0x128] sm:$0xff]
  %v455 = vld [vmem:[%s3 + $0x130] sm:$0xff]
  %v456 = vld [vmem:[%s3 + $0x138] sm:$0xff]
  %v457 = vld [vmem:[%s3 + $0x140] sm:$0xff]
  %v458 = vld [vmem:[%s3 + $0x148] sm:$0xff]
  %v459 = vld [vmem:[%s3 + $0x150] sm:$0xff]
  %v460 = vld [vmem:[%s3 + $0x158] sm:$0xff]
  %v461 = vld [vmem:[%s3 + $0x160] sm:$0xff]
  %v462 = vld [vmem:[%s3 + $0x168] sm:$0xff]
  %v463 = vld [vmem:[%s3 + $0x170] sm:$0xff]
  %v464 = vld [vmem:[%s3 + $0x178] sm:$0xff]
  %v465 = vld [vmem:[%s3 + $0x180] sm:$0xff]
  %v466 = vld [vmem:[%s3 + $0x188] sm:$0xff]
  %v467 = vld [vmem:[%s3 + $0x190] sm:$0xff]
  %v468 = vld [vmem:[%s3 + $0x198] sm:$0xff]
  %v469 = vld [vmem:[%s3 + $0x1a0] sm:$0xff]
  %v470 = vld [vmem:[%s3 + $0x1a8] sm:$0xff]
  %v471 = vld [vmem:[%s3 + $0x1b0] sm:$0xff]
  %v472 = vld [vmem:[%s3 + $0x1b8] sm:$0xff]
  %v473 = vld [vmem:[%s3 + $0x1c0] sm:$0xff]
  %v474 = vld [vmem:[%s3 + $0x1c8] sm:$0xff]
  %v475 = vld [vmem:[%s3 + $0x1d0] sm:$0xff]
  %v476 = vld [vmem:[%s3 + $0x1d8] sm:$0xff]
  %v477 = vld [vmem:[%s3 + $0x1e0] sm:$0xff]
  %v478 = vld [vmem:[%s3 + $0x1e8] sm:$0xff]
  %v479 = vld [vmem:[%s3 + $0x1f0] sm:$0xff]
  %v480 = vld [vmem:[%s3 + $0x1f8] sm:$0xff]
  %vm481 = vcmask 1041408
  %v482 = vsel %vm481, %v160, 0.0
  %v483 = vrot.slane %v482, 4
  %v484 = vadd.f32 %v482, %v483
  %v485 = vrot.slane %v484, 2
  %v486 = vadd.f32 %v484, %v485
  %v487 = vrot.slane %v486, 1
  %v488 = vadd.f32 %v486, %v487
  %v489 = vsel %vm481, %v162, 0.0
  %v490 = vrot.slane %v489, 4
  %v491 = vadd.f32 %v489, %v490
  %v492 = vrot.slane %v491, 2
  %v493 = vadd.f32 %v491, %v492
  %v494 = vrot.slane %v493, 1
  %v495 = vadd.f32 %v493, %v494
  %v496 = vsel %vm481, %v201, 0.0
  %v497 = vrot.slane %v496, 4
  %v498 = vadd.f32 %v496, %v497
  %v499 = vrot.slane %v498, 2
  %v500 = vadd.f32 %v498, %v499
  %v501 = vrot.slane %v500, 1
  %v502 = vadd.f32 %v500, %v501
  %v503 = vsel %vm481, %v203, 0.0
  %v504 = vrot.slane %v503, 4
  %v505 = vadd.f32 %v503, %v504
  %v506 = vrot.slane %v505, 2
  %v507 = vadd.f32 %v505, %v506
  %v508 = vrot.slane %v507, 1
  %v509 = vadd.f32 %v507, %v508
  %v510 = vsel %vm481, %v242, 0.0
  %v511 = vrot.slane %v510, 4
  %v512 = vadd.f32 %v510, %v511
  %v513 = vrot.slane %v512, 2
  %v514 = vadd.f32 %v512, %v513
  %v515 = vrot.slane %v514, 1
  %v516 = vadd.f32 %v514, %v515
  %v517 = vsel %vm481, %v244, 0.0
  %v518 = vrot.slane %v517, 4
  %v519 = vadd.f32 %v517, %v518
  %v520 = vrot.slane %v519, 2
  %v521 = vadd.f32 %v519, %v520
  %v522 = vrot.slane %v521, 1
  %v523 = vadd.f32 %v521, %v522
  %v524 = vsel %vm481, %v283, 0.0
  %v525 = vrot.slane %v524, 4
  %v526 = vadd.f32 %v524, %v525
  %v527 = vrot.slane %v526, 2
  %v528 = vadd.f32 %v526, %v527
  %v529 = vrot.slane %v528, 1
  %v530 = vadd.f32 %v528, %v529
  %v531 = vsel %vm481, %v285, 0.0
  %v532 = vrot.slane %v531, 4
  %v533 = vadd.f32 %v531, %v532
  %v534 = vrot.slane %v533, 2
  %v535 = vadd.f32 %v533, %v534
  %v536 = vrot.slane %v535, 1
  %v537 = vadd.f32 %v535, %v536
  %v538 = vrcp.pop 2.0
  %v539 = vmul.f32 %v488, %v538
  %v540 = vmul.f32 %v495, %v538
  %v541 = vmul.f32 %v502, %v538
  %v542 = vmul.f32 %v509, %v538
  %v543 = vmul.f32 %v516, %v538
  %v544 = vmul.f32 %v523, %v538
  %v545 = vmul.f32 %v530, %v538
  %v546 = vmul.f32 %v537, %v538
  %547 = vmatprep.subr.mxu0 0.0
  %548 = vmatpush1.msra.mxu0 %v289
  %549 = vmatprep.subr.mxu0 0.0
  %550 = vmatpush1.msra.mxu0 %v290
  %551 = vmatprep.subr.mxu0 0.0
  %552 = vmatpush1.msra.mxu0 %v291
  %553 = vmatprep.subr.mxu0 0.0
  %554 = vmatpush1.msra.mxu0 %v292
  %555 = vmatprep.subr.mxu0 0.0
  %556 = vmatpush1.msra.mxu0 %v293
  %557 = vmatprep.subr.mxu0 0.0
  %558 = vmatpush1.msra.mxu0 %v294
  %559 = vmatprep.subr.mxu0 0.0
  %560 = vmatpush1.msra.mxu0 %v295
  %561 = vmatprep.subr.mxu0 0.0
  %562 = vmatpush1.msra.mxu0 %v296
  %563 = vmatprep.subr.mxu0 0.0
  %564 = vmatpush1.msra.mxu0 %v297
  %565 = vmatprep.subr.mxu0 0.0
  %566 = vmatpush1.msra.mxu0 %v298
  %567 = vmatprep.subr.mxu0 0.0
  %568 = vmatpush1.msra.mxu0 %v299
  %569 = vmatprep.subr.mxu0 0.0
  %570 = vmatpush1.msra.mxu0 %v300
  %571 = vmatprep.subr.mxu0 0.0
  %572 = vmatpush1.msra.mxu0 %v301
  %573 = vmatprep.subr.mxu0 0.0
  %574 = vmatpush1.msra.mxu0 %v302
  %575 = vmatprep.subr.mxu0 0.0
  %576 = vmatpush1.msra.mxu0 %v303
  %577 = vmatprep.subr.mxu0 0.0
  %578 = vmatpush1.msra.mxu0 %v304
  %579 = vmatprep.subr.mxu0 0.0
  %580 = vmatpush1.msra.mxu0 %v305
  %581 = vmatprep.subr.mxu0 0.0
  %582 = vmatpush1.msra.mxu0 %v306
  %583 = vmatprep.subr.mxu0 0.0
  %584 = vmatpush1.msra.mxu0 %v307
  %585 = vmatprep.subr.mxu0 0.0
  %586 = vmatpush1.msra.mxu0 %v308
  %587 = vmatprep.subr.mxu0 0.0
  %588 = vmatpush1.msra.mxu0 %v309
  %589 = vmatprep.subr.mxu0 0.0
  %590 = vmatpush1.msra.mxu0 %v310
  %591 = vmatprep.subr.mxu0 0.0
  %592 = vmatpush1.msra.mxu0 %v311
  %593 = vmatprep.subr.mxu0 0.0
  %594 = vmatpush1.msra.mxu0 %v312
  %595 = vmatprep.subr.mxu0 0.0
  %596 = vmatpush1.msra.mxu0 %v313
  %597 = vmatprep.subr.mxu0 0.0
  %598 = vmatpush1.msra.mxu0 %v314
  %599 = vmatprep.subr.mxu0 0.0
  %600 = vmatpush1.msra.mxu0 %v315
  %601 = vmatprep.subr.mxu0 0.0
  %602 = vmatpush1.msra.mxu0 %v316
  %603 = vmatprep.subr.mxu0 0.0
  %604 = vmatpush1.msra.mxu0 %v317
  %605 = vmatprep.subr.mxu0 0.0
  %606 = vmatpush1.msra.mxu0 %v318
  %607 = vmatprep.subr.mxu0 0.0
  %608 = vmatpush1.msra.mxu0 %v319
  %609 = vmatprep.subr.mxu0 0.0
  %610 = vmatpush1.msra.mxu0 %v320
  %611 = vmatprep.mubr.f32.mxu0 %v540
  %612 = vmatmul.mubr.f32.gmra.mrb[0].mxu0 %v539
  %v613 = vpop.f32.mrb[0].mxu0
  %v614 = vadd.f32 0.0, %v613
  %v615 = vpop.f32.mrb[0].mxu0
  %616 = vdwg.mxu0
  %617 = vmatprep.subr.mxu0 0.0
  %618 = vmatpush1.msra.mxu0 %v321
  %619 = vmatprep.subr.mxu0 0.0
  %620 = vmatpush1.msra.mxu0 %v322
  %621 = vmatprep.subr.mxu0 0.0
  %622 = vmatpush1.msra.mxu0 %v323
  %623 = vmatprep.subr.mxu0 0.0
  %624 = vmatpush1.msra.mxu0 %v324
  %625 = vmatprep.subr.mxu0 0.0
  %626 = vmatpush1.msra.mxu0 %v325
  %627 = vmatprep.subr.mxu0 0.0
  %628 = vmatpush1.msra.mxu0 %v326
  %629 = vmatprep.subr.mxu0 0.0
  %630 = vmatpush1.msra.mxu0 %v327
  %631 = vmatprep.subr.mxu0 0.0
  %632 = vmatpush1.msra.mxu0 %v328
  %633 = vmatprep.subr.mxu0 0.0
  %634 = vmatpush1.msra.mxu0 %v329
  %635 = vmatprep.subr.mxu0 0.0
  %636 = vmatpush1.msra.mxu0 %v330
  %637 = vmatprep.subr.mxu0 0.0
  %638 = vmatpush1.msra.mxu0 %v331
  %639 = vmatprep.subr.mxu0 0.0
  %640 = vmatpush1.msra.mxu0 %v332
  %641 = vmatprep.subr.mxu0 0.0
  %642 = vmatpush1.msra.mxu0 %v333
  %643 = vmatprep.subr.mxu0 0.0
  %644 = vmatpush1.msra.mxu0 %v334
  %645 = vmatprep.subr.mxu0 0.0
  %646 = vmatpush1.msra.mxu0 %v335
  %647 = vmatprep.subr.mxu0 0.0
  %648 = vmatpush1.msra.mxu0 %v336
  %649 = vmatprep.subr.mxu0 0.0
  %650 = vmatpush1.msra.mxu0 %v337
  %651 = vmatprep.subr.mxu0 0.0
  %652 = vmatpush1.msra.mxu0 %v338
  %653 = vmatprep.subr.mxu0 0.0
  %654 = vmatpush1.msra.mxu0 %v339
  %655 = vmatprep.subr.mxu0 0.0
  %656 = vmatpush1.msra.mxu0 %v340
  %657 = vmatprep.subr.mxu0 0.0
  %658 = vmatpush1.msra.mxu0 %v341
  %659 = vmatprep.subr.mxu0 0.0
  %660 = vmatpush1.msra.mxu0 %v342
  %661 = vmatprep.subr.mxu0 0.0
  %662 = vmatpush1.msra.mxu0 %v343
  %663 = vmatprep.subr.mxu0 0.0
  %664 = vmatpush1.msra.mxu0 %v344
  %665 = vmatprep.subr.mxu0 0.0
  %666 = vmatpush1.msra.mxu0 %v345
  %667 = vmatprep.subr.mxu0 0.0
  %668 = vmatpush1.msra.mxu0 %v346
  %669 = vmatprep.subr.mxu0 0.0
  %670 = vmatpush1.msra.mxu0 %v347
  %671 = vmatprep.subr.mxu0 0.0
  %672 = vmatpush1.msra.mxu0 %v348
  %673 = vmatprep.subr.mxu0 0.0
  %674 = vmatpush1.msra.mxu0 %v349
  %675 = vmatprep.subr.mxu0 0.0
  %676 = vmatpush1.msra.mxu0 %v350
  %677 = vmatprep.subr.mxu0 0.0
  %678 = vmatpush1.msra.mxu0 %v351
  %679 = vmatprep.subr.mxu0 0.0
  %680 = vmatpush1.msra.mxu0 %v352
  %681 = vmatprep.mubr.f32.mxu0 %v542
  %682 = vmatmul.mubr.f32.gmra.mrb[0].mxu0 %v541
  %v683 = vpop.f32.mrb[0].mxu0
  %v684 = vadd.f32 %v614, %v683
  %v685 = vpop.f32.mrb[0].mxu0
  %686 = vdwg.mxu0
  %687 = vmatprep.subr.mxu0 0.0
  %688 = vmatpush1.msra.mxu0 %v353
  %689 = vmatprep.subr.mxu0 0.0
  %690 = vmatpush1.msra.mxu0 %v354
  %691 = vmatprep.subr.mxu0 0.0
  %692 = vmatpush1.msra.mxu0 %v355
  %693 = vmatprep.subr.mxu0 0.0
  %694 = vmatpush1.msra.mxu0 %v356
  %695 = vmatprep.subr.mxu0 0.0
  %696 = vmatpush1.msra.mxu0 %v357
  %697 = vmatprep.subr.mxu0 0.0
  %698 = vmatpush1.msra.mxu0 %v358
  %699 = vmatprep.subr.mxu0 0.0
  %700 = vmatpush1.msra.mxu0 %v359
  %701 = vmatprep.subr.mxu0 0.0
  %702 = vmatpush1.msra.mxu0 %v360
  %703 = vmatprep.subr.mxu0 0.0
  %704 = vmatpush1.msra.mxu0 %v361
  %705 = vmatprep.subr.mxu0 0.0
  %706 = vmatpush1.msra.mxu0 %v362
  %707 = vmatprep.subr.mxu0 0.0
  %708 = vmatpush1.msra.mxu0 %v363
  %709 = vmatprep.subr.mxu0 0.0
  %710 = vmatpush1.msra.mxu0 %v364
  %711 = vmatprep.subr.mxu0 0.0
  %712 = vmatpush1.msra.mxu0 %v365
  %713 = vmatprep.subr.mxu0 0.0
  %714 = vmatpush1.msra.mxu0 %v366
  %715 = vmatprep.subr.mxu0 0.0
  %716 = vmatpush1.msra.mxu0 %v367
  %717 = vmatprep.subr.mxu0 0.0
  %718 = vmatpush1.msra.mxu0 %v368
  %719 = vmatprep.subr.mxu0 0.0
  %720 = vmatpush1.msra.mxu0 %v369
  %721 = vmatprep.subr.mxu0 0.0
  %722 = vmatpush1.msra.mxu0 %v370
  %723 = vmatprep.subr.mxu0 0.0
  %724 = vmatpush1.msra.mxu0 %v371
  %725 = vmatprep.subr.mxu0 0.0
  %726 = vmatpush1.msra.mxu0 %v372
  %727 = vmatprep.subr.mxu0 0.0
  %728 = vmatpush1.msra.mxu0 %v373
  %729 = vmatprep.subr.mxu0 0.0
  %730 = vmatpush1.msra.mxu0 %v374
  %731 = vmatprep.subr.mxu0 0.0
  %732 = vmatpush1.msra.mxu0 %v375
  %733 = vmatprep.subr.mxu0 0.0
  %734 = vmatpush1.msra.mxu0 %v376
  %735 = vmatprep.subr.mxu0 0.0
  %736 = vmatpush1.msra.mxu0 %v377
  %737 = vmatprep.subr.mxu0 0.0
  %738 = vmatpush1.msra.mxu0 %v378
  %739 = vmatprep.subr.mxu0 0.0
  %740 = vmatpush1.msra.mxu0 %v379
  %741 = vmatprep.subr.mxu0 0.0
  %742 = vmatpush1.msra.mxu0 %v380
  %743 = vmatprep.subr.mxu0 0.0
  %744 = vmatpush1.msra.mxu0 %v381
  %745 = vmatprep.subr.mxu0 0.0
  %746 = vmatpush1.msra.mxu0 %v382
  %747 = vmatprep.subr.mxu0 0.0
  %748 = vmatpush1.msra.mxu0 %v383
  %749 = vmatprep.subr.mxu0 0.0
  %750 = vmatpush1.msra.mxu0 %v384
  %751 = vmatprep.mubr.f32.mxu0 %v544
  %752 = vmatmul.mubr.f32.gmra.mrb[0].mxu0 %v543
  %v753 = vpop.f32.mrb[0].mxu0
  %v754 = vadd.f32 %v684, %v753
  %v755 = vpop.f32.mrb[0].mxu0
  %756 = vdwg.mxu0
  %757 = vmatprep.subr.mxu0 0.0
  %758 = vmatpush1.msra.mxu0 %v385
  %759 = vmatprep.subr.mxu0 0.0
  %760 = vmatpush1.msra.mxu0 %v386
  %761 = vmatprep.subr.mxu0 0.0
  %762 = vmatpush1.msra.mxu0 %v387
  %763 = vmatprep.subr.mxu0 0.0
  %764 = vmatpush1.msra.mxu0 %v388
  %765 = vmatprep.subr.mxu0 0.0
  %766 = vmatpush1.msra.mxu0 %v389
  %767 = vmatprep.subr.mxu0 0.0
  %768 = vmatpush1.msra.mxu0 %v390
  %769 = vmatprep.subr.mxu0 0.0
  %770 = vmatpush1.msra.mxu0 %v391
  %771 = vmatprep.subr.mxu0 0.0
  %772 = vmatpush1.msra.mxu0 %v392
  %773 = vmatprep.subr.mxu0 0.0
  %774 = vmatpush1.msra.mxu0 %v393
  %775 = vmatprep.subr.mxu0 0.0
  %776 = vmatpush1.msra.mxu0 %v394
  %777 = vmatprep.subr.mxu0 0.0
  %778 = vmatpush1.msra.mxu0 %v395
  %779 = vmatprep.subr.mxu0 0.0
  %780 = vmatpush1.msra.mxu0 %v396
  %781 = vmatprep.subr.mxu0 0.0
  %782 = vmatpush1.msra.mxu0 %v397
  %783 = vmatprep.subr.mxu0 0.0
  %784 = vmatpush1.msra.mxu0 %v398
  %785 = vmatprep.subr.mxu0 0.0
  %786 = vmatpush1.msra.mxu0 %v399
  %787 = vmatprep.subr.mxu0 0.0
  %788 = vmatpush1.msra.mxu0 %v400
  %789 = vmatprep.subr.mxu0 0.0
  %790 = vmatpush1.msra.mxu0 %v401
  %791 = vmatprep.subr.mxu0 0.0
  %792 = vmatpush1.msra.mxu0 %v402
  %793 = vmatprep.subr.mxu0 0.0
  %794 = vmatpush1.msra.mxu0 %v403
  %795 = vmatprep.subr.mxu0 0.0
  %796 = vmatpush1.msra.mxu0 %v404
  %797 = vmatprep.subr.mxu0 0.0
  %798 = vmatpush1.msra.mxu0 %v405
  %799 = vmatprep.subr.mxu0 0.0
  %800 = vmatpush1.msra.mxu0 %v406
  %801 = vmatprep.subr.mxu0 0.0
  %802 = vmatpush1.msra.mxu0 %v407
  %803 = vmatprep.subr.mxu0 0.0
  %804 = vmatpush1.msra.mxu0 %v408
  %805 = vmatprep.subr.mxu0 0.0
  %806 = vmatpush1.msra.mxu0 %v409
  %807 = vmatprep.subr.mxu0 0.0
  %808 = vmatpush1.msra.mxu0 %v410
  %809 = vmatprep.subr.mxu0 0.0
  %810 = vmatpush1.msra.mxu0 %v411
  %811 = vmatprep.subr.mxu0 0.0
  %812 = vmatpush1.msra.mxu0 %v412
  %813 = vmatprep.subr.mxu0 0.0
  %814 = vmatpush1.msra.mxu0 %v413
  %815 = vmatprep.subr.mxu0 0.0
  %816 = vmatpush1.msra.mxu0 %v414
  %817 = vmatprep.subr.mxu0 0.0
  %818 = vmatpush1.msra.mxu0 %v415
  %819 = vmatprep.subr.mxu0 0.0
  %820 = vmatpush1.msra.mxu0 %v416
  %821 = vmatprep.mubr.f32.mxu0 %v546
  %822 = vmatmul.mubr.f32.gmra.mrb[0].mxu0 %v545
  %v823 = vpop.f32.mrb[0].mxu0
  %v824 = vadd.f32 %v754, %v823
  %v825 = vpop.f32.mrb[0].mxu0
  %826 = vdwg.mxu0
  %vm827 = vcmask 523264
  %v829 = vsel %vm827, %v824, 0
  %831 = vmatprep.subr.mxu0 %v418
  %832 = vmatpush1.msra.mxu0 %v417
  %833 = vmatprep.subr.mxu0 %v426
  %834 = vmatpush1.msra.mxu0 %v425
  %835 = vmatprep.subr.mxu0 %v434
  %836 = vmatpush1.msra.mxu0 %v433
  %837 = vmatprep.subr.mxu0 %v442
  %838 = vmatpush1.msra.mxu0 %v441
  %839 = vmatprep.subr.mxu0 %v450
  %840 = vmatpush1.msra.mxu0 %v449
  %841 = vmatprep.subr.mxu0 %v458
  %842 = vmatpush1.msra.mxu0 %v457
  %843 = vmatprep.subr.mxu0 %v466
  %844 = vmatpush1.msra.mxu0 %v465
  %845 = vmatprep.subr.mxu0 %v474
  %846 = vmatpush1.msra.mxu0 %v473
  %847 = vmatprep.subr.mxu0 0.0
  %848 = vmatpush1.msra.mxu0 0.0
  %849 = vmatprep.subr.mxu0 0.0
  %850 = vmatpush1.msra.mxu0 0.0
  %851 = vmatprep.subr.mxu0 0.0
  %852 = vmatpush1.msra.mxu0 0.0
  %853 = vmatprep.subr.mxu0 0.0
  %854 = vmatpush1.msra.mxu0 0.0
  %855 = vmatprep.subr.mxu0 0.0
  %856 = vmatpush1.msra.mxu0 0.0
  %857 = vmatprep.subr.mxu0 0.0
  %858 = vmatpush1.msra.mxu0 0.0
  %859 = vmatprep.subr.mxu0 0.0
  %860 = vmatpush1.msra.mxu0 0.0
  %861 = vmatprep.subr.mxu0 0.0
  %862 = vmatpush1.msra.mxu0 0.0
  %863 = vmatprep.subr.mxu0 0.0
  %864 = vmatpush1.msra.mxu0 0.0
  %865 = vmatprep.subr.mxu0 0.0
  %866 = vmatpush1.msra.mxu0 0.0
  %867 = vmatprep.subr.mxu0 0.0
  %868 = vmatpush1.msra.mxu0 0.0
  %869 = vmatprep.subr.mxu0 0.0
  %870 = vmatpush1.msra.mxu0 0.0
  %871 = vmatprep.subr.mxu0 0.0
  %872 = vmatpush1.msra.mxu0 0.0
  %873 = vmatprep.subr.mxu0 0.0
  %874 = vmatpush1.msra.mxu0 0.0
  %875 = vmatprep.subr.mxu0 0.0
  %876 = vmatpush1.msra.mxu0 0.0
  %877 = vmatprep.subr.mxu0 0.0
  %878 = vmatpush1.msra.mxu0 0.0
  %879 = vmatprep.subr.mxu0 0.0
  %880 = vmatpush1.msra.mxu0 0.0
  %881 = vmatprep.subr.mxu0 0.0
  %882 = vmatpush1.msra.mxu0 0.0
  %883 = vmatprep.subr.mxu0 0.0
  %884 = vmatpush1.msra.mxu0 0.0
  %885 = vmatprep.subr.mxu0 0.0
  %886 = vmatpush1.msra.mxu0 0.0
  %887 = vmatprep.subr.mxu0 0.0
  %888 = vmatpush1.msra.mxu0 0.0
  %889 = vmatprep.subr.mxu0 0.0
  %890 = vmatpush1.msra.mxu0 0.0
  %891 = vmatprep.subr.mxu0 0.0
  %892 = vmatpush1.msra.mxu0 0.0
  %893 = vmatprep.subr.mxu0 0.0
  %894 = vmatpush1.msra.mxu0 0.0
  %895 = vmatprep.mubr.f32.mxu0 0.0
  %896 = vmatmul.mubr.f32.gmra.mrb[0].mxu0 %v829
  %v897 = vpop.f32.mrb[0].mxu0
  %v898 = vadd.f32 0.0, %v897
  %v899 = vpop.f32.mrb[0].mxu0
  %v900 = vadd.f32 0.0, %v899
  %901 = vdwg.mxu0
  %902 = vmatprep.subr.mxu0 %v420
  %903 = vmatpush1.msra.mxu0 %v419
  %904 = vmatprep.subr.mxu0 %v428
  %905 = vmatpush1.msra.mxu0 %v427
  %906 = vmatprep.subr.mxu0 %v436
  %907 = vmatpush1.msra.mxu0 %v435
  %908 = vmatprep.subr.mxu0 %v444
  %909 = vmatpush1.msra.mxu0 %v443
  %910 = vmatprep.subr.mxu0 %v452
  %911 = vmatpush1.msra.mxu0 %v451
  %912 = vmatprep.subr.mxu0 %v460
  %913 = vmatpush1.msra.mxu0 %v459
  %914 = vmatprep.subr.mxu0 %v468
  %915 = vmatpush1.msra.mxu0 %v467
  %916 = vmatprep.subr.mxu0 %v476
  %917 = vmatpush1.msra.mxu0 %v475
  %918 = vmatprep.subr.mxu0 0.0
  %919 = vmatpush1.msra.mxu0 0.0
  %920 = vmatprep.subr.mxu0 0.0
  %921 = vmatpush1.msra.mxu0 0.0
  %922 = vmatprep.subr.mxu0 0.0
  %923 = vmatpush1.msra.mxu0 0.0
  %924 = vmatprep.subr.mxu0 0.0
  %925 = vmatpush1.msra.mxu0 0.0
  %926 = vmatprep.subr.mxu0 0.0
  %927 = vmatpush1.msra.mxu0 0.0
  %928 = vmatprep.subr.mxu0 0.0
  %929 = vmatpush1.msra.mxu0 0.0
  %930 = vmatprep.subr.mxu0 0.0
  %931 = vmatpush1.msra.mxu0 0.0
  %932 = vmatprep.subr.mxu0 0.0
  %933 = vmatpush1.msra.mxu0 0.0
  %934 = vmatprep.subr.mxu0 0.0
  %935 = vmatpush1.msra.mxu0 0.0
  %936 = vmatprep.subr.mxu0 0.0
  %937 = vmatpush1.msra.mxu0 0.0
  %938 = vmatprep.subr.mxu0 0.0
  %939 = vmatpush1.msra.mxu0 0.0
  %940 = vmatprep.subr.mxu0 0.0
  %941 = vmatpush1.msra.mxu0 0.0
  %942 = vmatprep.subr.mxu0 0.0
  %943 = vmatpush1.msra.mxu0 0.0
  %944 = vmatprep.subr.mxu0 0.0
  %945 = vmatpush1.msra.mxu0 0.0
  %946 = vmatprep.subr.mxu0 0.0
  %947 = vmatpush1.msra.mxu0 0.0
  %948 = vmatprep.subr.mxu0 0.0
  %949 = vmatpush1.msra.mxu0 0.0
  %950 = vmatprep.subr.mxu0 0.0
  %951 = vmatpush1.msra.mxu0 0.0
  %952 = vmatprep.subr.mxu0 0.0
  %953 = vmatpush1.msra.mxu0 0.0
  %954 = vmatprep.subr.mxu0 0.0
  %955 = vmatpush1.msra.mxu0 0.0
  %956 = vmatprep.subr.mxu0 0.0
  %957 = vmatpush1.msra.mxu0 0.0
  %958 = vmatprep.subr.mxu0 0.0
  %959 = vmatpush1.msra.mxu0 0.0
  %960 = vmatprep.subr.mxu0 0.0
  %961 = vmatpush1.msra.mxu0 0.0
  %962 = vmatprep.subr.mxu0 0.0
  %963 = vmatpush1.msra.mxu0 0.0
  %964 = vmatprep.subr.mxu0 0.0
  %965 = vmatpush1.msra.mxu0 0.0
  %966 = vmatprep.mubr.f32.mxu0 0.0
  %967 = vmatmul.mubr.f32.gmra.mrb[0].mxu0 %v829
  %v968 = vpop.f32.mrb[0].mxu0
  %v969 = vadd.f32 0.0, %v968
  %v970 = vpop.f32.mrb[0].mxu0
  %v971 = vadd.f32 0.0, %v970
  %972 = vdwg.mxu0
  %973 = vmatprep.subr.mxu0 %v422
  %974 = vmatpush1.msra.mxu0 %v421
  %975 = vmatprep.subr.mxu0 %v430
  %976 = vmatpush1.msra.mxu0 %v429
  %977 = vmatprep.subr.mxu0 %v438
  %978 = vmatpush1.msra.mxu0 %v437
  %979 = vmatprep.subr.mxu0 %v446
  %980 = vmatpush1.msra.mxu0 %v445
  %981 = vmatprep.subr.mxu0 %v454
  %982 = vmatpush1.msra.mxu0 %v453
  %983 = vmatprep.subr.mxu0 %v462
  %984 = vmatpush1.msra.mxu0 %v461
  %985 = vmatprep.subr.mxu0 %v470
  %986 = vmatpush1.msra.mxu0 %v469
  %987 = vmatprep.subr.mxu0 %v478
  %988 = vmatpush1.msra.mxu0 %v477
  %989 = vmatprep.subr.mxu0 0.0
  %990 = vmatpush1.msra.mxu0 0.0
  %991 = vmatprep.subr.mxu0 0.0
  %992 = vmatpush1.msra.mxu0 0.0
  %993 = vmatprep.subr.mxu0 0.0
  %994 = vmatpush1.msra.mxu0 0.0
  %995 = vmatprep.subr.mxu0 0.0
  %996 = vmatpush1.msra.mxu0 0.0
  %997 = vmatprep.subr.mxu0 0.0
  %998 = vmatpush1.msra.mxu0 0.0
  %999 = vmatprep.subr.mxu0 0.0
  %1000 = vmatpush1.msra.mxu0 0.0
  %1001 = vmatprep.subr.mxu0 0.0
  %1002 = vmatpush1.msra.mxu0 0.0
  %1003 = vmatprep.subr.mxu0 0.0
  %1004 = vmatpush1.msra.mxu0 0.0
  %1005 = vmatprep.subr.mxu0 0.0
  %1006 = vmatpush1.msra.mxu0 0.0
  %1007 = vmatprep.subr.mxu0 0.0
  %1008 = vmatpush1.msra.mxu0 0.0
  %1009 = vmatprep.subr.mxu0 0.0
  %1010 = vmatpush1.msra.mxu0 0.0
  %1011 = vmatprep.subr.mxu0 0.0
  %1012 = vmatpush1.msra.mxu0 0.0
  %1013 = vmatprep.subr.mxu0 0.0
  %1014 = vmatpush1.msra.mxu0 0.0
  %1015 = vmatprep.subr.mxu0 0.0
  %1016 = vmatpush1.msra.mxu0 0.0
  %1017 = vmatprep.subr.mxu0 0.0
  %1018 = vmatpush1.msra.mxu0 0.0
  %1019 = vmatprep.subr.mxu0 0.0
  %1020 = vmatpush1.msra.mxu0 0.0
  %1021 = vmatprep.subr.mxu0 0.0
  %1022 = vmatpush1.msra.mxu0 0.0
  %1023 = vmatprep.subr.mxu0 0.0
  %1024 = vmatpush1.msra.mxu0 0.0
  %1025 = vmatprep.subr.mxu0 0.0
  %1026 = vmatpush1.msra.mxu0 0.0
  %1027 = vmatprep.subr.mxu0 0.0
  %1028 = vmatpush1.msra.mxu0 0.0
  %1029 = vmatprep.subr.mxu0 0.0
  %1030 = vmatpush1.msra.mxu0 0.0
  %1031 = vmatprep.subr.mxu0 0.0
  %1032 = vmatpush1.msra.mxu0 0.0
  %1033 = vmatprep.subr.mxu0 0.0
  %1034 = vmatpush1.msra.mxu0 0.0
  %1035 = vmatprep.subr.mxu0 0.0
  %1036 = vmatpush1.msra.mxu0 0.0
  %1037 = vmatprep.mubr.f32.mxu0 0.0
  %1038 = vmatmul.mubr.f32.gmra.mrb[0].mxu0 %v829
  %v1039 = vpop.f32.mrb[0].mxu0
  %v1040 = vadd.f32 0.0, %v1039
  %v1041 = vpop.f32.mrb[0].mxu0
  %v1042 = vadd.f32 0.0, %v1041
  %1043 = vdwg.mxu0
  %1044 = vmatprep.subr.mxu0 %v424
  %1045 = vmatpush1.msra.mxu0 %v423
  %1046 = vmatprep.subr.mxu0 %v432
  %1047 = vmatpush1.msra.mxu0 %v431
  %1048 = vmatprep.subr.mxu0 %v440
  %1049 = vmatpush1.msra.mxu0 %v439
  %1050 = vmatprep.subr.mxu0 %v448
  %1051 = vmatpush1.msra.mxu0 %v447
  %1052 = vmatprep.subr.mxu0 %v456
  %1053 = vmatpush1.msra.mxu0 %v455
  %1054 = vmatprep.subr.mxu0 %v464
  %1055 = vmatpush1.msra.mxu0 %v463
  %1056 = vmatprep.subr.mxu0 %v472
  %1057 = vmatpush1.msra.mxu0 %v471
  %1058 = vmatprep.subr.mxu0 %v480
  %1059 = vmatpush1.msra.mxu0 %v479
  %1060 = vmatprep.subr.mxu0 0.0
  %1061 = vmatpush1.msra.mxu0 0.0
  %1062 = vmatprep.subr.mxu0 0.0
  %1063 = vmatpush1.msra.mxu0 0.0
  %1064 = vmatprep.subr.mxu0 0.0
  %1065 = vmatpush1.msra.mxu0 0.0
  %1066 = vmatprep.subr.mxu0 0.0
  %1067 = vmatpush1.msra.mxu0 0.0
  %1068 = vmatprep.subr.mxu0 0.0
  %1069 = vmatpush1.msra.mxu0 0.0
  %1070 = vmatprep.subr.mxu0 0.0
  %1071 = vmatpush1.msra.mxu0 0.0
  %1072 = vmatprep.subr.mxu0 0.0
  %1073 = vmatpush1.msra.mxu0 0.0
  %1074 = vmatprep.subr.mxu0 0.0
  %1075 = vmatpush1.msra.mxu0 0.0
  %1076 = vmatprep.subr.mxu0 0.0
  %1077 = vmatpush1.msra.mxu0 0.0
  %1078 = vmatprep.subr.mxu0 0.0
  %1079 = vmatpush1.msra.mxu0 0.0
  %1080 = vmatprep.subr.mxu0 0.0
  %1081 = vmatpush1.msra.mxu0 0.0
  %1082 = vmatprep.subr.mxu0 0.0
  %1083 = vmatpush1.msra.mxu0 0.0
  %1084 = vmatprep.subr.mxu0 0.0
  %1085 = vmatpush1.msra.mxu0 0.0
  %1086 = vmatprep.subr.mxu0 0.0
  %1087 = vmatpush1.msra.mxu0 0.0
  %1088 = vmatprep.subr.mxu0 0.0
  %1089 = vmatpush1.msra.mxu0 0.0
  %1090 = vmatprep.subr.mxu0 0.0
  %1091 = vmatpush1.msra.mxu0 0.0
  %1092 = vmatprep.subr.mxu0 0.0
  %1093 = vmatpush1.msra.mxu0 0.0
  %1094 = vmatprep.subr.mxu0 0.0
  %1095 = vmatpush1.msra.mxu0 0.0
  %1096 = vmatprep.subr.mxu0 0.0
  %1097 = vmatpush1.msra.mxu0 0.0
  %1098 = vmatprep.subr.mxu0 0.0
  %1099 = vmatpush1.msra.mxu0 0.0
  %1100 = vmatprep.subr.mxu0 0.0
  %1101 = vmatpush1.msra.mxu0 0.0
  %1102 = vmatprep.subr.mxu0 0.0
  %1103 = vmatpush1.msra.mxu0 0.0
  %1104 = vmatprep.subr.mxu0 0.0
  %1105 = vmatpush1.msra.mxu0 0.0
  %1106 = vmatprep.subr.mxu0 0.0
  %1107 = vmatpush1.msra.mxu0 0.0
  %1108 = vmatprep.mubr.f32.mxu0 0.0
  %1109 = vmatmul.mubr.f32.gmra.mrb[0].mxu0 %v829
  %v1110 = vpop.f32.mrb[0].mxu0
  %v1111 = vadd.f32 0.0, %v1110
  %v1112 = vpop.f32.mrb[0].mxu0
  %v1113 = vadd.f32 0.0, %v1112
  %1114 = vdwg.mxu0
  %v1115 = vlaneseq
  %v1116 = vshrl.u32 %v1115, 7
  %v1117 = vsub.s32 0, %v1116
  %v1118 = vrot.slane %v898, %v1117
  %v1119 = vlaneseq
  %v1120 = vshrl.u32 %v1119, 7
  %v1121 = vsub.s32 0, %v1120
  %v1122 = vrot.slane %v900, %v1121
  %v1123 = vlaneseq
  %v1124 = vshrl.u32 %v1123, 7
  %v1125 = vsub.s32 0, %v1124
  %v1126 = vrot.slane %v969, %v1125
  %v1127 = vlaneseq
  %v1128 = vshrl.u32 %v1127, 7
  %v1129 = vsub.s32 0, %v1128
  %v1130 = vrot.slane %v971, %v1129
  %v1131 = vlaneseq
  %v1132 = vshrl.u32 %v1131, 7
  %v1133 = vsub.s32 0, %v1132
  %v1134 = vrot.slane %v1040, %v1133
  %v1135 = vlaneseq
  %v1136 = vshrl.u32 %v1135, 7
  %v1137 = vsub.s32 0, %v1136
  %v1138 = vrot.slane %v1042, %v1137
  %v1139 = vlaneseq
  %v1140 = vshrl.u32 %v1139, 7
  %v1141 = vsub.s32 0, %v1140
  %v1142 = vrot.slane %v1111, %v1141
  %v1143 = vlaneseq
  %v1144 = vshrl.u32 %v1143, 7
  %v1145 = vsub.s32 0, %v1144
  %v1146 = vrot.slane %v1113, %v1145
  %v1147 = vsub.f32 %v160, %v1118
  %v1148 = vsub.f32 %v162, %v1122
  %v1149 = vsub.f32 %v201, %v1126
  %v1150 = vsub.f32 %v203, %v1130
  %v1151 = vsub.f32 %v242, %v1134
  %v1152 = vsub.f32 %v244, %v1138
  %v1153 = vsub.f32 %v283, %v1142
  %v1154 = vsub.f32 %v285, %v1146
  %v1155 = vmul.f32 %v1147, %v1147
  %v1156 = vmul.f32 %v1148, %v1148
  %v1157 = vmul.f32 %v1149, %v1149
  %v1158 = vmul.f32 %v1150, %v1150
  %v1159 = vmul.f32 %v1151, %v1151
  %v1160 = vmul.f32 %v1152, %v1152
  %v1161 = vmul.f32 %v1153, %v1153
  %v1162 = vmul.f32 %v1154, %v1154
  %v1163 = vsel %vm481, %v1155, 0.0
  %v1164 = vrot.slane %v1163, 4
  %v1165 = vadd.f32 %v1163, %v1164
  %v1166 = vrot.slane %v1165, 2
  %v1167 = vadd.f32 %v1165, %v1166
  %v1168 = vrot.slane %v1167, 1
  %v1169 = vadd.f32 %v1167, %v1168
  %v1170 = vsel %vm481, %v1156, 0.0
  %v1171 = vrot.slane %v1170, 4
  %v1172 = vadd.f32 %v1170, %v1171
  %v1173 = vrot.slane %v1172, 2
  %v1174 = vadd.f32 %v1172, %v1173
  %v1175 = vrot.slane %v1174, 1
  %v1176 = vadd.f32 %v1174, %v1175
  %v1177 = vsel %vm481, %v1157, 0.0
  %v1178 = vrot.slane %v1177, 4
  %v1179 = vadd.f32 %v1177, %v1178
  %v1180 = vrot.slane %v1179, 2
  %v1181 = vadd.f32 %v1179, %v1180
  %v1182 = vrot.slane %v1181, 1
  %v1183 = vadd.f32 %v1181, %v1182
  %v1184 = vsel %vm481, %v1158, 0.0
  %v1185 = vrot.slane %v1184, 4
  %v1186 = vadd.f32 %v1184, %v1185
  %v1187 = vrot.slane %v1186, 2
  %v1188 = vadd.f32 %v1186, %v1187
  %v1189 = vrot.slane %v1188, 1
  %v1190 = vadd.f32 %v1188, %v1189
  %v1191 = vsel %vm481, %v1159, 0.0
  %v1192 = vrot.slane %v1191, 4
  %v1193 = vadd.f32 %v1191, %v1192
  %v1194 = vrot.slane %v1193, 2
  %v1195 = vadd.f32 %v1193, %v1194
  %v1196 = vrot.slane %v1195, 1
  %v1197 = vadd.f32 %v1195, %v1196
  %v1198 = vsel %vm481, %v1160, 0.0
  %v1199 = vrot.slane %v1198, 4
  %v1200 = vadd.f32 %v1198, %v1199
  %v1201 = vrot.slane %v1200, 2
  %v1202 = vadd.f32 %v1200, %v1201
  %v1203 = vrot.slane %v1202, 1
  %v1204 = vadd.f32 %v1202, %v1203
  %v1205 = vsel %vm481, %v1161, 0.0
  %v1206 = vrot.slane %v1205, 4
  %v1207 = vadd.f32 %v1205, %v1206
  %v1208 = vrot.slane %v1207, 2
  %v1209 = vadd.f32 %v1207, %v1208
  %v1210 = vrot.slane %v1209, 1
  %v1211 = vadd.f32 %v1209, %v1210
  %v1212 = vsel %vm481, %v1162, 0.0
  %v1213 = vrot.slane %v1212, 4
  %v1214 = vadd.f32 %v1212, %v1213
  %v1215 = vrot.slane %v1214, 2
  %v1216 = vadd.f32 %v1214, %v1215
  %v1217 = vrot.slane %v1216, 1
  %v1218 = vadd.f32 %v1216, %v1217
  %v1219 = vmul.f32 %v1169, %v538
  %v1220 = vmul.f32 %v1176, %v538
  %v1221 = vmul.f32 %v1183, %v538
  %v1222 = vmul.f32 %v1190, %v538
  %v1223 = vmul.f32 %v1197, %v538
  %v1224 = vmul.f32 %v1204, %v538
  %v1225 = vmul.f32 %v1211, %v538
  %v1226 = vmul.f32 %v1218, %v538
  %v1227 = vld [vmem:[%s4] sm:$0x1]
  %1228 = vmatprep.subr.mxu0 0.0
  %1229 = vmatpush1.msra.mxu0 %v289
  %1230 = vmatprep.subr.mxu0 0.0
  %1231 = vmatpush1.msra.mxu0 %v290
  %1232 = vmatprep.subr.mxu0 0.0
  %1233 = vmatpush1.msra.mxu0 %v291
  %1234 = vmatprep.subr.mxu0 0.0
  %1235 = vmatpush1.msra.mxu0 %v292
  %1236 = vmatprep.subr.mxu0 0.0
  %1237 = vmatpush1.msra.mxu0 %v293
  %1238 = vmatprep.subr.mxu0 0.0
  %1239 = vmatpush1.msra.mxu0 %v294
  %1240 = vmatprep.subr.mxu0 0.0
  %1241 = vmatpush1.msra.mxu0 %v295
  %1242 = vmatprep.subr.mxu0 0.0
  %1243 = vmatpush1.msra.mxu0 %v296
  %1244 = vmatprep.subr.mxu0 0.0
  %1245 = vmatpush1.msra.mxu0 %v297
  %1246 = vmatprep.subr.mxu0 0.0
  %1247 = vmatpush1.msra.mxu0 %v298
  %1248 = vmatprep.subr.mxu0 0.0
  %1249 = vmatpush1.msra.mxu0 %v299
  %1250 = vmatprep.subr.mxu0 0.0
  %1251 = vmatpush1.msra.mxu0 %v300
  %1252 = vmatprep.subr.mxu0 0.0
  %1253 = vmatpush1.msra.mxu0 %v301
  %1254 = vmatprep.subr.mxu0 0.0
  %1255 = vmatpush1.msra.mxu0 %v302
  %1256 = vmatprep.subr.mxu0 0.0
  %1257 = vmatpush1.msra.mxu0 %v303
  %1258 = vmatprep.subr.mxu0 0.0
  %1259 = vmatpush1.msra.mxu0 %v304
  %1260 = vmatprep.subr.mxu0 0.0
  %1261 = vmatpush1.msra.mxu0 %v305
  %1262 = vmatprep.subr.mxu0 0.0
  %1263 = vmatpush1.msra.mxu0 %v306
  %1264 = vmatprep.subr.mxu0 0.0
  %1265 = vmatpush1.msra.mxu0 %v307
  %1266 = vmatprep.subr.mxu0 0.0
  %1267 = vmatpush1.msra.mxu0 %v308
  %1268 = vmatprep.subr.mxu0 0.0
  %1269 = vmatpush1.msra.mxu0 %v309
  %1270 = vmatprep.subr.mxu0 0.0
  %1271 = vmatpush1.msra.mxu0 %v310
  %1272 = vmatprep.subr.mxu0 0.0
  %1273 = vmatpush1.msra.mxu0 %v311
  %1274 = vmatprep.subr.mxu0 0.0
  %1275 = vmatpush1.msra.mxu0 %v312
  %1276 = vmatprep.subr.mxu0 0.0
  %1277 = vmatpush1.msra.mxu0 %v313
  %1278 = vmatprep.subr.mxu0 0.0
  %1279 = vmatpush1.msra.mxu0 %v314
  %1280 = vmatprep.subr.mxu0 0.0
  %1281 = vmatpush1.msra.mxu0 %v315
  %1282 = vmatprep.subr.mxu0 0.0
  %1283 = vmatpush1.msra.mxu0 %v316
  %1284 = vmatprep.subr.mxu0 0.0
  %1285 = vmatpush1.msra.mxu0 %v317
  %1286 = vmatprep.subr.mxu0 0.0
  %1287 = vmatpush1.msra.mxu0 %v318
  %1288 = vmatprep.subr.mxu0 0.0
  %1289 = vmatpush1.msra.mxu0 %v319
  %1290 = vmatprep.subr.mxu0 0.0
  %1291 = vmatpush1.msra.mxu0 %v320
  %1292 = vmatprep.mubr.f32.mxu0 %v1220
  %1293 = vmatmul.mubr.f32.gmra.mrb[0].mxu0 %v1219
  %v1294 = vpop.f32.mrb[0].mxu0
  %v1295 = vadd.f32 1e-05, %v1294
  %v1296 = vpop.f32.mrb[0].mxu0
  %1297 = vdwg.mxu0
  %1298 = vmatprep.subr.mxu0 0.0
  %1299 = vmatpush1.msra.mxu0 %v321
  %1300 = vmatprep.subr.mxu0 0.0
  %1301 = vmatpush1.msra.mxu0 %v322
  %1302 = vmatprep.subr.mxu0 0.0
  %1303 = vmatpush1.msra.mxu0 %v323
  %1304 = vmatprep.subr.mxu0 0.0
  %1305 = vmatpush1.msra.mxu0 %v324
  %1306 = vmatprep.subr.mxu0 0.0
  %1307 = vmatpush1.msra.mxu0 %v325
  %1308 = vmatprep.subr.mxu0 0.0
  %1309 = vmatpush1.msra.mxu0 %v326
  %1310 = vmatprep.subr.mxu0 0.0
  %1311 = vmatpush1.msra.mxu0 %v327
  %1312 = vmatprep.subr.mxu0 0.0
  %1313 = vmatpush1.msra.mxu0 %v328
  %1314 = vmatprep.subr.mxu0 0.0
  %1315 = vmatpush1.msra.mxu0 %v329
  %1316 = vmatprep.subr.mxu0 0.0
  %1317 = vmatpush1.msra.mxu0 %v330
  %1318 = vmatprep.subr.mxu0 0.0
  %1319 = vmatpush1.msra.mxu0 %v331
  %1320 = vmatprep.subr.mxu0 0.0
  %1321 = vmatpush1.msra.mxu0 %v332
  %1322 = vmatprep.subr.mxu0 0.0
  %1323 = vmatpush1.msra.mxu0 %v333
  %1324 = vmatprep.subr.mxu0 0.0
  %1325 = vmatpush1.msra.mxu0 %v334
  %1326 = vmatprep.subr.mxu0 0.0
  %1327 = vmatpush1.msra.mxu0 %v335
  %1328 = vmatprep.subr.mxu0 0.0
  %1329 = vmatpush1.msra.mxu0 %v336
  %1330 = vmatprep.subr.mxu0 0.0
  %1331 = vmatpush1.msra.mxu0 %v337
  %1332 = vmatprep.subr.mxu0 0.0
  %1333 = vmatpush1.msra.mxu0 %v338
  %1334 = vmatprep.subr.mxu0 0.0
  %1335 = vmatpush1.msra.mxu0 %v339
  %1336 = vmatprep.subr.mxu0 0.0
  %1337 = vmatpush1.msra.mxu0 %v340
  %1338 = vmatprep.subr.mxu0 0.0
  %1339 = vmatpush1.msra.mxu0 %v341
  %1340 = vmatprep.subr.mxu0 0.0
  %1341 = vmatpush1.msra.mxu0 %v342
  %1342 = vmatprep.subr.mxu0 0.0
  %1343 = vmatpush1.msra.mxu0 %v343
  %1344 = vmatprep.subr.mxu0 0.0
  %1345 = vmatpush1.msra.mxu0 %v344
  %1346 = vmatprep.subr.mxu0 0.0
  %1347 = vmatpush1.msra.mxu0 %v345
  %1348 = vmatprep.subr.mxu0 0.0
  %1349 = vmatpush1.msra.mxu0 %v346
  %1350 = vmatprep.subr.mxu0 0.0
  %1351 = vmatpush1.msra.mxu0 %v347
  %1352 = vmatprep.subr.mxu0 0.0
  %1353 = vmatpush1.msra.mxu0 %v348
  %1354 = vmatprep.subr.mxu0 0.0
  %1355 = vmatpush1.msra.mxu0 %v349
  %1356 = vmatprep.subr.mxu0 0.0
  %1357 = vmatpush1.msra.mxu0 %v350
  %1358 = vmatprep.subr.mxu0 0.0
  %1359 = vmatpush1.msra.mxu0 %v351
  %1360 = vmatprep.subr.mxu0 0.0
  %1361 = vmatpush1.msra.mxu0 %v352
  %1362 = vmatprep.mubr.f32.mxu0 %v1222
  %1363 = vmatmul.mubr.f32.gmra.mrb[0].mxu0 %v1221
  %v1364 = vpop.f32.mrb[0].mxu0
  %v1365 = vadd.f32 %v1295, %v1364
  %v1366 = vpop.f32.mrb[0].mxu0
  %1367 = vdwg.mxu0
  %1368 = vmatprep.subr.mxu0 0.0
  %1369 = vmatpush1.msra.mxu0 %v353
  %1370 = vmatprep.subr.mxu0 0.0
  %1371 = vmatpush1.msra.mxu0 %v354
  %1372 = vmatprep.subr.mxu0 0.0
  %1373 = vmatpush1.msra.mxu0 %v355
  %1374 = vmatprep.subr.mxu0 0.0
  %1375 = vmatpush1.msra.mxu0 %v356
  %1376 = vmatprep.subr.mxu0 0.0
  %1377 = vmatpush1.msra.mxu0 %v357
  %1378 = vmatprep.subr.mxu0 0.0
  %1379 = vmatpush1.msra.mxu0 %v358
  %1380 = vmatprep.subr.mxu0 0.0
  %1381 = vmatpush1.msra.mxu0 %v359
  %1382 = vmatprep.subr.mxu0 0.0
  %1383 = vmatpush1.msra.mxu0 %v360
  %1384 = vmatprep.subr.mxu0 0.0
  %1385 = vmatpush1.msra.mxu0 %v361
  %1386 = vmatprep.subr.mxu0 0.0
  %1387 = vmatpush1.msra.mxu0 %v362
  %1388 = vmatprep.subr.mxu0 0.0
  %1389 = vmatpush1.msra.mxu0 %v363
  %1390 = vmatprep.subr.mxu0 0.0
  %1391 = vmatpush1.msra.mxu0 %v364
  %1392 = vmatprep.subr.mxu0 0.0
  %1393 = vmatpush1.msra.mxu0 %v365
  %1394 = vmatprep.subr.mxu0 0.0
  %1395 = vmatpush1.msra.mxu0 %v366
  %1396 = vmatprep.subr.mxu0 0.0
  %1397 = vmatpush1.msra.mxu0 %v367
  %1398 = vmatprep.subr.mxu0 0.0
  %1399 = vmatpush1.msra.mxu0 %v368
  %1400 = vmatprep.subr.mxu0 0.0
  %1401 = vmatpush1.msra.mxu0 %v369
  %1402 = vmatprep.subr.mxu0 0.0
  %1403 = vmatpush1.msra.mxu0 %v370
  %1404 = vmatprep.subr.mxu0 0.0
  %1405 = vmatpush1.msra.mxu0 %v371
  %1406 = vmatprep.subr.mxu0 0.0
  %1407 = vmatpush1.msra.mxu0 %v372
  %1408 = vmatprep.subr.mxu0 0.0
  %1409 = vmatpush1.msra.mxu0 %v373
  %1410 = vmatprep.subr.mxu0 0.0
  %1411 = vmatpush1.msra.mxu0 %v374
  %1412 = vmatprep.subr.mxu0 0.0
  %1413 = vmatpush1.msra.mxu0 %v375
  %1414 = vmatprep.subr.mxu0 0.0
  %1415 = vmatpush1.msra.mxu0 %v376
  %1416 = vmatprep.subr.mxu0 0.0
  %1417 = vmatpush1.msra.mxu0 %v377
  %1418 = vmatprep.subr.mxu0 0.0
  %1419 = vmatpush1.msra.mxu0 %v378
  %1420 = vmatprep.subr.mxu0 0.0
  %1421 = vmatpush1.msra.mxu0 %v379
  %1422 = vmatprep.subr.mxu0 0.0
  %1423 = vmatpush1.msra.mxu0 %v380
  %1424 = vmatprep.subr.mxu0 0.0
  %1425 = vmatpush1.msra.mxu0 %v381
  %1426 = vmatprep.subr.mxu0 0.0
  %1427 = vmatpush1.msra.mxu0 %v382
  %1428 = vmatprep.subr.mxu0 0.0
  %1429 = vmatpush1.msra.mxu0 %v383
  %1430 = vmatprep.subr.mxu0 0.0
  %1431 = vmatpush1.msra.mxu0 %v384
  %1432 = vmatprep.mubr.f32.mxu0 %v1224
  %1433 = vmatmul.mubr.f32.gmra.mrb[0].mxu0 %v1223
  %v1434 = vpop.f32.mrb[0].mxu0
  %v1435 = vadd.f32 %v1365, %v1434
  %v1436 = vpop.f32.mrb[0].mxu0
  %1437 = vdwg.mxu0
  %1438 = vmatprep.subr.mxu0 0.0
  %1439 = vmatpush1.msra.mxu0 %v385
  %1440 = vmatprep.subr.mxu0 0.0
  %1441 = vmatpush1.msra.mxu0 %v386
  %1442 = vmatprep.subr.mxu0 0.0
  %1443 = vmatpush1.msra.mxu0 %v387
  %1444 = vmatprep.subr.mxu0 0.0
  %1445 = vmatpush1.msra.mxu0 %v388
  %1446 = vmatprep.subr.mxu0 0.0
  %1447 = vmatpush1.msra.mxu0 %v389
  %1448 = vmatprep.subr.mxu0 0.0
  %1449 = vmatpush1.msra.mxu0 %v390
  %1450 = vmatprep.subr.mxu0 0.0
  %1451 = vmatpush1.msra.mxu0 %v391
  %1452 = vmatprep.subr.mxu0 0.0
  %1453 = vmatpush1.msra.mxu0 %v392
  %1454 = vmatprep.subr.mxu0 0.0
  %1455 = vmatpush1.msra.mxu0 %v393
  %1456 = vmatprep.subr.mxu0 0.0
  %1457 = vmatpush1.msra.mxu0 %v394
  %1458 = vmatprep.subr.mxu0 0.0
  %1459 = vmatpush1.msra.mxu0 %v395
  %1460 = vmatprep.subr.mxu0 0.0
  %1461 = vmatpush1.msra.mxu0 %v396
  %1462 = vmatprep.subr.mxu0 0.0
  %1463 = vmatpush1.msra.mxu0 %v397
  %1464 = vmatprep.subr.mxu0 0.0
  %1465 = vmatpush1.msra.mxu0 %v398
  %1466 = vmatprep.subr.mxu0 0.0
  %1467 = vmatpush1.msra.mxu0 %v399
  %1468 = vmatprep.subr.mxu0 0.0
  %1469 = vmatpush1.msra.mxu0 %v400
  %1470 = vmatprep.subr.mxu0 0.0
  %1471 = vmatpush1.msra.mxu0 %v401
  %1472 = vmatprep.subr.mxu0 0.0
  %1473 = vmatpush1.msra.mxu0 %v402
  %1474 = vmatprep.subr.mxu0 0.0
  %1475 = vmatpush1.msra.mxu0 %v403
  %1476 = vmatprep.subr.mxu0 0.0
  %1477 = vmatpush1.msra.mxu0 %v404
  %1478 = vmatprep.subr.mxu0 0.0
  %1479 = vmatpush1.msra.mxu0 %v405
  %1480 = vmatprep.subr.mxu0 0.0
  %1481 = vmatpush1.msra.mxu0 %v406
  %1482 = vmatprep.subr.mxu0 0.0
  %1483 = vmatpush1.msra.mxu0 %v407
  %1484 = vmatprep.subr.mxu0 0.0
  %1485 = vmatpush1.msra.mxu0 %v408
  %1486 = vmatprep.subr.mxu0 0.0
  %1487 = vmatpush1.msra.mxu0 %v409
  %1488 = vmatprep.subr.mxu0 0.0
  %1489 = vmatpush1.msra.mxu0 %v410
  %1490 = vmatprep.subr.mxu0 0.0
  %1491 = vmatpush1.msra.mxu0 %v411
  %1492 = vmatprep.subr.mxu0 0.0
  %1493 = vmatpush1.msra.mxu0 %v412
  %1494 = vmatprep.subr.mxu0 0.0
  %1495 = vmatpush1.msra.mxu0 %v413
  %1496 = vmatprep.subr.mxu0 0.0
  %1497 = vmatpush1.msra.mxu0 %v414
  %1498 = vmatprep.subr.mxu0 0.0
  %1499 = vmatpush1.msra.mxu0 %v415
  %1500 = vmatprep.subr.mxu0 0.0
  %1501 = vmatpush1.msra.mxu0 %v416
  %1502 = vmatprep.mubr.f32.mxu0 %v1226
  %1503 = vmatmul.mubr.f32.gmra.mrb[0].mxu0 %v1225
  %v1504 = vpop.f32.mrb[0].mxu0
  %v1505 = vadd.f32 %v1435, %v1504
  %v1506 = vpop.f32.mrb[0].mxu0
  %1507 = vdwg.mxu0
  %v1508 = vrsqrt.pop %v1505
  %v1509 = vmul.f32 %v1227, %v1508
  %v1511 = vsel %vm827, %v1509, 0
  %1513 = vmatprep.subr.mxu0 %v418
  %1514 = vmatpush1.msra.mxu0 %v417
  %1515 = vmatprep.subr.mxu0 %v426
  %1516 = vmatpush1.msra.mxu0 %v425
  %1517 = vmatprep.subr.mxu0 %v434
  %1518 = vmatpush1.msra.mxu0 %v433
  %1519 = vmatprep.subr.mxu0 %v442
  %1520 = vmatpush1.msra.mxu0 %v441
  %1521 = vmatprep.subr.mxu0 %v450
  %1522 = vmatpush1.msra.mxu0 %v449
  %1523 = vmatprep.subr.mxu0 %v458
  %1524 = vmatpush1.msra.mxu0 %v457
  %1525 = vmatprep.subr.mxu0 %v466
  %1526 = vmatpush1.msra.mxu0 %v465
  %1527 = vmatprep.subr.mxu0 %v474
  %1528 = vmatpush1.msra.mxu0 %v473
  %1529 = vmatprep.subr.mxu0 0.0
  %1530 = vmatpush1.msra.mxu0 0.0
  %1531 = vmatprep.subr.mxu0 0.0
  %1532 = vmatpush1.msra.mxu0 0.0
  %1533 = vmatprep.subr.mxu0 0.0
  %1534 = vmatpush1.msra.mxu0 0.0
  %1535 = vmatprep.subr.mxu0 0.0
  %1536 = vmatpush1.msra.mxu0 0.0
  %1537 = vmatprep.subr.mxu0 0.0
  %1538 = vmatpush1.msra.mxu0 0.0
  %1539 = vmatprep.subr.mxu0 0.0
  %1540 = vmatpush1.msra.mxu0 0.0
  %1541 = vmatprep.subr.mxu0 0.0
  %1542 = vmatpush1.msra.mxu0 0.0
  %1543 = vmatprep.subr.mxu0 0.0
  %1544 = vmatpush1.msra.mxu0 0.0
  %1545 = vmatprep.subr.mxu0 0.0
  %1546 = vmatpush1.msra.mxu0 0.0
  %1547 = vmatprep.subr.mxu0 0.0
  %1548 = vmatpush1.msra.mxu0 0.0
  %1549 = vmatprep.subr.mxu0 0.0
  %1550 = vmatpush1.msra.mxu0 0.0
  %1551 = vmatprep.subr.mxu0 0.0
  %1552 = vmatpush1.msra.mxu0 0.0
  %1553 = vmatprep.subr.mxu0 0.0
  %1554 = vmatpush1.msra.mxu0 0.0
  %1555 = vmatprep.subr.mxu0 0.0
  %1556 = vmatpush1.msra.mxu0 0.0
  %1557 = vmatprep.subr.mxu0 0.0
  %1558 = vmatpush1.msra.mxu0 0.0
  %1559 = vmatprep.subr.mxu0 0.0
  %1560 = vmatpush1.msra.mxu0 0.0
  %1561 = vmatprep.subr.mxu0 0.0
  %1562 = vmatpush1.msra.mxu0 0.0
  %1563 = vmatprep.subr.mxu0 0.0
  %1564 = vmatpush1.msra.mxu0 0.0
  %1565 = vmatprep.subr.mxu0 0.0
  %1566 = vmatpush1.msra.mxu0 0.0
  %1567 = vmatprep.subr.mxu0 0.0
  %1568 = vmatpush1.msra.mxu0 0.0
  %1569 = vmatprep.subr.mxu0 0.0
  %1570 = vmatpush1.msra.mxu0 0.0
  %1571 = vmatprep.subr.mxu0 0.0
  %1572 = vmatpush1.msra.mxu0 0.0
  %1573 = vmatprep.subr.mxu0 0.0
  %1574 = vmatpush1.msra.mxu0 0.0
  %1575 = vmatprep.subr.mxu0 0.0
  %1576 = vmatpush1.msra.mxu0 0.0
  %1577 = vmatprep.mubr.f32.mxu0 0.0
  %1578 = vmatmul.mubr.f32.gmra.mrb[0].mxu0 %v1511
  %v1579 = vpop.f32.mrb[0].mxu0
  %v1580 = vadd.f32 0.0, %v1579
  %v1581 = vpop.f32.mrb[0].mxu0
  %v1582 = vadd.f32 0.0, %v1581
  %1583 = vdwg.mxu0
  %1584 = vmatprep.subr.mxu0 %v420
  %1585 = vmatpush1.msra.mxu0 %v419
  %1586 = vmatprep.subr.mxu0 %v428
  %1587 = vmatpush1.msra.mxu0 %v427
  %1588 = vmatprep.subr.mxu0 %v436
  %1589 = vmatpush1.msra.mxu0 %v435
  %1590 = vmatprep.subr.mxu0 %v444
  %1591 = vmatpush1.msra.mxu0 %v443
  %1592 = vmatprep.subr.mxu0 %v452
  %1593 = vmatpush1.msra.mxu0 %v451
  %1594 = vmatprep.subr.mxu0 %v460
  %1595 = vmatpush1.msra.mxu0 %v459
  %1596 = vmatprep.subr.mxu0 %v468
  %1597 = vmatpush1.msra.mxu0 %v467
  %1598 = vmatprep.subr.mxu0 %v476
  %1599 = vmatpush1.msra.mxu0 %v475
  %1600 = vmatprep.subr.mxu0 0.0
  %1601 = vmatpush1.msra.mxu0 0.0
  %1602 = vmatprep.subr.mxu0 0.0
  %1603 = vmatpush1.msra.mxu0 0.0
  %1604 = vmatprep.subr.mxu0 0.0
  %1605 = vmatpush1.msra.mxu0 0.0
  %1606 = vmatprep.subr.mxu0 0.0
  %1607 = vmatpush1.msra.mxu0 0.0
  %1608 = vmatprep.subr.mxu0 0.0
  %1609 = vmatpush1.msra.mxu0 0.0
  %1610 = vmatprep.subr.mxu0 0.0
  %1611 = vmatpush1.msra.mxu0 0.0
  %1612 = vmatprep.subr.mxu0 0.0
  %1613 = vmatpush1.msra.mxu0 0.0
  %1614 = vmatprep.subr.mxu0 0.0
  %1615 = vmatpush1.msra.mxu0 0.0
  %1616 = vmatprep.subr.mxu0 0.0
  %1617 = vmatpush1.msra.mxu0 0.0
  %1618 = vmatprep.subr.mxu0 0.0
  %1619 = vmatpush1.msra.mxu0 0.0
  %1620 = vmatprep.subr.mxu0 0.0
  %1621 = vmatpush1.msra.mxu0 0.0
  %1622 = vmatprep.subr.mxu0 0.0
  %1623 = vmatpush1.msra.mxu0 0.0
  %1624 = vmatprep.subr.mxu0 0.0
  %1625 = vmatpush1.msra.mxu0 0.0
  %1626 = vmatprep.subr.mxu0 0.0
  %1627 = vmatpush1.msra.mxu0 0.0
  %1628 = vmatprep.subr.mxu0 0.0
  %1629 = vmatpush1.msra.mxu0 0.0
  %1630 = vmatprep.subr.mxu0 0.0
  %1631 = vmatpush1.msra.mxu0 0.0
  %1632 = vmatprep.subr.mxu0 0.0
  %1633 = vmatpush1.msra.mxu0 0.0
  %1634 = vmatprep.subr.mxu0 0.0
  %1635 = vmatpush1.msra.mxu0 0.0
  %1636 = vmatprep.subr.mxu0 0.0
  %1637 = vmatpush1.msra.mxu0 0.0
  %1638 = vmatprep.subr.mxu0 0.0
  %1639 = vmatpush1.msra.mxu0 0.0
  %1640 = vmatprep.subr.mxu0 0.0
  %1641 = vmatpush1.msra.mxu0 0.0
  %1642 = vmatprep.subr.mxu0 0.0
  %1643 = vmatpush1.msra.mxu0 0.0
  %1644 = vmatprep.subr.mxu0 0.0
  %1645 = vmatpush1.msra.mxu0 0.0
  %1646 = vmatprep.subr.mxu0 0.0
  %1647 = vmatpush1.msra.mxu0 0.0
  %1648 = vmatprep.mubr.f32.mxu0 0.0
  %1649 = vmatmul.mubr.f32.gmra.mrb[0].mxu0 %v1511
  %v1650 = vpop.f32.mrb[0].mxu0
  %v1651 = vadd.f32 0.0, %v1650
  %v1652 = vpop.f32.mrb[0].mxu0
  %v1653 = vadd.f32 0.0, %v1652
  %1654 = vdwg.mxu0
  %1655 = vmatprep.subr.mxu0 %v422
  %1656 = vmatpush1.msra.mxu0 %v421
  %1657 = vmatprep.subr.mxu0 %v430
  %1658 = vmatpush1.msra.mxu0 %v429
  %1659 = vmatprep.subr.mxu0 %v438
  %1660 = vmatpush1.msra.mxu0 %v437
  %1661 = vmatprep.subr.mxu0 %v446
  %1662 = vmatpush1.msra.mxu0 %v445
  %1663 = vmatprep.subr.mxu0 %v454
  %1664 = vmatpush1.msra.mxu0 %v453
  %1665 = vmatprep.subr.mxu0 %v462
  %1666 = vmatpush1.msra.mxu0 %v461
  %1667 = vmatprep.subr.mxu0 %v470
  %1668 = vmatpush1.msra.mxu0 %v469
  %1669 = vmatprep.subr.mxu0 %v478
  %1670 = vmatpush1.msra.mxu0 %v477
  %1671 = vmatprep.subr.mxu0 0.0
  %1672 = vmatpush1.msra.mxu0 0.0
  %1673 = vmatprep.subr.mxu0 0.0
  %1674 = vmatpush1.msra.mxu0 0.0
  %1675 = vmatprep.subr.mxu0 0.0
  %1676 = vmatpush1.msra.mxu0 0.0
  %1677 = vmatprep.subr.mxu0 0.0
  %1678 = vmatpush1.msra.mxu0 0.0
  %1679 = vmatprep.subr.mxu0 0.0
  %1680 = vmatpush1.msra.mxu0 0.0
  %1681 = vmatprep.subr.mxu0 0.0
  %1682 = vmatpush1.msra.mxu0 0.0
  %1683 = vmatprep.subr.mxu0 0.0
  %1684 = vmatpush1.msra.mxu0 0.0
  %1685 = vmatprep.subr.mxu0 0.0
  %1686 = vmatpush1.msra.mxu0 0.0
  %1687 = vmatprep.subr.mxu0 0.0
  %1688 = vmatpush1.msra.mxu0 0.0
  %1689 = vmatprep.subr.mxu0 0.0
  %1690 = vmatpush1.msra.mxu0 0.0
  %1691 = vmatprep.subr.mxu0 0.0
  %1692 = vmatpush1.msra.mxu0 0.0
  %1693 = vmatprep.subr.mxu0 0.0
  %1694 = vmatpush1.msra.mxu0 0.0
  %1695 = vmatprep.subr.mxu0 0.0
  %1696 = vmatpush1.msra.mxu0 0.0
  %1697 = vmatprep.subr.mxu0 0.0
  %1698 = vmatpush1.msra.mxu0 0.0
  %1699 = vmatprep.subr.mxu0 0.0
  %1700 = vmatpush1.msra.mxu0 0.0
  %1701 = vmatprep.subr.mxu0 0.0
  %1702 = vmatpush1.msra.mxu0 0.0
  %1703 = vmatprep.subr.mxu0 0.0
  %1704 = vmatpush1.msra.mxu0 0.0
  %1705 = vmatprep.subr.mxu0 0.0
  %1706 = vmatpush1.msra.mxu0 0.0
  %1707 = vmatprep.subr.mxu0 0.0
  %1708 = vmatpush1.msra.mxu0 0.0
  %1709 = vmatprep.subr.mxu0 0.0
  %1710 = vmatpush1.msra.mxu0 0.0
  %1711 = vmatprep.subr.mxu0 0.0
  %1712 = vmatpush1.msra.mxu0 0.0
  %1713 = vmatprep.subr.mxu0 0.0
  %1714 = vmatpush1.msra.mxu0 0.0
  %1715 = vmatprep.subr.mxu0 0.0
  %1716 = vmatpush1.msra.mxu0 0.0
  %1717 = vmatprep.subr.mxu0 0.0
  %1718 = vmatpush1.msra.mxu0 0.0
  %1719 = vmatprep.mubr.f32.mxu0 0.0
  %1720 = vmatmul.mubr.f32.gmra.mrb[0].mxu0 %v1511
  %v1721 = vpop.f32.mrb[0].mxu0
  %v1722 = vadd.f32 0.0, %v1721
  %v1723 = vpop.f32.mrb[0].mxu0
  %v1724 = vadd.f32 0.0, %v1723
  %1725 = vdwg.mxu0
  %1726 = vmatprep.subr.mxu0 %v424
  %1727 = vmatpush1.msra.mxu0 %v423
  %1728 = vmatprep.subr.mxu0 %v432
  %1729 = vmatpush1.msra.mxu0 %v431
  %1730 = vmatprep.subr.mxu0 %v440
  %1731 = vmatpush1.msra.mxu0 %v439
  %1732 = vmatprep.subr.mxu0 %v448
  %1733 = vmatpush1.msra.mxu0 %v447
  %1734 = vmatprep.subr.mxu0 %v456
  %1735 = vmatpush1.msra.mxu0 %v455
  %1736 = vmatprep.subr.mxu0 %v464
  %1737 = vmatpush1.msra.mxu0 %v463
  %1738 = vmatprep.subr.mxu0 %v472
  %1739 = vmatpush1.msra.mxu0 %v471
  %1740 = vmatprep.subr.mxu0 %v480
  %1741 = vmatpush1.msra.mxu0 %v479
  %1742 = vmatprep.subr.mxu0 0.0
  %1743 = vmatpush1.msra.mxu0 0.0
  %1744 = vmatprep.subr.mxu0 0.0
  %1745 = vmatpush1.msra.mxu0 0.0
  %1746 = vmatprep.subr.mxu0 0.0
  %1747 = vmatpush1.msra.mxu0 0.0
  %1748 = vmatprep.subr.mxu0 0.0
  %1749 = vmatpush1.msra.mxu0 0.0
  %1750 = vmatprep.subr.mxu0 0.0
  %1751 = vmatpush1.msra.mxu0 0.0
  %1752 = vmatprep.subr.mxu0 0.0
  %1753 = vmatpush1.msra.mxu0 0.0
  %1754 = vmatprep.subr.mxu0 0.0
  %1755 = vmatpush1.msra.mxu0 0.0
  %1756 = vmatprep.subr.mxu0 0.0
  %1757 = vmatpush1.msra.mxu0 0.0
  %1758 = vmatprep.subr.mxu0 0.0
  %1759 = vmatpush1.msra.mxu0 0.0
  %1760 = vmatprep.subr.mxu0 0.0
  %1761 = vmatpush1.msra.mxu0 0.0
  %1762 = vmatprep.subr.mxu0 0.0
  %1763 = vmatpush1.msra.mxu0 0.0
  %1764 = vmatprep.subr.mxu0 0.0
  %1765 = vmatpush1.msra.mxu0 0.0
  %1766 = vmatprep.subr.mxu0 0.0
  %1767 = vmatpush1.msra.mxu0 0.0
  %1768 = vmatprep.subr.mxu0 0.0
  %1769 = vmatpush1.msra.mxu0 0.0
  %1770 = vmatprep.subr.mxu0 0.0
  %1771 = vmatpush1.msra.mxu0 0.0
  %1772 = vmatprep.subr.mxu0 0.0
  %1773 = vmatpush1.msra.mxu0 0.0
  %1774 = vmatprep.subr.mxu0 0.0
  %1775 = vmatpush1.msra.mxu0 0.0
  %1776 = vmatprep.subr.mxu0 0.0
  %1777 = vmatpush1.msra.mxu0 0.0
  %1778 = vmatprep.subr.mxu0 0.0
  %1779 = vmatpush1.msra.mxu0 0.0
  %1780 = vmatprep.subr.mxu0 0.0
  %1781 = vmatpush1.msra.mxu0 0.0
  %1782 = vmatprep.subr.mxu0 0.0
  %1783 = vmatpush1.msra.mxu0 0.0
  %1784 = vmatprep.subr.mxu0 0.0
  %1785 = vmatpush1.msra.mxu0 0.0
  %1786 = vmatprep.subr.mxu0 0.0
  %1787 = vmatpush1.msra.mxu0 0.0
  %1788 = vmatprep.subr.mxu0 0.0
  %1789 = vmatpush1.msra.mxu0 0.0
  %1790 = vmatprep.mubr.f32.mxu0 0.0
  %1791 = vmatmul.mubr.f32.gmra.mrb[0].mxu0 %v1511
  %v1792 = vpop.f32.mrb[0].mxu0
  %v1793 = vadd.f32 0.0, %v1792
  %v1794 = vpop.f32.mrb[0].mxu0
  %v1795 = vadd.f32 0.0, %v1794
  %1796 = vdwg.mxu0
  %v1797 = vld [vmem:[%s5] sm:$0x1]
  %v1799 = vsel %vm827, %v1797, 0
  %1801 = vmatprep.subr.mxu0 %v418
  %1802 = vmatpush1.msra.mxu0 %v417
  %1803 = vmatprep.subr.mxu0 %v426
  %1804 = vmatpush1.msra.mxu0 %v425
  %1805 = vmatprep.subr.mxu0 %v434
  %1806 = vmatpush1.msra.mxu0 %v433
  %1807 = vmatprep.subr.mxu0 %v442
  %1808 = vmatpush1.msra.mxu0 %v441
  %1809 = vmatprep.subr.mxu0 %v450
  %1810 = vmatpush1.msra.mxu0 %v449
  %1811 = vmatprep.subr.mxu0 %v458
  %1812 = vmatpush1.msra.mxu0 %v457
  %1813 = vmatprep.subr.mxu0 %v466
  %1814 = vmatpush1.msra.mxu0 %v465
  %1815 = vmatprep.subr.mxu0 %v474
  %1816 = vmatpush1.msra.mxu0 %v473
  %1817 = vmatprep.subr.mxu0 0.0
  %1818 = vmatpush1.msra.mxu0 0.0
  %1819 = vmatprep.subr.mxu0 0.0
  %1820 = vmatpush1.msra.mxu0 0.0
  %1821 = vmatprep.subr.mxu0 0.0
  %1822 = vmatpush1.msra.mxu0 0.0
  %1823 = vmatprep.subr.mxu0 0.0
  %1824 = vmatpush1.msra.mxu0 0.0
  %1825 = vmatprep.subr.mxu0 0.0
  %1826 = vmatpush1.msra.mxu0 0.0
  %1827 = vmatprep.subr.mxu0 0.0
  %1828 = vmatpush1.msra.mxu0 0.0
  %1829 = vmatprep.subr.mxu0 0.0
  %1830 = vmatpush1.msra.mxu0 0.0
  %1831 = vmatprep.subr.mxu0 0.0
  %1832 = vmatpush1.msra.mxu0 0.0
  %1833 = vmatprep.subr.mxu0 0.0
  %1834 = vmatpush1.msra.mxu0 0.0
  %1835 = vmatprep.subr.mxu0 0.0
  %1836 = vmatpush1.msra.mxu0 0.0
  %1837 = vmatprep.subr.mxu0 0.0
  %1838 = vmatpush1.msra.mxu0 0.0
  %1839 = vmatprep.subr.mxu0 0.0
  %1840 = vmatpush1.msra.mxu0 0.0
  %1841 = vmatprep.subr.mxu0 0.0
  %1842 = vmatpush1.msra.mxu0 0.0
  %1843 = vmatprep.subr.mxu0 0.0
  %1844 = vmatpush1.msra.mxu0 0.0
  %1845 = vmatprep.subr.mxu0 0.0
  %1846 = vmatpush1.msra.mxu0 0.0
  %1847 = vmatprep.subr.mxu0 0.0
  %1848 = vmatpush1.msra.mxu0 0.0
  %1849 = vmatprep.subr.mxu0 0.0
  %1850 = vmatpush1.msra.mxu0 0.0
  %1851 = vmatprep.subr.mxu0 0.0
  %1852 = vmatpush1.msra.mxu0 0.0
  %1853 = vmatprep.subr.mxu0 0.0
  %1854 = vmatpush1.msra.mxu0 0.0
  %1855 = vmatprep.subr.mxu0 0.0
  %1856 = vmatpush1.msra.mxu0 0.0
  %1857 = vmatprep.subr.mxu0 0.0
  %1858 = vmatpush1.msra.mxu0 0.0
  %1859 = vmatprep.subr.mxu0 0.0
  %1860 = vmatpush1.msra.mxu0 0.0
  %1861 = vmatprep.subr.mxu0 0.0
  %1862 = vmatpush1.msra.mxu0 0.0
  %1863 = vmatprep.subr.mxu0 0.0
  %1864 = vmatpush1.msra.mxu0 0.0
  %1865 = vmatprep.mubr.f32.mxu0 0.0
  %1866 = vmatmul.mubr.f32.gmra.mrb[0].mxu0 %v1799
  %v1867 = vpop.f32.mrb[0].mxu0
  %v1868 = vadd.f32 0.0, %v1867
  %v1869 = vpop.f32.mrb[0].mxu0
  %v1870 = vadd.f32 0.0, %v1869
  %1871 = vdwg.mxu0
  %1872 = vmatprep.subr.mxu0 %v420
  %1873 = vmatpush1.msra.mxu0 %v419
  %1874 = vmatprep.subr.mxu0 %v428
  %1875 = vmatpush1.msra.mxu0 %v427
  %1876 = vmatprep.subr.mxu0 %v436
  %1877 = vmatpush1.msra.mxu0 %v435
  %1878 = vmatprep.subr.mxu0 %v444
  %1879 = vmatpush1.msra.mxu0 %v443
  %1880 = vmatprep.subr.mxu0 %v452
  %1881 = vmatpush1.msra.mxu0 %v451
  %1882 = vmatprep.subr.mxu0 %v460
  %1883 = vmatpush1.msra.mxu0 %v459
  %1884 = vmatprep.subr.mxu0 %v468
  %1885 = vmatpush1.msra.mxu0 %v467
  %1886 = vmatprep.subr.mxu0 %v476
  %1887 = vmatpush1.msra.mxu0 %v475
  %1888 = vmatprep.subr.mxu0 0.0
  %1889 = vmatpush1.msra.mxu0 0.0
  %1890 = vmatprep.subr.mxu0 0.0
  %1891 = vmatpush1.msra.mxu0 0.0
  %1892 = vmatprep.subr.mxu0 0.0
  %1893 = vmatpush1.msra.mxu0 0.0
  %1894 = vmatprep.subr.mxu0 0.0
  %1895 = vmatpush1.msra.mxu0 0.0
  %1896 = vmatprep.subr.mxu0 0.0
  %1897 = vmatpush1.msra.mxu0 0.0
  %1898 = vmatprep.subr.mxu0 0.0
  %1899 = vmatpush1.msra.mxu0 0.0
  %1900 = vmatprep.subr.mxu0 0.0
  %1901 = vmatpush1.msra.mxu0 0.0
  %1902 = vmatprep.subr.mxu0 0.0
  %1903 = vmatpush1.msra.mxu0 0.0
  %1904 = vmatprep.subr.mxu0 0.0
  %1905 = vmatpush1.msra.mxu0 0.0
  %1906 = vmatprep.subr.mxu0 0.0
  %1907 = vmatpush1.msra.mxu0 0.0
  %1908 = vmatprep.subr.mxu0 0.0
  %1909 = vmatpush1.msra.mxu0 0.0
  %1910 = vmatprep.subr.mxu0 0.0
  %1911 = vmatpush1.msra.mxu0 0.0
  %1912 = vmatprep.subr.mxu0 0.0
  %1913 = vmatpush1.msra.mxu0 0.0
  %1914 = vmatprep.subr.mxu0 0.0
  %1915 = vmatpush1.msra.mxu0 0.0
  %1916 = vmatprep.subr.mxu0 0.0
  %1917 = vmatpush1.msra.mxu0 0.0
  %1918 = vmatprep.subr.mxu0 0.0
  %1919 = vmatpush1.msra.mxu0 0.0
  %1920 = vmatprep.subr.mxu0 0.0
  %1921 = vmatpush1.msra.mxu0 0.0
  %1922 = vmatprep.subr.mxu0 0.0
  %1923 = vmatpush1.msra.mxu0 0.0
  %1924 = vmatprep.subr.mxu0 0.0
  %1925 = vmatpush1.msra.mxu0 0.0
  %1926 = vmatprep.subr.mxu0 0.0
  %1927 = vmatpush1.msra.mxu0 0.0
  %1928 = vmatprep.subr.mxu0 0.0
  %1929 = vmatpush1.msra.mxu0 0.0
  %1930 = vmatprep.subr.mxu0 0.0
  %1931 = vmatpush1.msra.mxu0 0.0
  %1932 = vmatprep.subr.mxu0 0.0
  %1933 = vmatpush1.msra.mxu0 0.0
  %1934 = vmatprep.subr.mxu0 0.0
  %1935 = vmatpush1.msra.mxu0 0.0
  %1936 = vmatprep.mubr.f32.mxu0 0.0
  %1937 = vmatmul.mubr.f32.gmra.mrb[0].mxu0 %v1799
  %v1938 = vpop.f32.mrb[0].mxu0
  %v1939 = vadd.f32 0.0, %v1938
  %v1940 = vpop.f32.mrb[0].mxu0
  %v1941 = vadd.f32 0.0, %v1940
  %1942 = vdwg.mxu0
  %1943 = vmatprep.subr.mxu0 %v422
  %1944 = vmatpush1.msra.mxu0 %v421
  %1945 = vmatprep.subr.mxu0 %v430
  %1946 = vmatpush1.msra.mxu0 %v429
  %1947 = vmatprep.subr.mxu0 %v438
  %1948 = vmatpush1.msra.mxu0 %v437
  %1949 = vmatprep.subr.mxu0 %v446
  %1950 = vmatpush1.msra.mxu0 %v445
  %1951 = vmatprep.subr.mxu0 %v454
  %1952 = vmatpush1.msra.mxu0 %v453
  %1953 = vmatprep.subr.mxu0 %v462
  %1954 = vmatpush1.msra.mxu0 %v461
  %1955 = vmatprep.subr.mxu0 %v470
  %1956 = vmatpush1.msra.mxu0 %v469
  %1957 = vmatprep.subr.mxu0 %v478
  %1958 = vmatpush1.msra.mxu0 %v477
  %1959 = vmatprep.subr.mxu0 0.0
  %1960 = vmatpush1.msra.mxu0 0.0
  %1961 = vmatprep.subr.mxu0 0.0
  %1962 = vmatpush1.msra.mxu0 0.0
  %1963 = vmatprep.subr.mxu0 0.0
  %1964 = vmatpush1.msra.mxu0 0.0
  %1965 = vmatprep.subr.mxu0 0.0
  %1966 = vmatpush1.msra.mxu0 0.0
  %1967 = vmatprep.subr.mxu0 0.0
  %1968 = vmatpush1.msra.mxu0 0.0
  %1969 = vmatprep.subr.mxu0 0.0
  %1970 = vmatpush1.msra.mxu0 0.0
  %1971 = vmatprep.subr.mxu0 0.0
  %1972 = vmatpush1.msra.mxu0 0.0
  %1973 = vmatprep.subr.mxu0 0.0
  %1974 = vmatpush1.msra.mxu0 0.0
  %1975 = vmatprep.subr.mxu0 0.0
  %1976 = vmatpush1.msra.mxu0 0.0
  %1977 = vmatprep.subr.mxu0 0.0
  %1978 = vmatpush1.msra.mxu0 0.0
  %1979 = vmatprep.subr.mxu0 0.0
  %1980 = vmatpush1.msra.mxu0 0.0
  %1981 = vmatprep.subr.mxu0 0.0
  %1982 = vmatpush1.msra.mxu0 0.0
  %1983 = vmatprep.subr.mxu0 0.0
  %1984 = vmatpush1.msra.mxu0 0.0
  %1985 = vmatprep.subr.mxu0 0.0
  %1986 = vmatpush1.msra.mxu0 0.0
  %1987 = vmatprep.subr.mxu0 0.0
  %1988 = vmatpush1.msra.mxu0 0.0
  %1989 = vmatprep.subr.mxu0 0.0
  %1990 = vmatpush1.msra.mxu0 0.0
  %1991 = vmatprep.subr.mxu0 0.0
  %1992 = vmatpush1.msra.mxu0 0.0
  %1993 = vmatprep.subr.mxu0 0.0
  %1994 = vmatpush1.msra.mxu0 0.0
  %1995 = vmatprep.subr.mxu0 0.0
  %1996 = vmatpush1.msra.mxu0 0.0
  %1997 = vmatprep.subr.mxu0 0.0
  %1998 = vmatpush1.msra.mxu0 0.0
  %1999 = vmatprep.subr.mxu0 0.0
  %2000 = vmatpush1.msra.mxu0 0.0
  %2001 = vmatprep.subr.mxu0 0.0
  %2002 = vmatpush1.msra.mxu0 0.0
  %2003 = vmatprep.subr.mxu0 0.0
  %2004 = vmatpush1.msra.mxu0 0.0
  %2005 = vmatprep.subr.mxu0 0.0
  %2006 = vmatpush1.msra.mxu0 0.0
  %2007 = vmatprep.mubr.f32.mxu0 0.0
  %2008 = vmatmul.mubr.f32.gmra.mrb[0].mxu0 %v1799
  %v2009 = vpop.f32.mrb[0].mxu0
  %v2010 = vadd.f32 0.0, %v2009
  %v2011 = vpop.f32.mrb[0].mxu0
  %v2012 = vadd.f32 0.0, %v2011
  %2013 = vdwg.mxu0
  %2014 = vmatprep.subr.mxu0 %v424
  %2015 = vmatpush1.msra.mxu0 %v423
  %2016 = vmatprep.subr.mxu0 %v432
  %2017 = vmatpush1.msra.mxu0 %v431
  %2018 = vmatprep.subr.mxu0 %v440
  %2019 = vmatpush1.msra.mxu0 %v439
  %2020 = vmatprep.subr.mxu0 %v448
  %2021 = vmatpush1.msra.mxu0 %v447
  %2022 = vmatprep.subr.mxu0 %v456
  %2023 = vmatpush1.msra.mxu0 %v455
  %2024 = vmatprep.subr.mxu0 %v464
  %2025 = vmatpush1.msra.mxu0 %v463
  %2026 = vmatprep.subr.mxu0 %v472
  %2027 = vmatpush1.msra.mxu0 %v471
  %2028 = vmatprep.subr.mxu0 %v480
  %2029 = vmatpush1.msra.mxu0 %v479
  %2030 = vmatprep.subr.mxu0 0.0
  %2031 = vmatpush1.msra.mxu0 0.0
  %2032 = vmatprep.subr.mxu0 0.0
  %2033 = vmatpush1.msra.mxu0 0.0
  %2034 = vmatprep.subr.mxu0 0.0
  %2035 = vmatpush1.msra.mxu0 0.0
  %2036 = vmatprep.subr.mxu0 0.0
  %2037 = vmatpush1.msra.mxu0 0.0
  %2038 = vmatprep.subr.mxu0 0.0
  %2039 = vmatpush1.msra.mxu0 0.0
  %2040 = vmatprep.subr.mxu0 0.0
  %2041 = vmatpush1.msra.mxu0 0.0
  %2042 = vmatprep.subr.mxu0 0.0
  %2043 = vmatpush1.msra.mxu0 0.0
  %2044 = vmatprep.subr.mxu0 0.0
  %2045 = vmatpush1.msra.mxu0 0.0
  %2046 = vmatprep.subr.mxu0 0.0
  %2047 = vmatpush1.msra.mxu0 0.0
  %2048 = vmatprep.subr.mxu0 0.0
  %2049 = vmatpush1.msra.mxu0 0.0
  %2050 = vmatprep.subr.mxu0 0.0
  %2051 = vmatpush1.msra.mxu0 0.0
  %2052 = vmatprep.subr.mxu0 0.0
  %2053 = vmatpush1.msra.mxu0 0.0
  %2054 = vmatprep.subr.mxu0 0.0
  %2055 = vmatpush1.msra.mxu0 0.0
  %2056 = vmatprep.subr.mxu0 0.0
  %2057 = vmatpush1.msra.mxu0 0.0
  %2058 = vmatprep.subr.mxu0 0.0
  %2059 = vmatpush1.msra.mxu0 0.0
  %2060 = vmatprep.subr.mxu0 0.0
  %2061 = vmatpush1.msra.mxu0 0.0
  %2062 = vmatprep.subr.mxu0 0.0
  %2063 = vmatpush1.msra.mxu0 0.0
  %2064 = vmatprep.subr.mxu0 0.0
  %2065 = vmatpush1.msra.mxu0 0.0
  %2066 = vmatprep.subr.mxu0 0.0
  %2067 = vmatpush1.msra.mxu0 0.0
  %2068 = vmatprep.subr.mxu0 0.0
  %2069 = vmatpush1.msra.mxu0 0.0
  %2070 = vmatprep.subr.mxu0 0.0
  %2071 = vmatpush1.msra.mxu0 0.0
  %2072 = vmatprep.subr.mxu0 0.0
  %2073 = vmatpush1.msra.mxu0 0.0
  %2074 = vmatprep.subr.mxu0 0.0
  %2075 = vmatpush1.msra.mxu0 0.0
  %2076 = vmatprep.subr.mxu0 0.0
  %2077 = vmatpush1.msra.mxu0 0.0
  %2078 = vmatprep.mubr.f32.mxu0 0.0
  %2079 = vmatmul.mubr.f32.gmra.mrb[0].mxu0 %v1799
  %v2080 = vpop.f32.mrb[0].mxu0
  %v2081 = vadd.f32 0.0, %v2080
  %v2082 = vpop.f32.mrb[0].mxu0
  %v2083 = vadd.f32 0.0, %v2082
  %2084 = vdwg.mxu0
  %v2085 = vlaneseq
  %v2086 = vshrl.u32 %v2085, 7
  %v2087 = vsub.s32 0, %v2086
  %v2088 = vrot.slane %v1580, %v2087
  %v2089 = vlaneseq
  %v2090 = vshrl.u32 %v2089, 7
  %v2091 = vsub.s32 0, %v2090
  %v2092 = vrot.slane %v1582, %v2091
  %v2093 = vlaneseq
  %v2094 = vshrl.u32 %v2093, 7
  %v2095 = vsub.s32 0, %v2094
  %v2096 = vrot.slane %v1651, %v2095
  %v2097 = vlaneseq
  %v2098 = vshrl.u32 %v2097, 7
  %v2099 = vsub.s32 0, %v2098
  %v2100 = vrot.slane %v1653, %v2099
  %v2101 = vlaneseq
  %v2102 = vshrl.u32 %v2101, 7
  %v2103 = vsub.s32 0, %v2102
  %v2104 = vrot.slane %v1722, %v2103
  %v2105 = vlaneseq
  %v2106 = vshrl.u32 %v2105, 7
  %v2107 = vsub.s32 0, %v2106
  %v2108 = vrot.slane %v1724, %v2107
  %v2109 = vlaneseq
  %v2110 = vshrl.u32 %v2109, 7
  %v2111 = vsub.s32 0, %v2110
  %v2112 = vrot.slane %v1793, %v2111
  %v2113 = vlaneseq
  %v2114 = vshrl.u32 %v2113, 7
  %v2115 = vsub.s32 0, %v2114
  %v2116 = vrot.slane %v1795, %v2115
  %v2117 = vmul.f32 %v1147, %v2088
  %v2118 = vmul.f32 %v1148, %v2092
  %v2119 = vmul.f32 %v1149, %v2096
  %v2120 = vmul.f32 %v1150, %v2100
  %v2121 = vmul.f32 %v1151, %v2104
  %v2122 = vmul.f32 %v1152, %v2108
  %v2123 = vmul.f32 %v1153, %v2112
  %v2124 = vmul.f32 %v1154, %v2116
  %v2125 = vlaneseq
  %v2126 = vshrl.u32 %v2125, 7
  %v2127 = vsub.s32 0, %v2126
  %v2128 = vrot.slane %v1868, %v2127
  %v2129 = vlaneseq
  %v2130 = vshrl.u32 %v2129, 7
  %v2131 = vsub.s32 0, %v2130
  %v2132 = vrot.slane %v1870, %v2131
  %v2133 = vlaneseq
  %v2134 = vshrl.u32 %v2133, 7
  %v2135 = vsub.s32 0, %v2134
  %v2136 = vrot.slane %v1939, %v2135
  %v2137 = vlaneseq
  %v2138 = vshrl.u32 %v2137, 7
  %v2139 = vsub.s32 0, %v2138
  %v2140 = vrot.slane %v1941, %v2139
  %v2141 = vlaneseq
  %v2142 = vshrl.u32 %v2141, 7
  %v2143 = vsub.s32 0, %v2142
  %v2144 = vrot.slane %v2010, %v2143
  %v2145 = vlaneseq
  %v2146 = vshrl.u32 %v2145, 7
  %v2147 = vsub.s32 0, %v2146
  %v2148 = vrot.slane %v2012, %v2147
  %v2149 = vlaneseq
  %v2150 = vshrl.u32 %v2149, 7
  %v2151 = vsub.s32 0, %v2150
  %v2152 = vrot.slane %v2081, %v2151
  %v2153 = vlaneseq
  %v2154 = vshrl.u32 %v2153, 7
  %v2155 = vsub.s32 0, %v2154
  %v2156 = vrot.slane %v2083, %v2155
  %v2157 = vadd.f32 %v2117, %v2128
  %v2158 = vadd.f32 %v2118, %v2132
  %v2159 = vadd.f32 %v2119, %v2136
  %v2160 = vadd.f32 %v2120, %v2140
  %v2161 = vadd.f32 %v2121, %v2144
  %v2162 = vadd.f32 %v2122, %v2148
  %v2163 = vadd.f32 %v2123, %v2152
  %v2164 = vadd.f32 %v2124, %v2156
  %v2165 = vmax.f32 %v2157, 0.0
  %v2166 = vmax.f32 %v2158, 0.0
  %v2167 = vmax.f32 %v2159, 0.0
  %v2168 = vmax.f32 %v2160, 0.0
  %v2169 = vmax.f32 %v2161, 0.0
  %v2170 = vmax.f32 %v2162, 0.0
  %v2171 = vmax.f32 %v2163, 0.0
  %v2172 = vmax.f32 %v2164, 0.0
  %v2181 = vcombine.low %v2165, %v2166
  %v2182 = vcombine.low %v2167, %v2168
  %v2184 = vunpack.c.l.s4 1983009808
  %v2185 = vunpack.c.0.s8 %v2184
  %v2186 = vlaneseq
  %v2187 = vshrl.u32 %v2186, 7
  %v2188 = vsub.s32 %v2185, %v2187
  %v2189 = vrot.slane %v2181, %v2188
  %v2191 = vunpack.c.l.s4 1983009808
  %v2192 = vunpack.c.0.s8 %v2191
  %v2193 = vlaneseq
  %v2194 = vshrl.u32 %v2193, 7
  %v2195 = vsub.s32 %v2192, %v2194
  %v2196 = vrot.slane %v2182, %v2195
  %v2197 = vcombine.low %v2189, %v2196
  %v2198 = vcombine.low %v2169, %v2170
  %v2199 = vcombine.low %v2171, %v2172
  %v2201 = vunpack.c.l.s4 1983009808
  %v2202 = vunpack.c.0.s8 %v2201
  %v2203 = vlaneseq
  %v2204 = vshrl.u32 %v2203, 7
  %v2205 = vsub.s32 %v2202, %v2204
  %v2206 = vrot.slane %v2198, %v2205
  %v2208 = vunpack.c.l.s4 1983009808
  %v2209 = vunpack.c.0.s8 %v2208
  %v2210 = vlaneseq
  %v2211 = vshrl.u32 %v2210, 7
  %v2212 = vsub.s32 %v2209, %v2211
  %v2213 = vrot.slane %v2199, %v2212
  %v2214 = vcombine.low %v2206, %v2213
  %2217 = vst [vmem:[%s6] sm:$0xff] %v2197
  %2218 = vst [vmem:[%s6 + $0x8] sm:$0xff] %v2214
  // Predicated region
  $region26: #{generator_forward.4} parent=0 // pred_check
    _
  $region27: #{generator_forward.4} parent=0 // pred_check_branch
    %2220 = sbr.rel (0) target = $region29
  $region28: #{generator_forward.4} parent=0 // pred_region
    _
  $region29: #{generator_forward.4} parent=0 // pred_fallthru
    _
  // Predicated region
  $region30: #{generator_forward.4} parent=0 // pred_check
    _
  $region31: #{generator_forward.4} parent=0 // pred_check_branch
    %2222 = sbr.rel (0) target = $region33
  $region32: #{generator_forward.4} parent=0 // pred_region
    _
  $region33: #{generator_forward.4} parent=0 // pred_fallthru
    _

// kernel: generator_forward.5
$region0: #{generator_forward.5}
  #allocation0 [shape = 'u32[]', space=smem, size = 0x4, offset = 0x4, fixed_abs, tag = 'smem constant byte address 0x4 - core index']
  #allocation1 [shape = 'u32[144,128]{1,0:T(1,128)}', space=vmem, size = 0x12000, scoped, tag = 'internal scratch']
  %s0 = inlined_call_operand.vmem [shape: bf16[32,576], index: 0, kind: input, shape index: {}]
  %s1 = inlined_call_operand.vmem [shape: bf16[576,128], index: 1, kind: input, shape index: {}]
  %s2 = inlined_call_operand.vmem [shape: f32[128,32], index: 2, kind: input, shape index: {}]
  %s3 = inlined_call_operand.vmem [shape: f32[32,128], index: 3, kind: input, shape index: {}]
  %s4 = inlined_call_operand.vmem [shape: f32[1,32], index: 4, kind: input, shape index: {}]
  %s5 = inlined_call_operand.vmem [shape: f32[1,32], index: 5, kind: input, shape index: {}]
  %s6 = inlined_call_operand.vmem [shape: f32[32,128], index: 6, kind: output, shape index: {}]
  %s7 = sld [smem:[#allocation0]]
  $region34: #{generator_forward.5} parent=0
    _
  %s9 = ssub.s32 1, %s7
  %s10 = scalar_select 0, %s9, %s7
  // Predicated region
  $region2: #{generator_forward.5} parent=0 // pred_check
    _
  $region3: #{generator_forward.5} parent=0 // pred_check_branch
    %12 = sbr.rel (0) target = $region5
  $region4: #{generator_forward.5} parent=0 // pred_region
    _
  $region5: #{generator_forward.5} parent=0 // pred_fallthru
    _
  // Predicated region
  $region6: #{generator_forward.5} parent=0 // pred_check
    _
  $region7: #{generator_forward.5} parent=0 // pred_check_branch
    %14 = sbr.rel (0) target = $region9
  $region8: #{generator_forward.5} parent=0 // pred_region
    _
  $region9: #{generator_forward.5} parent=0 // pred_fallthru
    _
  // Predicated region
  $region10: #{generator_forward.5} parent=0 // pred_check
    _
  $region11: #{generator_forward.5} parent=0 // pred_check_branch
    %16 = sbr.rel (0) target = $region13
  $region12: #{generator_forward.5} parent=0 // pred_region
    _
  $region13: #{generator_forward.5} parent=0 // pred_fallthru
    _
  // Predicated region
  $region14: #{generator_forward.5} parent=0 // pred_check
    _
  $region15: #{generator_forward.5} parent=0 // pred_check_branch
    %18 = sbr.rel (0) target = $region17
  $region16: #{generator_forward.5} parent=0 // pred_region
    _
  $region17: #{generator_forward.5} parent=0 // pred_fallthru
    _
  // Predicated region
  $region18: #{generator_forward.5} parent=0 // pred_check
    _
  $region19: #{generator_forward.5} parent=0 // pred_check_branch
    %20 = sbr.rel (0) target = $region21
  $region20: #{generator_forward.5} parent=0 // pred_region
    _
  $region21: #{generator_forward.5} parent=0 // pred_fallthru
    _
  // Predicated region
  $region22: #{generator_forward.5} parent=0 // pred_check
    _
  $region23: #{generator_forward.5} parent=0 // pred_check_branch
    %22 = sbr.rel (0) target = $region25
  $region24: #{generator_forward.5} parent=0 // pred_region
    _
  $region25: #{generator_forward.5} parent=0 // pred_fallthru
    _
  %v24 = vld [vmem:[%s0] sm:$0xff]
  %v25 = vld [vmem:[%s0 + $0x8] sm:$0xff]
  %v26 = vld [vmem:[%s0 + $0x10] sm:$0xf]
  %v27 = vld [vmem:[%s0 + $0x14] sm:$0xff]
  %v28 = vld [vmem:[%s0 + $0x1c] sm:$0xff]
  %v29 = vld [vmem:[%s0 + $0x24] sm:$0xf]
  %v30 = vld [vmem:[%s0 + $0x28] sm:$0xff]
  %v31 = vld [vmem:[%s0 + $0x30] sm:$0xff]
  %v32 = vld [vmem:[%s0 + $0x38] sm:$0xf]
  %v33 = vld [vmem:[%s0 + $0x3c] sm:$0xff]
  %v34 = vld [vmem:[%s0 + $0x44] sm:$0xff]
  %v35 = vld [vmem:[%s0 + $0x4c] sm:$0xf]
  %v36 = vld [vmem:[%s1] sm:$0xf]
  %v37 = vld [vmem:[%s1 + $0x4] sm:$0xf]
  %v38 = vld [vmem:[%s1 + $0x8] sm:$0xf]
  %v39 = vld [vmem:[%s1 + $0xc] sm:$0xf]
  %v40 = vld [vmem:[%s1 + $0x10] sm:$0xf]
  %v41 = vld [vmem:[%s1 + $0x14] sm:$0xf]
  %v42 = vld [vmem:[%s1 + $0x18] sm:$0xf]
  %v43 = vld [vmem:[%s1 + $0x1c] sm:$0xf]
  %v44 = vld [vmem:[%s1 + $0x20] sm:$0xf]
  %v45 = vld [vmem:[%s1 + $0x24] sm:$0xf]
  %v46 = vld [vmem:[%s1 + $0x28] sm:$0xf]
  %v47 = vld [vmem:[%s1 + $0x2c] sm:$0xf]
  %v48 = vld [vmem:[%s1 + $0x30] sm:$0xf]
  %v49 = vld [vmem:[%s1 + $0x34] sm:$0xf]
  %v50 = vld [vmem:[%s1 + $0x38] sm:$0xf]
  %v51 = vld [vmem:[%s1 + $0x3c] sm:$0xf]
  %v52 = vld [vmem:[%s1 + $0x40] sm:$0xf]
  %v53 = vld [vmem:[%s1 + $0x44] sm:$0xf]
  %v54 = vld [vmem:[%s1 + $0x48] sm:$0xf]
  %v55 = vld [vmem:[%s1 + $0x4c] sm:$0xf]
  %v56 = vld [vmem:[%s1 + $0x50] sm:$0xf]
  %v57 = vld [vmem:[%s1 + $0x54] sm:$0xf]
  %v58 = vld [vmem:[%s1 + $0x58] sm:$0xf]
  %v59 = vld [vmem:[%s1 + $0x5c] sm:$0xf]
  %v60 = vld [vmem:[%s1 + $0x60] sm:$0xf]
  %v61 = vld [vmem:[%s1 + $0x64] sm:$0xf]
  %v62 = vld [vmem:[%s1 + $0x68] sm:$0xf]
  %v63 = vld [vmem:[%s1 + $0x6c] sm:$0xf]
  %v64 = vld [vmem:[%s1 + $0x70] sm:$0xf]
  %v65 = vld [vmem:[%s1 + $0x74] sm:$0xf]
  %v66 = vld [vmem:[%s1 + $0x78] sm:$0xf]
  %v67 = vld [vmem:[%s1 + $0x7c] sm:$0xf]
  %v68 = vld [vmem:[%s1 + $0x80] sm:$0xf]
  %v69 = vld [vmem:[%s1 + $0x84] sm:$0xf]
  %v70 = vld [vmem:[%s1 + $0x88] sm:$0xf]
  %v71 = vld [vmem:[%s1 + $0x8c] sm:$0xf]
  %v72 = vld [vmem:[%s1 + $0x90] sm:$0xf]
  %v73 = vld [vmem:[%s1 + $0x94] sm:$0xf]
  %v74 = vld [vmem:[%s1 + $0x98] sm:$0xf]
  %v75 = vld [vmem:[%s1 + $0x9c] sm:$0xf]
  %v76 = vld [vmem:[%s1 + $0xa0] sm:$0xf]
  %v77 = vld [vmem:[%s1 + $0xa4] sm:$0xf]
  %v78 = vld [vmem:[%s1 + $0xa8] sm:$0xf]
  %v79 = vld [vmem:[%s1 + $0xac] sm:$0xf]
  %v80 = vld [vmem:[%s1 + $0xb0] sm:$0xf]
  %v81 = vld [vmem:[%s1 + $0xb4] sm:$0xf]
  %v82 = vld [vmem:[%s1 + $0xb8] sm:$0xf]
  %v83 = vld [vmem:[%s1 + $0xbc] sm:$0xf]
  %v84 = vld [vmem:[%s1 + $0xc0] sm:$0xf]
  %v85 = vld [vmem:[%s1 + $0xc4] sm:$0xf]
  %v86 = vld [vmem:[%s1 + $0xc8] sm:$0xf]
  %v87 = vld [vmem:[%s1 + $0xcc] sm:$0xf]
  %v88 = vld [vmem:[%s1 + $0xd0] sm:$0xf]
  %v89 = vld [vmem:[%s1 + $0xd4] sm:$0xf]
  %v90 = vld [vmem:[%s1 + $0xd8] sm:$0xf]
  %v91 = vld [vmem:[%s1 + $0xdc] sm:$0xf]
  %v92 = vld [vmem:[%s1 + $0xe0] sm:$0xf]
  %v93 = vld [vmem:[%s1 + $0xe4] sm:$0xf]
  %v94 = vld [vmem:[%s1 + $0xe8] sm:$0xf]
  %v95 = vld [vmem:[%s1 + $0xec] sm:$0xf]
  %v96 = vld [vmem:[%s1 + $0xf0] sm:$0xf]
  %v97 = vld [vmem:[%s1 + $0xf4] sm:$0xf]
  %v98 = vld [vmem:[%s1 + $0xf8] sm:$0xf]
  %v99 = vld [vmem:[%s1 + $0xfc] sm:$0xf]
  %v100 = vld [vmem:[%s1 + $0x100] sm:$0xf]
  %v101 = vld [vmem:[%s1 + $0x104] sm:$0xf]
  %v102 = vld [vmem:[%s1 + $0x108] sm:$0xf]
  %v103 = vld [vmem:[%s1 + $0x10c] sm:$0xf]
  %v104 = vld [vmem:[%s1 + $0x110] sm:$0xf]
  %v105 = vld [vmem:[%s1 + $0x114] sm:$0xf]
  %v106 = vld [vmem:[%s1 + $0x118] sm:$0xf]
  %v107 = vld [vmem:[%s1 + $0x11c] sm:$0xf]
  %v120 = vunpack.c.l.b16 %v24
  %v121 = vunpack.c.h.b16 %v24
  %v122 = vunpack.c.l.b16 %v25
  %v123 = vunpack.c.h.b16 %v25
  %v124 = vunpack.c.l.b16 %v26
  %v125 = vunpack.c.l.b16 %v27
  %v126 = vunpack.c.h.b16 %v27
  %v127 = vunpack.c.l.b16 %v28
  %v128 = vunpack.c.h.b16 %v28
  %v129 = vunpack.c.l.b16 %v29
  %v130 = vunpack.c.l.b16 %v30
  %v131 = vunpack.c.h.b16 %v30
  %v132 = vunpack.c.l.b16 %v31
  %v133 = vunpack.c.h.b16 %v31
  %v134 = vunpack.c.l.b16 %v32
  %v135 = vunpack.c.l.b16 %v33
  %v136 = vunpack.c.h.b16 %v33
  %v137 = vunpack.c.l.b16 %v34
  %v138 = vunpack.c.h.b16 %v34
  %v139 = vunpack.c.l.b16 %v35
  %v140 = vpack.c.b16 %v125, %v120
  %v141 = vpack.c.b16 %v126, %v121
  %v142 = vpack.c.b16 %v127, %v122
  %v143 = vpack.c.b16 %v128, %v123
  %v144 = vpack.c.b16 %v129, %v124
  %v145 = vpack.c.b16 %v135, %v130
  %v146 = vpack.c.b16 %v136, %v131
  %v147 = vpack.c.b16 %v137, %v132
  %v148 = vpack.c.b16 %v138, %v133
  %v149 = vpack.c.b16 %v139, %v134
  %v230 = vunpack.c.l.b16 %v36
  %v231 = vunpack.c.l.b16 %v37
  %v232 = vunpack.c.l.b16 %v38
  %v233 = vunpack.c.l.b16 %v39
  %v234 = vunpack.c.l.b16 %v40
  %v235 = vunpack.c.l.b16 %v41
  %v236 = vunpack.c.l.b16 %v42
  %v237 = vunpack.c.l.b16 %v43
  %v238 = vunpack.c.l.b16 %v44
  %v239 = vunpack.c.l.b16 %v45
  %v240 = vunpack.c.l.b16 %v46
  %v241 = vunpack.c.l.b16 %v47
  %v242 = vunpack.c.l.b16 %v48
  %v243 = vunpack.c.l.b16 %v49
  %v244 = vunpack.c.l.b16 %v50
  %v245 = vunpack.c.l.b16 %v51
  %v246 = vunpack.c.l.b16 %v52
  %v247 = vunpack.c.l.b16 %v53
  %v248 = vunpack.c.l.b16 %v54
  %v249 = vunpack.c.l.b16 %v55
  %v250 = vunpack.c.l.b16 %v56
  %v251 = vunpack.c.l.b16 %v57
  %v252 = vunpack.c.l.b16 %v58
  %v253 = vunpack.c.l.b16 %v59
  %v254 = vunpack.c.l.b16 %v60
  %v255 = vunpack.c.l.b16 %v61
  %v256 = vunpack.c.l.b16 %v62
  %v257 = vunpack.c.l.b16 %v63
  %v258 = vunpack.c.l.b16 %v64
  %v259 = vunpack.c.l.b16 %v65
  %v260 = vunpack.c.l.b16 %v66
  %v261 = vunpack.c.l.b16 %v67
  %v262 = vunpack.c.l.b16 %v68
  %v263 = vunpack.c.l.b16 %v69
  %v264 = vunpack.c.l.b16 %v70
  %v265 = vunpack.c.l.b16 %v71
  %v266 = vunpack.c.l.b16 %v72
  %v267 = vunpack.c.l.b16 %v73
  %v268 = vunpack.c.l.b16 %v74
  %v269 = vunpack.c.l.b16 %v75
  %v270 = vunpack.c.l.b16 %v76
  %v271 = vunpack.c.l.b16 %v77
  %v272 = vunpack.c.l.b16 %v78
  %v273 = vunpack.c.l.b16 %v79
  %v274 = vunpack.c.l.b16 %v80
  %v275 = vunpack.c.l.b16 %v81
  %v276 = vunpack.c.l.b16 %v82
  %v277 = vunpack.c.l.b16 %v83
  %v278 = vunpack.c.l.b16 %v84
  %v279 = vunpack.c.l.b16 %v85
  %v280 = vunpack.c.l.b16 %v86
  %v281 = vunpack.c.l.b16 %v87
  %v282 = vunpack.c.l.b16 %v88
  %v283 = vunpack.c.l.b16 %v89
  %v284 = vunpack.c.l.b16 %v90
  %v285 = vunpack.c.l.b16 %v91
  %v286 = vunpack.c.l.b16 %v92
  %v287 = vunpack.c.l.b16 %v93
  %v288 = vunpack.c.l.b16 %v94
  %v289 = vunpack.c.l.b16 %v95
  %v290 = vunpack.c.l.b16 %v96
  %v291 = vunpack.c.l.b16 %v97
  %v292 = vunpack.c.l.b16 %v98
  %v293 = vunpack.c.l.b16 %v99
  %v294 = vunpack.c.l.b16 %v100
  %v295 = vunpack.c.l.b16 %v101
  %v296 = vunpack.c.l.b16 %v102
  %v297 = vunpack.c.l.b16 %v103
  %v298 = vunpack.c.l.b16 %v104
  %v299 = vunpack.c.l.b16 %v105
  %v300 = vunpack.c.l.b16 %v106
  %v301 = vunpack.c.l.b16 %v107
  %v302 = vpack.c.b16 %v231, %v230
  %v303 = vpack.c.b16 %v233, %v232
  %v304 = vpack.c.b16 %v235, %v234
  %v305 = vpack.c.b16 %v237, %v236
  %v306 = vpack.c.b16 %v239, %v238
  %v307 = vpack.c.b16 %v241, %v240
  %v308 = vpack.c.b16 %v243, %v242
  %v309 = vpack.c.b16 %v245, %v244
  %v310 = vpack.c.b16 %v247, %v246
  %v311 = vpack.c.b16 %v249, %v248
  %v312 = vpack.c.b16 %v251, %v250
  %v313 = vpack.c.b16 %v253, %v252
  %v314 = vpack.c.b16 %v255, %v254
  %v315 = vpack.c.b16 %v257, %v256
  %v316 = vpack.c.b16 %v259, %v258
  %v317 = vpack.c.b16 %v261, %v260
  %v318 = vpack.c.b16 %v263, %v262
  %v319 = vpack.c.b16 %v265, %v264
  %v320 = vpack.c.b16 %v267, %v266
  %v321 = vpack.c.b16 %v269, %v268
  %v322 = vpack.c.b16 %v271, %v270
  %v323 = vpack.c.b16 %v273, %v272
  %v324 = vpack.c.b16 %v275, %v274
  %v325 = vpack.c.b16 %v277, %v276
  %v326 = vpack.c.b16 %v279, %v278
  %v327 = vpack.c.b16 %v281, %v280
  %v328 = vpack.c.b16 %v283, %v282
  %v329 = vpack.c.b16 %v285, %v284
  %v330 = vpack.c.b16 %v287, %v286
  %v331 = vpack.c.b16 %v289, %v288
  %v332 = vpack.c.b16 %v291, %v290
  %v333 = vpack.c.b16 %v293, %v292
  %v334 = vpack.c.b16 %v295, %v294
  %v335 = vpack.c.b16 %v297, %v296
  %v336 = vpack.c.b16 %v299, %v298
  %v337 = vpack.c.b16 %v301, %v300
  %vm374 = vcmask 523264
  %v376 = vsel %vm374, %v144, 0
  %v379 = vsel %vm374, %v149, 0
  %381 = vmatprep.subr.bf16.mxu0 0
  %382 = vmatpush1.bf16.msra.mxu0 %v302
  %383 = vmatprep.subr.bf16.mxu0 0
  %384 = vmatpush1.bf16.msra.mxu0 %v303
  %385 = vmatprep.subr.bf16.mxu0 0
  %386 = vmatpush1.bf16.msra.mxu0 %v304
  %387 = vmatprep.subr.bf16.mxu0 0
  %388 = vmatpush1.bf16.msra.mxu0 %v305
  %389 = vmatprep.subr.bf16.mxu0 0
  %390 = vmatpush1.bf16.msra.mxu0 %v306
  %391 = vmatprep.subr.bf16.mxu0 0
  %392 = vmatpush1.bf16.msra.mxu0 %v307
  %393 = vmatprep.subr.bf16.mxu0 0
  %394 = vmatpush1.bf16.msra.mxu0 %v308
  %395 = vmatprep.subr.bf16.mxu0 0
  %396 = vmatpush1.bf16.msra.mxu0 %v309
  %397 = vmatprep.subr.bf16.mxu0 0
  %398 = vmatpush1.bf16.msra.mxu0 %v310
  %399 = vmatprep.subr.bf16.mxu0 0
  %400 = vmatpush1.bf16.msra.mxu0 %v311
  %401 = vmatprep.subr.bf16.mxu0 0
  %402 = vmatpush1.bf16.msra.mxu0 %v312
  %403 = vmatprep.subr.bf16.mxu0 0
  %404 = vmatpush1.bf16.msra.mxu0 %v313
  %405 = vmatprep.subr.bf16.mxu0 0
  %406 = vmatpush1.bf16.msra.mxu0 %v314
  %407 = vmatprep.subr.bf16.mxu0 0
  %408 = vmatpush1.bf16.msra.mxu0 %v315
  %409 = vmatprep.subr.bf16.mxu0 0
  %410 = vmatpush1.bf16.msra.mxu0 %v316
  %411 = vmatprep.subr.bf16.mxu0 0
  %412 = vmatpush1.bf16.msra.mxu0 %v317
  %413 = vmatprep.mubr.bf16.mxu0 %v141
  %414 = vmatmul.mubr.bf16.gmra.mrb[0].mxu0 %v140
  %v415 = vpop.f32.mrb[0].mxu0
  %v416 = vadd.f32 0.0, %v415
  %v417 = vpop.f32.mrb[0].mxu0
  %v418 = vpop.f32.mrb[0].mxu0
  %v419 = vadd.f32 0.0, %v418
  %v420 = vpop.f32.mrb[0].mxu0
  %421 = vmatprep.mubr.bf16.mxu0 %v146
  %422 = vmatmul.mubr.bf16.gmra.mrb[0].mxu0 %v145
  %v423 = vpop.f32.mrb[0].mxu0
  %v424 = vadd.f32 0.0, %v423
  %v425 = vpop.f32.mrb[0].mxu0
  %v426 = vpop.f32.mrb[0].mxu0
  %v427 = vadd.f32 0.0, %v426
  %v428 = vpop.f32.mrb[0].mxu0
  %429 = vdwg.mxu0
  %430 = vmatprep.subr.bf16.mxu0 0
  %431 = vmatpush1.bf16.msra.mxu0 %v318
  %432 = vmatprep.subr.bf16.mxu0 0
  %433 = vmatpush1.bf16.msra.mxu0 %v319
  %434 = vmatprep.subr.bf16.mxu0 0
  %435 = vmatpush1.bf16.msra.mxu0 %v320
  %436 = vmatprep.subr.bf16.mxu0 0
  %437 = vmatpush1.bf16.msra.mxu0 %v321
  %438 = vmatprep.subr.bf16.mxu0 0
  %439 = vmatpush1.bf16.msra.mxu0 %v322
  %440 = vmatprep.subr.bf16.mxu0 0
  %441 = vmatpush1.bf16.msra.mxu0 %v323
  %442 = vmatprep.subr.bf16.mxu0 0
  %443 = vmatpush1.bf16.msra.mxu0 %v324
  %444 = vmatprep.subr.bf16.mxu0 0
  %445 = vmatpush1.bf16.msra.mxu0 %v325
  %446 = vmatprep.subr.bf16.mxu0 0
  %447 = vmatpush1.bf16.msra.mxu0 %v326
  %448 = vmatprep.subr.bf16.mxu0 0
  %449 = vmatpush1.bf16.msra.mxu0 %v327
  %450 = vmatprep.subr.bf16.mxu0 0
  %451 = vmatpush1.bf16.msra.mxu0 %v328
  %452 = vmatprep.subr.bf16.mxu0 0
  %453 = vmatpush1.bf16.msra.mxu0 %v329
  %454 = vmatprep.subr.bf16.mxu0 0
  %455 = vmatpush1.bf16.msra.mxu0 %v330
  %456 = vmatprep.subr.bf16.mxu0 0
  %457 = vmatpush1.bf16.msra.mxu0 %v331
  %458 = vmatprep.subr.bf16.mxu0 0
  %459 = vmatpush1.bf16.msra.mxu0 %v332
  %460 = vmatprep.subr.bf16.mxu0 0
  %461 = vmatpush1.bf16.msra.mxu0 %v333
  %462 = vmatprep.mubr.bf16.mxu0 %v143
  %463 = vmatmul.mubr.bf16.gmra.mrb[0].mxu0 %v142
  %v464 = vpop.f32.mrb[0].mxu0
  %v465 = vadd.f32 %v416, %v464
  %v466 = vpop.f32.mrb[0].mxu0
  %v467 = vpop.f32.mrb[0].mxu0
  %v468 = vadd.f32 %v419, %v467
  %v469 = vpop.f32.mrb[0].mxu0
  %470 = vmatprep.mubr.bf16.mxu0 %v148
  %471 = vmatmul.mubr.bf16.gmra.mrb[0].mxu0 %v147
  %v472 = vpop.f32.mrb[0].mxu0
  %v473 = vadd.f32 %v424, %v472
  %v474 = vpop.f32.mrb[0].mxu0
  %v475 = vpop.f32.mrb[0].mxu0
  %v476 = vadd.f32 %v427, %v475
  %v477 = vpop.f32.mrb[0].mxu0
  %478 = vdwg.mxu0
  %479 = vmatprep.subr.bf16.mxu0 0
  %480 = vmatpush1.bf16.msra.mxu0 %v334
  %481 = vmatprep.subr.bf16.mxu0 0
  %482 = vmatpush1.bf16.msra.mxu0 %v335
  %483 = vmatprep.subr.bf16.mxu0 0
  %484 = vmatpush1.bf16.msra.mxu0 %v336
  %485 = vmatprep.subr.bf16.mxu0 0
  %486 = vmatpush1.bf16.msra.mxu0 %v337
  %487 = vmatprep.subr.bf16.mxu0 0
  %488 = vmatpush1.bf16.msra.mxu0 0
  %489 = vmatprep.subr.bf16.mxu0 0
  %490 = vmatpush1.bf16.msra.mxu0 0
  %491 = vmatprep.subr.bf16.mxu0 0
  %492 = vmatpush1.bf16.msra.mxu0 0
  %493 = vmatprep.subr.bf16.mxu0 0
  %494 = vmatpush1.bf16.msra.mxu0 0
  %495 = vmatprep.subr.bf16.mxu0 0
  %496 = vmatpush1.bf16.msra.mxu0 0
  %497 = vmatprep.subr.bf16.mxu0 0
  %498 = vmatpush1.bf16.msra.mxu0 0
  %499 = vmatprep.subr.bf16.mxu0 0
  %500 = vmatpush1.bf16.msra.mxu0 0
  %501 = vmatprep.subr.bf16.mxu0 0
  %502 = vmatpush1.bf16.msra.mxu0 0
  %503 = vmatprep.subr.bf16.mxu0 0
  %504 = vmatpush1.bf16.msra.mxu0 0
  %505 = vmatprep.subr.bf16.mxu0 0
  %506 = vmatpush1.bf16.msra.mxu0 0
  %507 = vmatprep.subr.bf16.mxu0 0
  %508 = vmatpush1.bf16.msra.mxu0 0
  %509 = vmatprep.subr.bf16.mxu0 0
  %510 = vmatpush1.bf16.msra.mxu0 0
  %511 = vmatprep.mubr.bf16.mxu0 0
  %512 = vmatmul.mubr.bf16.gmra.mrb[0].mxu0 %v376
  %v513 = vpop.f32.mrb[0].mxu0
  %v514 = vadd.f32 %v465, %v513
  %v515 = vpop.f32.mrb[0].mxu0
  %v516 = vpop.f32.mrb[0].mxu0
  %v517 = vadd.f32 %v468, %v516
  %v518 = vpop.f32.mrb[0].mxu0
  %519 = vmatprep.mubr.bf16.mxu0 0
  %520 = vmatmul.mubr.bf16.gmra.mrb[0].mxu0 %v379
  %v521 = vpop.f32.mrb[0].mxu0
  %v522 = vadd.f32 %v473, %v521
  %v523 = vpop.f32.mrb[0].mxu0
  %v524 = vpop.f32.mrb[0].mxu0
  %v525 = vadd.f32 %v476, %v524
  %v526 = vpop.f32.mrb[0].mxu0
  %527 = vdwg.mxu0
  %v528 = vld [vmem:[%s2] sm:$0xff]
  %v529 = vld [vmem:[%s2 + $0x8] sm:$0xff]
  %v530 = vld [vmem:[%s2 + $0x10] sm:$0xff]
  %v531 = vld [vmem:[%s2 + $0x18] sm:$0xff]
  %v532 = vld [vmem:[%s2 + $0x20] sm:$0xff]
  %v533 = vld [vmem:[%s2 + $0x28] sm:$0xff]
  %v534 = vld [vmem:[%s2 + $0x30] sm:$0xff]
  %v535 = vld [vmem:[%s2 + $0x38] sm:$0xff]
  %v536 = vld [vmem:[%s2 + $0x40] sm:$0xff]
  %v537 = vld [vmem:[%s2 + $0x48] sm:$0xff]
  %v538 = vld [vmem:[%s2 + $0x50] sm:$0xff]
  %v539 = vld [vmem:[%s2 + $0x58] sm:$0xff]
  %v540 = vld [vmem:[%s2 + $0x60] sm:$0xff]
  %v541 = vld [vmem:[%s2 + $0x68] sm:$0xff]
  %v542 = vld [vmem:[%s2 + $0x70] sm:$0xff]
  %v543 = vld [vmem:[%s2 + $0x78] sm:$0xff]
  %v544 = vld [vmem:[%s3] sm:$0xff]
  %v545 = vld [vmem:[%s3 + $0x8] sm:$0xff]
  %v546 = vld [vmem:[%s3 + $0x10] sm:$0xff]
  %v547 = vld [vmem:[%s3 + $0x18] sm:$0xff]
  %v548 = vadd.f32 %v514, %v517
  %v549 = vadd.f32 %v548, %v522
  %v550 = vadd.f32 %v549, %v525
  %v551 = vrot.slane %v550, 4
  %v552 = vadd.f32 %v550, %v551
  %v553 = vrot.slane %v552, 2
  %v554 = vadd.f32 %v552, %v553
  %v555 = vrot.slane %v554, 1
  %v556 = vadd.f32 %v554, %v555
  %v557 = vrcp.pop 32.0
  %v558 = vmul.f32 %v556, %v557
  %559 = vmatprep.subr.mxu0 0.0
  %560 = vmatpush1.msra.mxu0 %v528
  %561 = vmatprep.subr.mxu0 0.0
  %562 = vmatpush1.msra.mxu0 %v529
  %563 = vmatprep.subr.mxu0 0.0
  %564 = vmatpush1.msra.mxu0 %v530
  %565 = vmatprep.subr.mxu0 0.0
  %566 = vmatpush1.msra.mxu0 %v531
  %567 = vmatprep.subr.mxu0 0.0
  %568 = vmatpush1.msra.mxu0 %v532
  %569 = vmatprep.subr.mxu0 0.0
  %570 = vmatpush1.msra.mxu0 %v533
  %571 = vmatprep.subr.mxu0 0.0
  %572 = vmatpush1.msra.mxu0 %v534
  %573 = vmatprep.subr.mxu0 0.0
  %574 = vmatpush1.msra.mxu0 %v535
  %575 = vmatprep.subr.mxu0 0.0
  %576 = vmatpush1.msra.mxu0 %v536
  %577 = vmatprep.subr.mxu0 0.0
  %578 = vmatpush1.msra.mxu0 %v537
  %579 = vmatprep.subr.mxu0 0.0
  %580 = vmatpush1.msra.mxu0 %v538
  %581 = vmatprep.subr.mxu0 0.0
  %582 = vmatpush1.msra.mxu0 %v539
  %583 = vmatprep.subr.mxu0 0.0
  %584 = vmatpush1.msra.mxu0 %v540
  %585 = vmatprep.subr.mxu0 0.0
  %586 = vmatpush1.msra.mxu0 %v541
  %587 = vmatprep.subr.mxu0 0.0
  %588 = vmatpush1.msra.mxu0 %v542
  %589 = vmatprep.subr.mxu0 0.0
  %590 = vmatpush1.msra.mxu0 %v543
  %591 = vmatprep.subr.mxu0 0.0
  %592 = vmatpush1.msra.mxu0 0.0
  %593 = vmatprep.subr.mxu0 0.0
  %594 = vmatpush1.msra.mxu0 0.0
  %595 = vmatprep.subr.mxu0 0.0
  %596 = vmatpush1.msra.mxu0 0.0
  %597 = vmatprep.subr.mxu0 0.0
  %598 = vmatpush1.msra.mxu0 0.0
  %599 = vmatprep.subr.mxu0 0.0
  %600 = vmatpush1.msra.mxu0 0.0
  %601 = vmatprep.subr.mxu0 0.0
  %602 = vmatpush1.msra.mxu0 0.0
  %603 = vmatprep.subr.mxu0 0.0
  %604 = vmatpush1.msra.mxu0 0.0
  %605 = vmatprep.subr.mxu0 0.0
  %606 = vmatpush1.msra.mxu0 0.0
  %607 = vmatprep.subr.mxu0 0.0
  %608 = vmatpush1.msra.mxu0 0.0
  %609 = vmatprep.subr.mxu0 0.0
  %610 = vmatpush1.msra.mxu0 0.0
  %611 = vmatprep.subr.mxu0 0.0
  %612 = vmatpush1.msra.mxu0 0.0
  %613 = vmatprep.subr.mxu0 0.0
  %614 = vmatpush1.msra.mxu0 0.0
  %615 = vmatprep.subr.mxu0 0.0
  %616 = vmatpush1.msra.mxu0 0.0
  %617 = vmatprep.subr.mxu0 0.0
  %618 = vmatpush1.msra.mxu0 0.0
  %619 = vmatprep.subr.mxu0 0.0
  %620 = vmatpush1.msra.mxu0 0.0
  %621 = vmatprep.subr.mxu0 0.0
  %622 = vmatpush1.msra.mxu0 0.0
  %623 = vmatprep.mubr.f32.mxu0 0.0
  %624 = vmatmul.mubr.f32.gmra.mrb[0].mxu0 %v558
  %v625 = vpop.f32.mrb[0].mxu0
  %v626 = vadd.f32 0.0, %v625
  %v627 = vpop.f32.mrb[0].mxu0
  %628 = vdwg.mxu0
  %vm629 = vcmask 261120
  %v631 = vsel %vm629, %v626, 0
  %633 = vmatprep.subr.mxu0 0.0
  %634 = vmatpush1.msra.mxu0 %v544
  %635 = vmatprep.subr.mxu0 0.0
  %636 = vmatpush1.msra.mxu0 %v545
  %637 = vmatprep.subr.mxu0 0.0
  %638 = vmatpush1.msra.mxu0 %v546
  %639 = vmatprep.subr.mxu0 0.0
  %640 = vmatpush1.msra.mxu0 %v547
  %641 = vmatprep.subr.mxu0 0.0
  %642 = vmatpush1.msra.mxu0 0.0
  %643 = vmatprep.subr.mxu0 0.0
  %644 = vmatpush1.msra.mxu0 0.0
  %645 = vmatprep.subr.mxu0 0.0
  %646 = vmatpush1.msra.mxu0 0.0
  %647 = vmatprep.subr.mxu0 0.0
  %648 = vmatpush1.msra.mxu0 0.0
  %649 = vmatprep.subr.mxu0 0.0
  %650 = vmatpush1.msra.mxu0 0.0
  %651 = vmatprep.subr.mxu0 0.0
  %652 = vmatpush1.msra.mxu0 0.0
  %653 = vmatprep.subr.mxu0 0.0
  %654 = vmatpush1.msra.mxu0 0.0
  %655 = vmatprep.subr.mxu0 0.0
  %656 = vmatpush1.msra.mxu0 0.0
  %657 = vmatprep.subr.mxu0 0.0
  %658 = vmatpush1.msra.mxu0 0.0
  %659 = vmatprep.subr.mxu0 0.0
  %660 = vmatpush1.msra.mxu0 0.0
  %661 = vmatprep.subr.mxu0 0.0
  %662 = vmatpush1.msra.mxu0 0.0
  %663 = vmatprep.subr.mxu0 0.0
  %664 = vmatpush1.msra.mxu0 0.0
  %665 = vmatprep.subr.mxu0 0.0
  %666 = vmatpush1.msra.mxu0 0.0
  %667 = vmatprep.subr.mxu0 0.0
  %668 = vmatpush1.msra.mxu0 0.0
  %669 = vmatprep.subr.mxu0 0.0
  %670 = vmatpush1.msra.mxu0 0.0
  %671 = vmatprep.subr.mxu0 0.0
  %672 = vmatpush1.msra.mxu0 0.0
  %673 = vmatprep.subr.mxu0 0.0
  %674 = vmatpush1.msra.mxu0 0.0
  %675 = vmatprep.subr.mxu0 0.0
  %676 = vmatpush1.msra.mxu0 0.0
  %677 = vmatprep.subr.mxu0 0.0
  %678 = vmatpush1.msra.mxu0 0.0
  %679 = vmatprep.subr.mxu0 0.0
  %680 = vmatpush1.msra.mxu0 0.0
  %681 = vmatprep.subr.mxu0 0.0
  %682 = vmatpush1.msra.mxu0 0.0
  %683 = vmatprep.subr.mxu0 0.0
  %684 = vmatpush1.msra.mxu0 0.0
  %685 = vmatprep.subr.mxu0 0.0
  %686 = vmatpush1.msra.mxu0 0.0
  %687 = vmatprep.subr.mxu0 0.0
  %688 = vmatpush1.msra.mxu0 0.0
  %689 = vmatprep.subr.mxu0 0.0
  %690 = vmatpush1.msra.mxu0 0.0
  %691 = vmatprep.subr.mxu0 0.0
  %692 = vmatpush1.msra.mxu0 0.0
  %693 = vmatprep.subr.mxu0 0.0
  %694 = vmatpush1.msra.mxu0 0.0
  %695 = vmatprep.subr.mxu0 0.0
  %696 = vmatpush1.msra.mxu0 0.0
  %697 = vmatprep.mubr.f32.mxu0 0.0
  %698 = vmatmul.mubr.f32.gmra.mrb[0].mxu0 %v631
  %v699 = vpop.f32.mrb[0].mxu0
  %v700 = vadd.f32 0.0, %v699
  %v701 = vpop.f32.mrb[0].mxu0
  %702 = vdwg.mxu0
  %v703 = vlaneseq
  %v704 = vshrl.u32 %v703, 7
  %v705 = vsub.s32 0, %v704
  %v706 = vrot.slane %v700, %v705
  %v707 = vsub.f32 %v514, %v706
  %v708 = vsub.f32 %v517, %v706
  %v709 = vsub.f32 %v522, %v706
  %v710 = vsub.f32 %v525, %v706
  %v711 = vmul.f32 %v707, %v707
  %v712 = vmul.f32 %v708, %v708
  %v713 = vmul.f32 %v709, %v709
  %v714 = vmul.f32 %v710, %v710
  %v715 = vadd.f32 %v711, %v712
  %v716 = vadd.f32 %v715, %v713
  %v717 = vadd.f32 %v716, %v714
  %v718 = vrot.slane %v717, 4
  %v719 = vadd.f32 %v717, %v718
  %v720 = vrot.slane %v719, 2
  %v721 = vadd.f32 %v719, %v720
  %v722 = vrot.slane %v721, 1
  %v723 = vadd.f32 %v721, %v722
  %v724 = vmul.f32 %v723, %v557
  %v725 = vld [vmem:[%s4] sm:$0x1]
  %726 = vmatprep.subr.mxu0 0.0
  %727 = vmatpush1.msra.mxu0 %v528
  %728 = vmatprep.subr.mxu0 0.0
  %729 = vmatpush1.msra.mxu0 %v529
  %730 = vmatprep.subr.mxu0 0.0
  %731 = vmatpush1.msra.mxu0 %v530
  %732 = vmatprep.subr.mxu0 0.0
  %733 = vmatpush1.msra.mxu0 %v531
  %734 = vmatprep.subr.mxu0 0.0
  %735 = vmatpush1.msra.mxu0 %v532
  %736 = vmatprep.subr.mxu0 0.0
  %737 = vmatpush1.msra.mxu0 %v533
  %738 = vmatprep.subr.mxu0 0.0
  %739 = vmatpush1.msra.mxu0 %v534
  %740 = vmatprep.subr.mxu0 0.0
  %741 = vmatpush1.msra.mxu0 %v535
  %742 = vmatprep.subr.mxu0 0.0
  %743 = vmatpush1.msra.mxu0 %v536
  %744 = vmatprep.subr.mxu0 0.0
  %745 = vmatpush1.msra.mxu0 %v537
  %746 = vmatprep.subr.mxu0 0.0
  %747 = vmatpush1.msra.mxu0 %v538
  %748 = vmatprep.subr.mxu0 0.0
  %749 = vmatpush1.msra.mxu0 %v539
  %750 = vmatprep.subr.mxu0 0.0
  %751 = vmatpush1.msra.mxu0 %v540
  %752 = vmatprep.subr.mxu0 0.0
  %753 = vmatpush1.msra.mxu0 %v541
  %754 = vmatprep.subr.mxu0 0.0
  %755 = vmatpush1.msra.mxu0 %v542
  %756 = vmatprep.subr.mxu0 0.0
  %757 = vmatpush1.msra.mxu0 %v543
  %758 = vmatprep.subr.mxu0 0.0
  %759 = vmatpush1.msra.mxu0 0.0
  %760 = vmatprep.subr.mxu0 0.0
  %761 = vmatpush1.msra.mxu0 0.0
  %762 = vmatprep.subr.mxu0 0.0
  %763 = vmatpush1.msra.mxu0 0.0
  %764 = vmatprep.subr.mxu0 0.0
  %765 = vmatpush1.msra.mxu0 0.0
  %766 = vmatprep.subr.mxu0 0.0
  %767 = vmatpush1.msra.mxu0 0.0
  %768 = vmatprep.subr.mxu0 0.0
  %769 = vmatpush1.msra.mxu0 0.0
  %770 = vmatprep.subr.mxu0 0.0
  %771 = vmatpush1.msra.mxu0 0.0
  %772 = vmatprep.subr.mxu0 0.0
  %773 = vmatpush1.msra.mxu0 0.0
  %774 = vmatprep.subr.mxu0 0.0
  %775 = vmatpush1.msra.mxu0 0.0
  %776 = vmatprep.subr.mxu0 0.0
  %777 = vmatpush1.msra.mxu0 0.0
  %778 = vmatprep.subr.mxu0 0.0
  %779 = vmatpush1.msra.mxu0 0.0
  %780 = vmatprep.subr.mxu0 0.0
  %781 = vmatpush1.msra.mxu0 0.0
  %782 = vmatprep.subr.mxu0 0.0
  %783 = vmatpush1.msra.mxu0 0.0
  %784 = vmatprep.subr.mxu0 0.0
  %785 = vmatpush1.msra.mxu0 0.0
  %786 = vmatprep.subr.mxu0 0.0
  %787 = vmatpush1.msra.mxu0 0.0
  %788 = vmatprep.subr.mxu0 0.0
  %789 = vmatpush1.msra.mxu0 0.0
  %790 = vmatprep.mubr.f32.mxu0 0.0
  %791 = vmatmul.mubr.f32.gmra.mrb[0].mxu0 %v724
  %v792 = vpop.f32.mrb[0].mxu0
  %v793 = vadd.f32 1e-05, %v792
  %v794 = vpop.f32.mrb[0].mxu0
  %795 = vdwg.mxu0
  %v796 = vrsqrt.pop %v793
  %v797 = vmul.f32 %v725, %v796
  %v799 = vsel %vm629, %v797, 0
  %801 = vmatprep.subr.mxu0 0.0
  %802 = vmatpush1.msra.mxu0 %v544
  %803 = vmatprep.subr.mxu0 0.0
  %804 = vmatpush1.msra.mxu0 %v545
  %805 = vmatprep.subr.mxu0 0.0
  %806 = vmatpush1.msra.mxu0 %v546
  %807 = vmatprep.subr.mxu0 0.0
  %808 = vmatpush1.msra.mxu0 %v547
  %809 = vmatprep.subr.mxu0 0.0
  %810 = vmatpush1.msra.mxu0 0.0
  %811 = vmatprep.subr.mxu0 0.0
  %812 = vmatpush1.msra.mxu0 0.0
  %813 = vmatprep.subr.mxu0 0.0
  %814 = vmatpush1.msra.mxu0 0.0
  %815 = vmatprep.subr.mxu0 0.0
  %816 = vmatpush1.msra.mxu0 0.0
  %817 = vmatprep.subr.mxu0 0.0
  %818 = vmatpush1.msra.mxu0 0.0
  %819 = vmatprep.subr.mxu0 0.0
  %820 = vmatpush1.msra.mxu0 0.0
  %821 = vmatprep.subr.mxu0 0.0
  %822 = vmatpush1.msra.mxu0 0.0
  %823 = vmatprep.subr.mxu0 0.0
  %824 = vmatpush1.msra.mxu0 0.0
  %825 = vmatprep.subr.mxu0 0.0
  %826 = vmatpush1.msra.mxu0 0.0
  %827 = vmatprep.subr.mxu0 0.0
  %828 = vmatpush1.msra.mxu0 0.0
  %829 = vmatprep.subr.mxu0 0.0
  %830 = vmatpush1.msra.mxu0 0.0
  %831 = vmatprep.subr.mxu0 0.0
  %832 = vmatpush1.msra.mxu0 0.0
  %833 = vmatprep.subr.mxu0 0.0
  %834 = vmatpush1.msra.mxu0 0.0
  %835 = vmatprep.subr.mxu0 0.0
  %836 = vmatpush1.msra.mxu0 0.0
  %837 = vmatprep.subr.mxu0 0.0
  %838 = vmatpush1.msra.mxu0 0.0
  %839 = vmatprep.subr.mxu0 0.0
  %840 = vmatpush1.msra.mxu0 0.0
  %841 = vmatprep.subr.mxu0 0.0
  %842 = vmatpush1.msra.mxu0 0.0
  %843 = vmatprep.subr.mxu0 0.0
  %844 = vmatpush1.msra.mxu0 0.0
  %845 = vmatprep.subr.mxu0 0.0
  %846 = vmatpush1.msra.mxu0 0.0
  %847 = vmatprep.subr.mxu0 0.0
  %848 = vmatpush1.msra.mxu0 0.0
  %849 = vmatprep.subr.mxu0 0.0
  %850 = vmatpush1.msra.mxu0 0.0
  %851 = vmatprep.subr.mxu0 0.0
  %852 = vmatpush1.msra.mxu0 0.0
  %853 = vmatprep.subr.mxu0 0.0
  %854 = vmatpush1.msra.mxu0 0.0
  %855 = vmatprep.subr.mxu0 0.0
  %856 = vmatpush1.msra.mxu0 0.0
  %857 = vmatprep.subr.mxu0 0.0
  %858 = vmatpush1.msra.mxu0 0.0
  %859 = vmatprep.subr.mxu0 0.0
  %860 = vmatpush1.msra.mxu0 0.0
  %861 = vmatprep.subr.mxu0 0.0
  %862 = vmatpush1.msra.mxu0 0.0
  %863 = vmatprep.subr.mxu0 0.0
  %864 = vmatpush1.msra.mxu0 0.0
  %865 = vmatprep.mubr.f32.mxu0 0.0
  %866 = vmatmul.mubr.f32.gmra.mrb[0].mxu0 %v799
  %v867 = vpop.f32.mrb[0].mxu0
  %v868 = vadd.f32 0.0, %v867
  %v869 = vpop.f32.mrb[0].mxu0
  %870 = vdwg.mxu0
  %v871 = vld [vmem:[%s5] sm:$0x1]
  %v873 = vsel %vm629, %v871, 0
  %875 = vmatprep.subr.mxu0 0.0
  %876 = vmatpush1.msra.mxu0 %v544
  %877 = vmatprep.subr.mxu0 0.0
  %878 = vmatpush1.msra.mxu0 %v545
  %879 = vmatprep.subr.mxu0 0.0
  %880 = vmatpush1.msra.mxu0 %v546
  %881 = vmatprep.subr.mxu0 0.0
  %882 = vmatpush1.msra.mxu0 %v547
  %883 = vmatprep.subr.mxu0 0.0
  %884 = vmatpush1.msra.mxu0 0.0
  %885 = vmatprep.subr.mxu0 0.0
  %886 = vmatpush1.msra.mxu0 0.0
  %887 = vmatprep.subr.mxu0 0.0
  %888 = vmatpush1.msra.mxu0 0.0
  %889 = vmatprep.subr.mxu0 0.0
  %890 = vmatpush1.msra.mxu0 0.0
  %891 = vmatprep.subr.mxu0 0.0
  %892 = vmatpush1.msra.mxu0 0.0
  %893 = vmatprep.subr.mxu0 0.0
  %894 = vmatpush1.msra.mxu0 0.0
  %895 = vmatprep.subr.mxu0 0.0
  %896 = vmatpush1.msra.mxu0 0.0
  %897 = vmatprep.subr.mxu0 0.0
  %898 = vmatpush1.msra.mxu0 0.0
  %899 = vmatprep.subr.mxu0 0.0
  %900 = vmatpush1.msra.mxu0 0.0
  %901 = vmatprep.subr.mxu0 0.0
  %902 = vmatpush1.msra.mxu0 0.0
  %903 = vmatprep.subr.mxu0 0.0
  %904 = vmatpush1.msra.mxu0 0.0
  %905 = vmatprep.subr.mxu0 0.0
  %906 = vmatpush1.msra.mxu0 0.0
  %907 = vmatprep.subr.mxu0 0.0
  %908 = vmatpush1.msra.mxu0 0.0
  %909 = vmatprep.subr.mxu0 0.0
  %910 = vmatpush1.msra.mxu0 0.0
  %911 = vmatprep.subr.mxu0 0.0
  %912 = vmatpush1.msra.mxu0 0.0
  %913 = vmatprep.subr.mxu0 0.0
  %914 = vmatpush1.msra.mxu0 0.0
  %915 = vmatprep.subr.mxu0 0.0
  %916 = vmatpush1.msra.mxu0 0.0
  %917 = vmatprep.subr.mxu0 0.0
  %918 = vmatpush1.msra.mxu0 0.0
  %919 = vmatprep.subr.mxu0 0.0
  %920 = vmatpush1.msra.mxu0 0.0
  %921 = vmatprep.subr.mxu0 0.0
  %922 = vmatpush1.msra.mxu0 0.0
  %923 = vmatprep.subr.mxu0 0.0
  %924 = vmatpush1.msra.mxu0 0.0
  %925 = vmatprep.subr.mxu0 0.0
  %926 = vmatpush1.msra.mxu0 0.0
  %927 = vmatprep.subr.mxu0 0.0
  %928 = vmatpush1.msra.mxu0 0.0
  %929 = vmatprep.subr.mxu0 0.0
  %930 = vmatpush1.msra.mxu0 0.0
  %931 = vmatprep.subr.mxu0 0.0
  %932 = vmatpush1.msra.mxu0 0.0
  %933 = vmatprep.subr.mxu0 0.0
  %934 = vmatpush1.msra.mxu0 0.0
  %935 = vmatprep.subr.mxu0 0.0
  %936 = vmatpush1.msra.mxu0 0.0
  %937 = vmatprep.subr.mxu0 0.0
  %938 = vmatpush1.msra.mxu0 0.0
  %939 = vmatprep.mubr.f32.mxu0 0.0
  %940 = vmatmul.mubr.f32.gmra.mrb[0].mxu0 %v873
  %v941 = vpop.f32.mrb[0].mxu0
  %v942 = vadd.f32 0.0, %v941
  %v943 = vpop.f32.mrb[0].mxu0
  %944 = vdwg.mxu0
  %v945 = vlaneseq
  %v946 = vshrl.u32 %v945, 7
  %v947 = vsub.s32 0, %v946
  %v948 = vrot.slane %v868, %v947
  %v949 = vmul.f32 %v707, %v948
  %v950 = vmul.f32 %v708, %v948
  %v951 = vmul.f32 %v709, %v948
  %v952 = vmul.f32 %v710, %v948
  %v953 = vlaneseq
  %v954 = vshrl.u32 %v953, 7
  %v955 = vsub.s32 0, %v954
  %v956 = vrot.slane %v942, %v955
  %v957 = vadd.f32 %v949, %v956
  %v958 = vadd.f32 %v950, %v956
  %v959 = vadd.f32 %v951, %v956
  %v960 = vadd.f32 %v952, %v956
  %v961 = vmax.f32 %v957, 0.0
  %v962 = vmax.f32 %v958, 0.0
  %v963 = vmax.f32 %v959, 0.0
  %v964 = vmax.f32 %v960, 0.0
  %965 = vst [vmem:[%s6] sm:$0xff] %v961
  %966 = vst [vmem:[%s6 + $0x8] sm:$0xff] %v962
  %967 = vst [vmem:[%s6 + $0x10] sm:$0xff] %v963
  %968 = vst [vmem:[%s6 + $0x18] sm:$0xff] %v964
  // Predicated region
  $region26: #{generator_forward.5} parent=0 // pred_check
    _
  $region27: #{generator_forward.5} parent=0 // pred_check_branch
    %970 = sbr.rel (0) target = $region29
  $region28: #{generator_forward.5} parent=0 // pred_region
    _
  $region29: #{generator_forward.5} parent=0 // pred_fallthru
    _
  // Predicated region
  $region30: #{generator_forward.5} parent=0 // pred_check
    _
  $region31: #{generator_forward.5} parent=0 // pred_check_branch
    %972 = sbr.rel (0) target = $region33
  $region32: #{generator_forward.5} parent=0 // pred_region
    _
  $region33: #{generator_forward.5} parent=0 // pred_fallthru
    _

// kernel: generator_forward.6
$region0: #{generator_forward.6}
  #allocation0 [shape = 'u32[]', space=smem, size = 0x4, offset = 0x4, fixed_abs, tag = 'smem constant byte address 0x4 - core index']
  #allocation1 [shape = 'u32[144,128]{1,0:T(1,128)}', space=vmem, size = 0x12000, scoped, tag = 'internal scratch']
  %s0 = inlined_call_operand.vmem [shape: bf16[128,288], index: 0, kind: input, shape index: {}]
  %s1 = inlined_call_operand.vmem [shape: bf16[288,64], index: 1, kind: input, shape index: {}]
  %s2 = inlined_call_operand.vmem [shape: f32[64,16], index: 2, kind: input, shape index: {}]
  %s3 = inlined_call_operand.vmem [shape: f32[16,64], index: 3, kind: input, shape index: {}]
  %s4 = inlined_call_operand.vmem [shape: f32[1,16], index: 4, kind: input, shape index: {}]
  %s5 = inlined_call_operand.vmem [shape: f32[1,16], index: 5, kind: input, shape index: {}]
  %s6 = inlined_call_operand.vmem [shape: f32[128,64], index: 6, kind: output, shape index: {}]
  %s7 = sld [smem:[#allocation0]]
  $region34: #{generator_forward.6} parent=0
    _
  %s9 = ssub.s32 1, %s7
  %s10 = scalar_select 0, %s9, %s7
  // Predicated region
  $region2: #{generator_forward.6} parent=0 // pred_check
    _
  $region3: #{generator_forward.6} parent=0 // pred_check_branch
    %12 = sbr.rel (0) target = $region5
  $region4: #{generator_forward.6} parent=0 // pred_region
    _
  $region5: #{generator_forward.6} parent=0 // pred_fallthru
    _
  // Predicated region
  $region6: #{generator_forward.6} parent=0 // pred_check
    _
  $region7: #{generator_forward.6} parent=0 // pred_check_branch
    %14 = sbr.rel (0) target = $region9
  $region8: #{generator_forward.6} parent=0 // pred_region
    _
  $region9: #{generator_forward.6} parent=0 // pred_fallthru
    _
  // Predicated region
  $region10: #{generator_forward.6} parent=0 // pred_check
    _
  $region11: #{generator_forward.6} parent=0 // pred_check_branch
    %16 = sbr.rel (0) target = $region13
  $region12: #{generator_forward.6} parent=0 // pred_region
    _
  $region13: #{generator_forward.6} parent=0 // pred_fallthru
    _
  // Predicated region
  $region14: #{generator_forward.6} parent=0 // pred_check
    _
  $region15: #{generator_forward.6} parent=0 // pred_check_branch
    %18 = sbr.rel (0) target = $region17
  $region16: #{generator_forward.6} parent=0 // pred_region
    _
  $region17: #{generator_forward.6} parent=0 // pred_fallthru
    _
  // Predicated region
  $region18: #{generator_forward.6} parent=0 // pred_check
    _
  $region19: #{generator_forward.6} parent=0 // pred_check_branch
    %20 = sbr.rel (0) target = $region21
  $region20: #{generator_forward.6} parent=0 // pred_region
    _
  $region21: #{generator_forward.6} parent=0 // pred_fallthru
    _
  // Predicated region
  $region22: #{generator_forward.6} parent=0 // pred_check
    _
  $region23: #{generator_forward.6} parent=0 // pred_check_branch
    %22 = sbr.rel (0) target = $region25
  $region24: #{generator_forward.6} parent=0 // pred_region
    _
  $region25: #{generator_forward.6} parent=0 // pred_fallthru
    _
  %v24 = vld [vmem:[%s0] sm:$0xff]
  %v25 = vld [vmem:[%s0 + $0x8] sm:$0xf]
  %v26 = vld [vmem:[%s0 + $0xc] sm:$0xff]
  %v27 = vld [vmem:[%s0 + $0x14] sm:$0xf]
  %v28 = vld [vmem:[%s0 + $0x18] sm:$0xff]
  %v29 = vld [vmem:[%s0 + $0x20] sm:$0xf]
  %v30 = vld [vmem:[%s0 + $0x24] sm:$0xff]
  %v31 = vld [vmem:[%s0 + $0x2c] sm:$0xf]
  %v32 = vld [vmem:[%s0 + $0x30] sm:$0xff]
  %v33 = vld [vmem:[%s0 + $0x38] sm:$0xf]
  %v34 = vld [vmem:[%s0 + $0x3c] sm:$0xff]
  %v35 = vld [vmem:[%s0 + $0x44] sm:$0xf]
  %v36 = vld [vmem:[%s0 + $0x48] sm:$0xff]
  %v37 = vld [vmem:[%s0 + $0x50] sm:$0xf]
  %v38 = vld [vmem:[%s0 + $0x54] sm:$0xff]
  %v39 = vld [vmem:[%s0 + $0x5c] sm:$0xf]
  %v40 = vld [vmem:[%s0 + $0x60] sm:$0xff]
  %v41 = vld [vmem:[%s0 + $0x68] sm:$0xf]
  %v42 = vld [vmem:[%s0 + $0x6c] sm:$0xff]
  %v43 = vld [vmem:[%s0 + $0x74] sm:$0xf]
  %v44 = vld [vmem:[%s0 + $0x78] sm:$0xff]
  %v45 = vld [vmem:[%s0 + $0x80] sm:$0xf]
  %v46 = vld [vmem:[%s0 + $0x84] sm:$0xff]
  %v47 = vld [vmem:[%s0 + $0x8c] sm:$0xf]
  %v48 = vld [vmem:[%s0 + $0x90] sm:$0xff]
  %v49 = vld [vmem:[%s0 + $0x98] sm:$0xf]
  %v50 = vld [vmem:[%s0 + $0x9c] sm:$0xff]
  %v51 = vld [vmem:[%s0 + $0xa4] sm:$0xf]
  %v52 = vld [vmem:[%s0 + $0xa8] sm:$0xff]
  %v53 = vld [vmem:[%s0 + $0xb0] sm:$0xf]
  %v54 = vld [vmem:[%s0 + $0xb4] sm:$0xff]
  %v55 = vld [vmem:[%s0 + $0xbc] sm:$0xf]
  %v56 = vld [vmem:[%s1] sm:$0xf]
  %v57 = vld [vmem:[%s1 + $0x4] sm:$0xf]
  %v58 = vld [vmem:[%s1 + $0x8] sm:$0xf]
  %v59 = vld [vmem:[%s1 + $0xc] sm:$0xf]
  %v60 = vld [vmem:[%s1 + $0x10] sm:$0xf]
  %v61 = vld [vmem:[%s1 + $0x14] sm:$0xf]
  %v62 = vld [vmem:[%s1 + $0x18] sm:$0xf]
  %v63 = vld [vmem:[%s1 + $0x1c] sm:$0xf]
  %v64 = vld [vmem:[%s1 + $0x20] sm:$0xf]
  %v65 = vld [vmem:[%s1 + $0x24] sm:$0xf]
  %v66 = vld [vmem:[%s1 + $0x28] sm:$0xf]
  %v67 = vld [vmem:[%s1 + $0x2c] sm:$0xf]
  %v68 = vld [vmem:[%s1 + $0x30] sm:$0xf]
  %v69 = vld [vmem:[%s1 + $0x34] sm:$0xf]
  %v70 = vld [vmem:[%s1 + $0x38] sm:$0xf]
  %v71 = vld [vmem:[%s1 + $0x3c] sm:$0xf]
  %v72 = vld [vmem:[%s1 + $0x40] sm:$0xf]
  %v73 = vld [vmem:[%s1 + $0x44] sm:$0xf]
  %v74 = vld [vmem:[%s1 + $0x48] sm:$0xf]
  %v75 = vld [vmem:[%s1 + $0x4c] sm:$0xf]
  %v76 = vld [vmem:[%s1 + $0x50] sm:$0xf]
  %v77 = vld [vmem:[%s1 + $0x54] sm:$0xf]
  %v78 = vld [vmem:[%s1 + $0x58] sm:$0xf]
  %v79 = vld [vmem:[%s1 + $0x5c] sm:$0xf]
  %v80 = vld [vmem:[%s1 + $0x60] sm:$0xf]
  %v81 = vld [vmem:[%s1 + $0x64] sm:$0xf]
  %v82 = vld [vmem:[%s1 + $0x68] sm:$0xf]
  %v83 = vld [vmem:[%s1 + $0x6c] sm:$0xf]
  %v84 = vld [vmem:[%s1 + $0x70] sm:$0xf]
  %v85 = vld [vmem:[%s1 + $0x74] sm:$0xf]
  %v86 = vld [vmem:[%s1 + $0x78] sm:$0xf]
  %v87 = vld [vmem:[%s1 + $0x7c] sm:$0xf]
  %v88 = vld [vmem:[%s1 + $0x80] sm:$0xf]
  %v89 = vld [vmem:[%s1 + $0x84] sm:$0xf]
  %v90 = vld [vmem:[%s1 + $0x88] sm:$0xf]
  %v91 = vld [vmem:[%s1 + $0x8c] sm:$0xf]
  %v124 = vunpack.c.l.b16 %v24
  %v125 = vunpack.c.h.b16 %v24
  %v126 = vunpack.c.l.b16 %v25
  %v127 = vunpack.c.l.b16 %v26
  %v128 = vunpack.c.h.b16 %v26
  %v129 = vunpack.c.l.b16 %v27
  %v130 = vunpack.c.l.b16 %v28
  %v131 = vunpack.c.h.b16 %v28
  %v132 = vunpack.c.l.b16 %v29
  %v133 = vunpack.c.l.b16 %v30
  %v134 = vunpack.c.h.b16 %v30
  %v135 = vunpack.c.l.b16 %v31
  %v136 = vunpack.c.l.b16 %v32
  %v137 = vunpack.c.h.b16 %v32
  %v138 = vunpack.c.l.b16 %v33
  %v139 = vunpack.c.l.b16 %v34
  %v140 = vunpack.c.h.b16 %v34
  %v141 = vunpack.c.l.b16 %v35
  %v142 = vunpack.c.l.b16 %v36
  %v143 = vunpack.c.h.b16 %v36
  %v144 = vunpack.c.l.b16 %v37
  %v145 = vunpack.c.l.b16 %v38
  %v146 = vunpack.c.h.b16 %v38
  %v147 = vunpack.c.l.b16 %v39
  %v148 = vunpack.c.l.b16 %v40
  %v149 = vunpack.c.h.b16 %v40
  %v150 = vunpack.c.l.b16 %v41
  %v151 = vunpack.c.l.b16 %v42
  %v152 = vunpack.c.h.b16 %v42
  %v153 = vunpack.c.l.b16 %v43
  %v154 = vunpack.c.l.b16 %v44
  %v155 = vunpack.c.h.b16 %v44
  %v156 = vunpack.c.l.b16 %v45
  %v157 = vunpack.c.l.b16 %v46
  %v158 = vunpack.c.h.b16 %v46
  %v159 = vunpack.c.l.b16 %v47
  %v160 = vunpack.c.l.b16 %v48
  %v161 = vunpack.c.h.b16 %v48
  %v162 = vunpack.c.l.b16 %v49
  %v163 = vunpack.c.l.b16 %v50
  %v164 = vunpack.c.h.b16 %v50
  %v165 = vunpack.c.l.b16 %v51
  %v166 = vunpack.c.l.b16 %v52
  %v167 = vunpack.c.h.b16 %v52
  %v168 = vunpack.c.l.b16 %v53
  %v169 = vunpack.c.l.b16 %v54
  %v170 = vunpack.c.h.b16 %v54
  %v171 = vunpack.c.l.b16 %v55
  %v172 = vpack.c.b16 %v127, %v124
  %v173 = vpack.c.b16 %v128, %v125
  %v174 = vpack.c.b16 %v129, %v126
  %v175 = vpack.c.b16 %v133, %v130
  %v176 = vpack.c.b16 %v134, %v131
  %v177 = vpack.c.b16 %v135, %v132
  %v178 = vpack.c.b16 %v139, %v136
  %v179 = vpack.c.b16 %v140, %v137
  %v180 = vpack.c.b16 %v141, %v138
  %v181 = vpack.c.b16 %v145, %v142
  %v182 = vpack.c.b16 %v146, %v143
  %v183 = vpack.c.b16 %v147, %v144
  %v184 = vpack.c.b16 %v151, %v148
  %v185 = vpack.c.b16 %v152, %v149
  %v186 = vpack.c.b16 %v153, %v150
  %v187 = vpack.c.b16 %v157, %v154
  %v188 = vpack.c.b16 %v158, %v155
  %v189 = vpack.c.b16 %v159, %v156
  %v190 = vpack.c.b16 %v163, %v160
  %v191 = vpack.c.b16 %v164, %v161
  %v192 = vpack.c.b16 %v165, %v162
  %v193 = vpack.c.b16 %v169, %v166
  %v194 = vpack.c.b16 %v170, %v167
  %v195 = vpack.c.b16 %v171, %v168
  %v248 = vunpack.c.l.b16 %v56
  %v249 = vunpack.c.l.b16 %v57
  %v250 = vunpack.c.l.b16 %v58
  %v251 = vunpack.c.l.b16 %v59
  %v252 = vunpack.c.l.b16 %v60
  %v253 = vunpack.c.l.b16 %v61
  %v254 = vunpack.c.l.b16 %v62
  %v255 = vunpack.c.l.b16 %v63
  %v256 = vunpack.c.l.b16 %v64
  %v257 = vunpack.c.l.b16 %v65
  %v258 = vunpack.c.l.b16 %v66
  %v259 = vunpack.c.l.b16 %v67
  %v260 = vunpack.c.l.b16 %v68
  %v261 = vunpack.c.l.b16 %v69
  %v262 = vunpack.c.l.b16 %v70
  %v263 = vunpack.c.l.b16 %v71
  %v264 = vunpack.c.l.b16 %v72
  %v265 = vunpack.c.l.b16 %v73
  %v266 = vunpack.c.l.b16 %v74
  %v267 = vunpack.c.l.b16 %v75
  %v268 = vunpack.c.l.b16 %v76
  %v269 = vunpack.c.l.b16 %v77
  %v270 = vunpack.c.l.b16 %v78
  %v271 = vunpack.c.l.b16 %v79
  %v272 = vunpack.c.l.b16 %v80
  %v273 = vunpack.c.l.b16 %v81
  %v274 = vunpack.c.l.b16 %v82
  %v275 = vunpack.c.l.b16 %v83
  %v276 = vunpack.c.l.b16 %v84
  %v277 = vunpack.c.l.b16 %v85
  %v278 = vunpack.c.l.b16 %v86
  %v279 = vunpack.c.l.b16 %v87
  %v280 = vunpack.c.l.b16 %v88
  %v281 = vunpack.c.l.b16 %v89
  %v282 = vunpack.c.l.b16 %v90
  %v283 = vunpack.c.l.b16 %v91
  %v284 = vpack.c.b16 %v249, %v248
  %v285 = vpack.c.b16 %v251, %v250
  %v286 = vpack.c.b16 %v253, %v252
  %v287 = vpack.c.b16 %v255, %v254
  %v288 = vpack.c.b16 %v257, %v256
  %v289 = vpack.c.b16 %v259, %v258
  %v290 = vpack.c.b16 %v261, %v260
  %v291 = vpack.c.b16 %v263, %v262
  %v292 = vpack.c.b16 %v265, %v264
  %v293 = vpack.c.b16 %v267, %v266
  %v294 = vpack.c.b16 %v269, %v268
  %v295 = vpack.c.b16 %v271, %v270
  %v296 = vpack.c.b16 %v273, %v272
  %v297 = vpack.c.b16 %v275, %v274
  %v298 = vpack.c.b16 %v277, %v276
  %v299 = vpack.c.b16 %v279, %v278
  %v300 = vpack.c.b16 %v281, %v280
  %v301 = vpack.c.b16 %v283, %v282
  %vm320 = vcmask 261120
  %v322 = vsel %vm320, %v174, 0
  %v325 = vsel %vm320, %v177, 0
  %v328 = vsel %vm320, %v180, 0
  %v331 = vsel %vm320, %v183, 0
  %v334 = vsel %vm320, %v186, 0
  %v337 = vsel %vm320, %v189, 0
  %v340 = vsel %vm320, %v192, 0
  %v343 = vsel %vm320, %v195, 0
  %345 = vmatprep.subr.bf16.mxu0 0
  %346 = vmatpush1.bf16.msra.mxu0 %v284
  %347 = vmatprep.subr.bf16.mxu0 0
  %348 = vmatpush1.bf16.msra.mxu0 %v285
  %349 = vmatprep.subr.bf16.mxu0 0
  %350 = vmatpush1.bf16.msra.mxu0 %v286
  %351 = vmatprep.subr.bf16.mxu0 0
  %352 = vmatpush1.bf16.msra.mxu0 %v287
  %353 = vmatprep.subr.bf16.mxu0 0
  %354 = vmatpush1.bf16.msra.mxu0 %v288
  %355 = vmatprep.subr.bf16.mxu0 0
  %356 = vmatpush1.bf16.msra.mxu0 %v289
  %357 = vmatprep.subr.bf16.mxu0 0
  %358 = vmatpush1.bf16.msra.mxu0 %v290
  %359 = vmatprep.subr.bf16.mxu0 0
  %360 = vmatpush1.bf16.msra.mxu0 %v291
  %361 = vmatprep.subr.bf16.mxu0 0
  %362 = vmatpush1.bf16.msra.mxu0 %v292
  %363 = vmatprep.subr.bf16.mxu0 0
  %364 = vmatpush1.bf16.msra.mxu0 %v293
  %365 = vmatprep.subr.bf16.mxu0 0
  %366 = vmatpush1.bf16.msra.mxu0 %v294
  %367 = vmatprep.subr.bf16.mxu0 0
  %368 = vmatpush1.bf16.msra.mxu0 %v295
  %369 = vmatprep.subr.bf16.mxu0 0
  %370 = vmatpush1.bf16.msra.mxu0 %v296
  %371 = vmatprep.subr.bf16.mxu0 0
  %372 = vmatpush1.bf16.msra.mxu0 %v297
  %373 = vmatprep.subr.bf16.mxu0 0
  %374 = vmatpush1.bf16.msra.mxu0 %v298
  %375 = vmatprep.subr.bf16.mxu0 0
  %376 = vmatpush1.bf16.msra.mxu0 %v299
  %377 = vmatprep.mubr.bf16.mxu0 %v173
  %378 = vmatmul.mubr.bf16.gmra.mrb[0].mxu0 %v172
  %v379 = vpop.f32.mrb[0].mxu0
  %v380 = vadd.f32 0.0, %v379
  %v381 = vpop.f32.mrb[0].mxu0
  %v382 = vpop.f32.mrb[0].mxu0
  %v383 = vadd.f32 0.0, %v382
  %v384 = vpop.f32.mrb[0].mxu0
  %385 = vmatprep.mubr.bf16.mxu0 %v176
  %386 = vmatmul.mubr.bf16.gmra.mrb[0].mxu0 %v175
  %v387 = vpop.f32.mrb[0].mxu0
  %v388 = vadd.f32 0.0, %v387
  %v389 = vpop.f32.mrb[0].mxu0
  %v390 = vpop.f32.mrb[0].mxu0
  %v391 = vadd.f32 0.0, %v390
  %v392 = vpop.f32.mrb[0].mxu0
  %393 = vmatprep.mubr.bf16.mxu0 %v179
  %394 = vmatmul.mubr.bf16.gmra.mrb[0].mxu0 %v178
  %v395 = vpop.f32.mrb[0].mxu0
  %v396 = vadd.f32 0.0, %v395
  %v397 = vpop.f32.mrb[0].mxu0
  %v398 = vpop.f32.mrb[0].mxu0
  %v399 = vadd.f32 0.0, %v398
  %v400 = vpop.f32.mrb[0].mxu0
  %401 = vmatprep.mubr.bf16.mxu0 %v182
  %402 = vmatmul.mubr.bf16.gmra.mrb[0].mxu0 %v181
  %v403 = vpop.f32.mrb[0].mxu0
  %v404 = vadd.f32 0.0, %v403
  %v405 = vpop.f32.mrb[0].mxu0
  %v406 = vpop.f32.mrb[0].mxu0
  %v407 = vadd.f32 0.0, %v406
  %v408 = vpop.f32.mrb[0].mxu0
  %409 = vmatprep.mubr.bf16.mxu0 %v185
  %410 = vmatmul.mubr.bf16.gmra.mrb[0].mxu0 %v184
  %v411 = vpop.f32.mrb[0].mxu0
  %v412 = vadd.f32 0.0, %v411
  %v413 = vpop.f32.mrb[0].mxu0
  %v414 = vpop.f32.mrb[0].mxu0
  %v415 = vadd.f32 0.0, %v414
  %v416 = vpop.f32.mrb[0].mxu0
  %417 = vmatprep.mubr.bf16.mxu0 %v188
  %418 = vmatmul.mubr.bf16.gmra.mrb[0].mxu0 %v187
  %v419 = vpop.f32.mrb[0].mxu0
  %v420 = vadd.f32 0.0, %v419
  %v421 = vpop.f32.mrb[0].mxu0
  %v422 = vpop.f32.mrb[0].mxu0
  %v423 = vadd.f32 0.0, %v422
  %v424 = vpop.f32.mrb[0].mxu0
  %425 = vmatprep.mubr.bf16.mxu0 %v191
  %426 = vmatmul.mubr.bf16.gmra.mrb[0].mxu0 %v190
  %v427 = vpop.f32.mrb[0].mxu0
  %v428 = vadd.f32 0.0, %v427
  %v429 = vpop.f32.mrb[0].mxu0
  %v430 = vpop.f32.mrb[0].mxu0
  %v431 = vadd.f32 0.0, %v430
  %v432 = vpop.f32.mrb[0].mxu0
  %433 = vmatprep.mubr.bf16.mxu0 %v194
  %434 = vmatmul.mubr.bf16.gmra.mrb[0].mxu0 %v193
  %v435 = vpop.f32.mrb[0].mxu0
  %v436 = vadd.f32 0.0, %v435
  %v437 = vpop.f32.mrb[0].mxu0
  %v438 = vpop.f32.mrb[0].mxu0
  %v439 = vadd.f32 0.0, %v438
  %v440 = vpop.f32.mrb[0].mxu0
  %441 = vdwg.mxu0
  %442 = vmatprep.subr.bf16.mxu0 0
  %443 = vmatpush1.bf16.msra.mxu0 %v300
  %444 = vmatprep.subr.bf16.mxu0 0
  %445 = vmatpush1.bf16.msra.mxu0 %v301
  %446 = vmatprep.subr.bf16.mxu0 0
  %447 = vmatpush1.bf16.msra.mxu0 0
  %448 = vmatprep.subr.bf16.mxu0 0
  %449 = vmatpush1.bf16.msra.mxu0 0
  %450 = vmatprep.subr.bf16.mxu0 0
  %451 = vmatpush1.bf16.msra.mxu0 0
  %452 = vmatprep.subr.bf16.mxu0 0
  %453 = vmatpush1.bf16.msra.mxu0 0
  %454 = vmatprep.subr.bf16.mxu0 0
  %455 = vmatpush1.bf16.msra.mxu0 0
  %456 = vmatprep.subr.bf16.mxu0 0
  %457 = vmatpush1.bf16.msra.mxu0 0
  %458 = vmatprep.subr.bf16.mxu0 0
  %459 = vmatpush1.bf16.msra.mxu0 0
  %460 = vmatprep.subr.bf16.mxu0 0
  %461 = vmatpush1.bf16.msra.mxu0 0
  %462 = vmatprep.subr.bf16.mxu0 0
  %463 = vmatpush1.bf16.msra.mxu0 0
  %464 = vmatprep.subr.bf16.mxu0 0
  %465 = vmatpush1.bf16.msra.mxu0 0
  %466 = vmatprep.subr.bf16.mxu0 0
  %467 = vmatpush1.bf16.msra.mxu0 0
  %468 = vmatprep.subr.bf16.mxu0 0
  %469 = vmatpush1.bf16.msra.mxu0 0
  %470 = vmatprep.subr.bf16.mxu0 0
  %471 = vmatpush1.bf16.msra.mxu0 0
  %472 = vmatprep.subr.bf16.mxu0 0
  %473 = vmatpush1.bf16.msra.mxu0 0
  %474 = vmatprep.mubr.bf16.mxu0 0
  %475 = vmatmul.mubr.bf16.gmra.mrb[0].mxu0 %v322
  %v476 = vpop.f32.mrb[0].mxu0
  %v477 = vadd.f32 %v380, %v476
  %v478 = vpop.f32.mrb[0].mxu0
  %v479 = vpop.f32.mrb[0].mxu0
  %v480 = vadd.f32 %v383, %v479
  %v481 = vpop.f32.mrb[0].mxu0
  %482 = vmatprep.mubr.bf16.mxu0 0
  %483 = vmatmul.mubr.bf16.gmra.mrb[0].mxu0 %v325
  %v484 = vpop.f32.mrb[0].mxu0
  %v485 = vadd.f32 %v388, %v484
  %v486 = vpop.f32.mrb[0].mxu0
  %v487 = vpop.f32.mrb[0].mxu0
  %v488 = vadd.f32 %v391, %v487
  %v489 = vpop.f32.mrb[0].mxu0
  %490 = vmatprep.mubr.bf16.mxu0 0
  %491 = vmatmul.mubr.bf16.gmra.mrb[0].mxu0 %v328
  %v492 = vpop.f32.mrb[0].mxu0
  %v493 = vadd.f32 %v396, %v492
  %v494 = vpop.f32.mrb[0].mxu0
  %v495 = vpop.f32.mrb[0].mxu0
  %v496 = vadd.f32 %v399, %v495
  %v497 = vpop.f32.mrb[0].mxu0
  %498 = vmatprep.mubr.bf16.mxu0 0
  %499 = vmatmul.mubr.bf16.gmra.mrb[0].mxu0 %v331
  %v500 = vpop.f32.mrb[0].mxu0
  %v501 = vadd.f32 %v404, %v500
  %v502 = vpop.f32.mrb[0].mxu0
  %v503 = vpop.f32.mrb[0].mxu0
  %v504 = vadd.f32 %v407, %v503
  %v505 = vpop.f32.mrb[0].mxu0
  %506 = vmatprep.mubr.bf16.mxu0 0
  %507 = vmatmul.mubr.bf16.gmra.mrb[0].mxu0 %v334
  %v508 = vpop.f32.mrb[0].mxu0
  %v509 = vadd.f32 %v412, %v508
  %v510 = vpop.f32.mrb[0].mxu0
  %v511 = vpop.f32.mrb[0].mxu0
  %v512 = vadd.f32 %v415, %v511
  %v513 = vpop.f32.mrb[0].mxu0
  %514 = vmatprep.mubr.bf16.mxu0 0
  %515 = vmatmul.mubr.bf16.gmra.mrb[0].mxu0 %v337
  %v516 = vpop.f32.mrb[0].mxu0
  %v517 = vadd.f32 %v420, %v516
  %v518 = vpop.f32.mrb[0].mxu0
  %v519 = vpop.f32.mrb[0].mxu0
  %v520 = vadd.f32 %v423, %v519
  %v521 = vpop.f32.mrb[0].mxu0
  %522 = vmatprep.mubr.bf16.mxu0 0
  %523 = vmatmul.mubr.bf16.gmra.mrb[0].mxu0 %v340
  %v524 = vpop.f32.mrb[0].mxu0
  %v525 = vadd.f32 %v428, %v524
  %v526 = vpop.f32.mrb[0].mxu0
  %v527 = vpop.f32.mrb[0].mxu0
  %v528 = vadd.f32 %v431, %v527
  %v529 = vpop.f32.mrb[0].mxu0
  %530 = vmatprep.mubr.bf16.mxu0 0
  %531 = vmatmul.mubr.bf16.gmra.mrb[0].mxu0 %v343
  %v532 = vpop.f32.mrb[0].mxu0
  %v533 = vadd.f32 %v436, %v532
  %v534 = vpop.f32.mrb[0].mxu0
  %v535 = vpop.f32.mrb[0].mxu0
  %v536 = vadd.f32 %v439, %v535
  %v537 = vpop.f32.mrb[0].mxu0
  %538 = vdwg.mxu0
  %v539 = vld [vmem:[%s2] sm:$0xff]
  %v540 = vld [vmem:[%s2 + $0x8] sm:$0xff]
  %v541 = vld [vmem:[%s2 + $0x10] sm:$0xff]
  %v542 = vld [vmem:[%s2 + $0x18] sm:$0xff]
  %v543 = vld [vmem:[%s2 + $0x20] sm:$0xff]
  %v544 = vld [vmem:[%s2 + $0x28] sm:$0xff]
  %v545 = vld [vmem:[%s2 + $0x30] sm:$0xff]
  %v546 = vld [vmem:[%s2 + $0x38] sm:$0xff]
  %v547 = vld [vmem:[%s3] sm:$0xff]
  %v548 = vld [vmem:[%s3 + $0x8] sm:$0xff]
  %vm549 = vcmask 523264
  %v550 = vsel %vm549, %v477, 0.0
  %v551 = vsel %vm549, %v480, 0.0
  %v552 = vadd.f32 %v550, %v551
  %v553 = vsel %vm549, %v485, 0.0
  %v554 = vadd.f32 %v552, %v553
  %v555 = vsel %vm549, %v488, 0.0
  %v556 = vadd.f32 %v554, %v555
  %v557 = vsel %vm549, %v493, 0.0
  %v558 = vadd.f32 %v556, %v557
  %v559 = vsel %vm549, %v496, 0.0
  %v560 = vadd.f32 %v558, %v559
  %v561 = vsel %vm549, %v501, 0.0
  %v562 = vadd.f32 %v560, %v561
  %v563 = vsel %vm549, %v504, 0.0
  %v564 = vadd.f32 %v562, %v563
  %v565 = vsel %vm549, %v509, 0.0
  %v566 = vadd.f32 %v564, %v565
  %v567 = vsel %vm549, %v512, 0.0
  %v568 = vadd.f32 %v566, %v567
  %v569 = vsel %vm549, %v517, 0.0
  %v570 = vadd.f32 %v568, %v569
  %v571 = vsel %vm549, %v520, 0.0
  %v572 = vadd.f32 %v570, %v571
  %v573 = vsel %vm549, %v525, 0.0
  %v574 = vadd.f32 %v572, %v573
  %v575 = vsel %vm549, %v528, 0.0
  %v576 = vadd.f32 %v574, %v575
  %v577 = vsel %vm549, %v533, 0.0
  %v578 = vadd.f32 %v576, %v577
  %v579 = vsel %vm549, %v536, 0.0
  %v580 = vadd.f32 %v578, %v579
  %v581 = vrot.slane %v580, 4
  %v582 = vadd.f32 %v580, %v581
  %v583 = vrot.slane %v582, 2
  %v584 = vadd.f32 %v582, %v583
  %v585 = vrot.slane %v584, 1
  %v586 = vadd.f32 %v584, %v585
  %v587 = vrcp.pop 128.0
  %v588 = vmul.f32 %v586, %v587
  %v590 = vsel %vm549, %v588, 0
  %592 = vmatprep.subr.mxu0 0.0
  %593 = vmatpush1.msra.mxu0 %v539
  %594 = vmatprep.subr.mxu0 0.0
  %595 = vmatpush1.msra.mxu0 %v540
  %596 = vmatprep.subr.mxu0 0.0
  %597 = vmatpush1.msra.mxu0 %v541
  %598 = vmatprep.subr.mxu0 0.0
  %599 = vmatpush1.msra.mxu0 %v542
  %600 = vmatprep.subr.mxu0 0.0
  %601 = vmatpush1.msra.mxu0 %v543
  %602 = vmatprep.subr.mxu0 0.0
  %603 = vmatpush1.msra.mxu0 %v544
  %604 = vmatprep.subr.mxu0 0.0
  %605 = vmatpush1.msra.mxu0 %v545
  %606 = vmatprep.subr.mxu0 0.0
  %607 = vmatpush1.msra.mxu0 %v546
  %608 = vmatprep.subr.mxu0 0.0
  %609 = vmatpush1.msra.mxu0 0.0
  %610 = vmatprep.subr.mxu0 0.0
  %611 = vmatpush1.msra.mxu0 0.0
  %612 = vmatprep.subr.mxu0 0.0
  %613 = vmatpush1.msra.mxu0 0.0
  %614 = vmatprep.subr.mxu0 0.0
  %615 = vmatpush1.msra.mxu0 0.0
  %616 = vmatprep.subr.mxu0 0.0
  %617 = vmatpush1.msra.mxu0 0.0
  %618 = vmatprep.subr.mxu0 0.0
  %619 = vmatpush1.msra.mxu0 0.0
  %620 = vmatprep.subr.mxu0 0.0
  %621 = vmatpush1.msra.mxu0 0.0
  %622 = vmatprep.subr.mxu0 0.0
  %623 = vmatpush1.msra.mxu0 0.0
  %624 = vmatprep.subr.mxu0 0.0
  %625 = vmatpush1.msra.mxu0 0.0
  %626 = vmatprep.subr.mxu0 0.0
  %627 = vmatpush1.msra.mxu0 0.0
  %628 = vmatprep.subr.mxu0 0.0
  %629 = vmatpush1.msra.mxu0 0.0
  %630 = vmatprep.subr.mxu0 0.0
  %631 = vmatpush1.msra.mxu0 0.0
  %632 = vmatprep.subr.mxu0 0.0
  %633 = vmatpush1.msra.mxu0 0.0
  %634 = vmatprep.subr.mxu0 0.0
  %635 = vmatpush1.msra.mxu0 0.0
  %636 = vmatprep.subr.mxu0 0.0
  %637 = vmatpush1.msra.mxu0 0.0
  %638 = vmatprep.subr.mxu0 0.0
  %639 = vmatpush1.msra.mxu0 0.0
  %640 = vmatprep.subr.mxu0 0.0
  %641 = vmatpush1.msra.mxu0 0.0
  %642 = vmatprep.subr.mxu0 0.0
  %643 = vmatpush1.msra.mxu0 0.0
  %644 = vmatprep.subr.mxu0 0.0
  %645 = vmatpush1.msra.mxu0 0.0
  %646 = vmatprep.subr.mxu0 0.0
  %647 = vmatpush1.msra.mxu0 0.0
  %648 = vmatprep.subr.mxu0 0.0
  %649 = vmatpush1.msra.mxu0 0.0
  %650 = vmatprep.subr.mxu0 0.0
  %651 = vmatpush1.msra.mxu0 0.0
  %652 = vmatprep.subr.mxu0 0.0
  %653 = vmatpush1.msra.mxu0 0.0
  %654 = vmatprep.subr.mxu0 0.0
  %655 = vmatpush1.msra.mxu0 0.0
  %656 = vmatprep.mubr.f32.mxu0 0.0
  %657 = vmatmul.mubr.f32.gmra.mrb[0].mxu0 %v590
  %v658 = vpop.f32.mrb[0].mxu0
  %v659 = vadd.f32 0.0, %v658
  %v660 = vpop.f32.mrb[0].mxu0
  %661 = vdwg.mxu0
  %vm662 = vcmask 130048
  %v664 = vsel %vm662, %v659, 0
  %666 = vmatprep.subr.mxu0 0.0
  %667 = vmatpush1.msra.mxu0 %v547
  %668 = vmatprep.subr.mxu0 0.0
  %669 = vmatpush1.msra.mxu0 %v548
  %670 = vmatprep.subr.mxu0 0.0
  %671 = vmatpush1.msra.mxu0 0.0
  %672 = vmatprep.subr.mxu0 0.0
  %673 = vmatpush1.msra.mxu0 0.0
  %674 = vmatprep.subr.mxu0 0.0
  %675 = vmatpush1.msra.mxu0 0.0
  %676 = vmatprep.subr.mxu0 0.0
  %677 = vmatpush1.msra.mxu0 0.0
  %678 = vmatprep.subr.mxu0 0.0
  %679 = vmatpush1.msra.mxu0 0.0
  %680 = vmatprep.subr.mxu0 0.0
  %681 = vmatpush1.msra.mxu0 0.0
  %682 = vmatprep.subr.mxu0 0.0
  %683 = vmatpush1.msra.mxu0 0.0
  %684 = vmatprep.subr.mxu0 0.0
  %685 = vmatpush1.msra.mxu0 0.0
  %686 = vmatprep.subr.mxu0 0.0
  %687 = vmatpush1.msra.mxu0 0.0
  %688 = vmatprep.subr.mxu0 0.0
  %689 = vmatpush1.msra.mxu0 0.0
  %690 = vmatprep.subr.mxu0 0.0
  %691 = vmatpush1.msra.mxu0 0.0
  %692 = vmatprep.subr.mxu0 0.0
  %693 = vmatpush1.msra.mxu0 0.0
  %694 = vmatprep.subr.mxu0 0.0
  %695 = vmatpush1.msra.mxu0 0.0
  %696 = vmatprep.subr.mxu0 0.0
  %697 = vmatpush1.msra.mxu0 0.0
  %698 = vmatprep.subr.mxu0 0.0
  %699 = vmatpush1.msra.mxu0 0.0
  %700 = vmatprep.subr.mxu0 0.0
  %701 = vmatpush1.msra.mxu0 0.0
  %702 = vmatprep.subr.mxu0 0.0
  %703 = vmatpush1.msra.mxu0 0.0
  %704 = vmatprep.subr.mxu0 0.0
  %705 = vmatpush1.msra.mxu0 0.0
  %706 = vmatprep.subr.mxu0 0.0
  %707 = vmatpush1.msra.mxu0 0.0
  %708 = vmatprep.subr.mxu0 0.0
  %709 = vmatpush1.msra.mxu0 0.0
  %710 = vmatprep.subr.mxu0 0.0
  %711 = vmatpush1.msra.mxu0 0.0
  %712 = vmatprep.subr.mxu0 0.0
  %713 = vmatpush1.msra.mxu0 0.0
  %714 = vmatprep.subr.mxu0 0.0
  %715 = vmatpush1.msra.mxu0 0.0
  %716 = vmatprep.subr.mxu0 0.0
  %717 = vmatpush1.msra.mxu0 0.0
  %718 = vmatprep.subr.mxu0 0.0
  %719 = vmatpush1.msra.mxu0 0.0
  %720 = vmatprep.subr.mxu0 0.0
  %721 = vmatpush1.msra.mxu0 0.0
  %722 = vmatprep.subr.mxu0 0.0
  %723 = vmatpush1.msra.mxu0 0.0
  %724 = vmatprep.subr.mxu0 0.0
  %725 = vmatpush1.msra.mxu0 0.0
  %726 = vmatprep.subr.mxu0 0.0
  %727 = vmatpush1.msra.mxu0 0.0
  %728 = vmatprep.subr.mxu0 0.0
  %729 = vmatpush1.msra.mxu0 0.0
  %730 = vmatprep.mubr.f32.mxu0 0.0
  %731 = vmatmul.mubr.f32.gmra.mrb[0].mxu0 %v664
  %v732 = vpop.f32.mrb[0].mxu0
  %v733 = vadd.f32 0.0, %v732
  %v734 = vpop.f32.mrb[0].mxu0
  %735 = vdwg.mxu0
  %v736 = vlaneseq
  %v737 = vshrl.u32 %v736, 7
  %v738 = vsub.s32 0, %v737
  %v739 = vrot.slane %v733, %v738
  %v740 = vsub.f32 %v477, %v739
  %v741 = vsub.f32 %v480, %v739
  %v742 = vsub.f32 %v485, %v739
  %v743 = vsub.f32 %v488, %v739
  %v744 = vsub.f32 %v493, %v739
  %v745 = vsub.f32 %v496, %v739
  %v746 = vsub.f32 %v501, %v739
  %v747 = vsub.f32 %v504, %v739
  %v748 = vsub.f32 %v509, %v739
  %v749 = vsub.f32 %v512, %v739
  %v750 = vsub.f32 %v517, %v739
  %v751 = vsub.f32 %v520, %v739
  %v752 = vsub.f32 %v525, %v739
  %v753 = vsub.f32 %v528, %v739
  %v754 = vsub.f32 %v533, %v739
  %v755 = vsub.f32 %v536, %v739
  %v756 = vmul.f32 %v740, %v740
  %v757 = vmul.f32 %v741, %v741
  %v758 = vmul.f32 %v742, %v742
  %v759 = vmul.f32 %v743, %v743
  %v760 = vmul.f32 %v744, %v744
  %v761 = vmul.f32 %v745, %v745
  %v762 = vmul.f32 %v746, %v746
  %v763 = vmul.f32 %v747, %v747
  %v764 = vmul.f32 %v748, %v748
  %v765 = vmul.f32 %v749, %v749
  %v766 = vmul.f32 %v750, %v750
  %v767 = vmul.f32 %v751, %v751
  %v768 = vmul.f32 %v752, %v752
  %v769 = vmul.f32 %v753, %v753
  %v770 = vmul.f32 %v754, %v754
  %v771 = vmul.f32 %v755, %v755
  %v772 = vsel %vm549, %v756, 0.0
  %v773 = vsel %vm549, %v757, 0.0
  %v774 = vadd.f32 %v772, %v773
  %v775 = vsel %vm549, %v758, 0.0
  %v776 = vadd.f32 %v774, %v775
  %v777 = vsel %vm549, %v759, 0.0
  %v778 = vadd.f32 %v776, %v777
  %v779 = vsel %vm549, %v760, 0.0
  %v780 = vadd.f32 %v778, %v779
  %v781 = vsel %vm549, %v761, 0.0
  %v782 = vadd.f32 %v780, %v781
  %v783 = vsel %vm549, %v762, 0.0
  %v784 = vadd.f32 %v782, %v783
  %v785 = vsel %vm549, %v763, 0.0
  %v786 = vadd.f32 %v784, %v785
  %v787 = vsel %vm549, %v764, 0.0
  %v788 = vadd.f32 %v786, %v787
  %v789 = vsel %vm549, %v765, 0.0
  %v790 = vadd.f32 %v788, %v789
  %v791 = vsel %vm549, %v766, 0.0
  %v792 = vadd.f32 %v790, %v791
  %v793 = vsel %vm549, %v767, 0.0
  %v794 = vadd.f32 %v792, %v793
  %v795 = vsel %vm549, %v768, 0.0
  %v796 = vadd.f32 %v794, %v795
  %v797 = vsel %vm549, %v769, 0.0
  %v798 = vadd.f32 %v796, %v797
  %v799 = vsel %vm549, %v770, 0.0
  %v800 = vadd.f32 %v798, %v799
  %v801 = vsel %vm549, %v771, 0.0
  %v802 = vadd.f32 %v800, %v801
  %v803 = vrot.slane %v802, 4
  %v804 = vadd.f32 %v802, %v803
  %v805 = vrot.slane %v804, 2
  %v806 = vadd.f32 %v804, %v805
  %v807 = vrot.slane %v806, 1
  %v808 = vadd.f32 %v806, %v807
  %v809 = vmul.f32 %v808, %v587
  %v810 = vld [vmem:[%s4] sm:$0x1]
  %v812 = vsel %vm549, %v809, 0
  %814 = vmatprep.subr.mxu0 0.0
  %815 = vmatpush1.msra.mxu0 %v539
  %816 = vmatprep.subr.mxu0 0.0
  %817 = vmatpush1.msra.mxu0 %v540
  %818 = vmatprep.subr.mxu0 0.0
  %819 = vmatpush1.msra.mxu0 %v541
  %820 = vmatprep.subr.mxu0 0.0
  %821 = vmatpush1.msra.mxu0 %v542
  %822 = vmatprep.subr.mxu0 0.0
  %823 = vmatpush1.msra.mxu0 %v543
  %824 = vmatprep.subr.mxu0 0.0
  %825 = vmatpush1.msra.mxu0 %v544
  %826 = vmatprep.subr.mxu0 0.0
  %827 = vmatpush1.msra.mxu0 %v545
  %828 = vmatprep.subr.mxu0 0.0
  %829 = vmatpush1.msra.mxu0 %v546
  %830 = vmatprep.subr.mxu0 0.0
  %831 = vmatpush1.msra.mxu0 0.0
  %832 = vmatprep.subr.mxu0 0.0
  %833 = vmatpush1.msra.mxu0 0.0
  %834 = vmatprep.subr.mxu0 0.0
  %835 = vmatpush1.msra.mxu0 0.0
  %836 = vmatprep.subr.mxu0 0.0
  %837 = vmatpush1.msra.mxu0 0.0
  %838 = vmatprep.subr.mxu0 0.0
  %839 = vmatpush1.msra.mxu0 0.0
  %840 = vmatprep.subr.mxu0 0.0
  %841 = vmatpush1.msra.mxu0 0.0
  %842 = vmatprep.subr.mxu0 0.0
  %843 = vmatpush1.msra.mxu0 0.0
  %844 = vmatprep.subr.mxu0 0.0
  %845 = vmatpush1.msra.mxu0 0.0
  %846 = vmatprep.subr.mxu0 0.0
  %847 = vmatpush1.msra.mxu0 0.0
  %848 = vmatprep.subr.mxu0 0.0
  %849 = vmatpush1.msra.mxu0 0.0
  %850 = vmatprep.subr.mxu0 0.0
  %851 = vmatpush1.msra.mxu0 0.0
  %852 = vmatprep.subr.mxu0 0.0
  %853 = vmatpush1.msra.mxu0 0.0
  %854 = vmatprep.subr.mxu0 0.0
  %855 = vmatpush1.msra.mxu0 0.0
  %856 = vmatprep.subr.mxu0 0.0
  %857 = vmatpush1.msra.mxu0 0.0
  %858 = vmatprep.subr.mxu0 0.0
  %859 = vmatpush1.msra.mxu0 0.0
  %860 = vmatprep.subr.mxu0 0.0
  %861 = vmatpush1.msra.mxu0 0.0
  %862 = vmatprep.subr.mxu0 0.0
  %863 = vmatpush1.msra.mxu0 0.0
  %864 = vmatprep.subr.mxu0 0.0
  %865 = vmatpush1.msra.mxu0 0.0
  %866 = vmatprep.subr.mxu0 0.0
  %867 = vmatpush1.msra.mxu0 0.0
  %868 = vmatprep.subr.mxu0 0.0
  %869 = vmatpush1.msra.mxu0 0.0
  %870 = vmatprep.subr.mxu0 0.0
  %871 = vmatpush1.msra.mxu0 0.0
  %872 = vmatprep.subr.mxu0 0.0
  %873 = vmatpush1.msra.mxu0 0.0
  %874 = vmatprep.subr.mxu0 0.0
  %875 = vmatpush1.msra.mxu0 0.0
  %876 = vmatprep.subr.mxu0 0.0
  %877 = vmatpush1.msra.mxu0 0.0
  %878 = vmatprep.mubr.f32.mxu0 0.0
  %879 = vmatmul.mubr.f32.gmra.mrb[0].mxu0 %v812
  %v880 = vpop.f32.mrb[0].mxu0
  %v881 = vadd.f32 1e-05, %v880
  %v882 = vpop.f32.mrb[0].mxu0
  %883 = vdwg.mxu0
  %v884 = vrsqrt.pop %v881
  %v885 = vmul.f32 %v810, %v884
  %v887 = vsel %vm662, %v885, 0
  %889 = vmatprep.subr.mxu0 0.0
  %890 = vmatpush1.msra.mxu0 %v547
  %891 = vmatprep.subr.mxu0 0.0
  %892 = vmatpush1.msra.mxu0 %v548
  %893 = vmatprep.subr.mxu0 0.0
  %894 = vmatpush1.msra.mxu0 0.0
  %895 = vmatprep.subr.mxu0 0.0
  %896 = vmatpush1.msra.mxu0 0.0
  %897 = vmatprep.subr.mxu0 0.0
  %898 = vmatpush1.msra.mxu0 0.0
  %899 = vmatprep.subr.mxu0 0.0
  %900 = vmatpush1.msra.mxu0 0.0
  %901 = vmatprep.subr.mxu0 0.0
  %902 = vmatpush1.msra.mxu0 0.0
  %903 = vmatprep.subr.mxu0 0.0
  %904 = vmatpush1.msra.mxu0 0.0
  %905 = vmatprep.subr.mxu0 0.0
  %906 = vmatpush1.msra.mxu0 0.0
  %907 = vmatprep.subr.mxu0 0.0
  %908 = vmatpush1.msra.mxu0 0.0
  %909 = vmatprep.subr.mxu0 0.0
  %910 = vmatpush1.msra.mxu0 0.0
  %911 = vmatprep.subr.mxu0 0.0
  %912 = vmatpush1.msra.mxu0 0.0
  %913 = vmatprep.subr.mxu0 0.0
  %914 = vmatpush1.msra.mxu0 0.0
  %915 = vmatprep.subr.mxu0 0.0
  %916 = vmatpush1.msra.mxu0 0.0
  %917 = vmatprep.subr.mxu0 0.0
  %918 = vmatpush1.msra.mxu0 0.0
  %919 = vmatprep.subr.mxu0 0.0
  %920 = vmatpush1.msra.mxu0 0.0
  %921 = vmatprep.subr.mxu0 0.0
  %922 = vmatpush1.msra.mxu0 0.0
  %923 = vmatprep.subr.mxu0 0.0
  %924 = vmatpush1.msra.mxu0 0.0
  %925 = vmatprep.subr.mxu0 0.0
  %926 = vmatpush1.msra.mxu0 0.0
  %927 = vmatprep.subr.mxu0 0.0
  %928 = vmatpush1.msra.mxu0 0.0
  %929 = vmatprep.subr.mxu0 0.0
  %930 = vmatpush1.msra.mxu0 0.0
  %931 = vmatprep.subr.mxu0 0.0
  %932 = vmatpush1.msra.mxu0 0.0
  %933 = vmatprep.subr.mxu0 0.0
  %934 = vmatpush1.msra.mxu0 0.0
  %935 = vmatprep.subr.mxu0 0.0
  %936 = vmatpush1.msra.mxu0 0.0
  %937 = vmatprep.subr.mxu0 0.0
  %938 = vmatpush1.msra.mxu0 0.0
  %939 = vmatprep.subr.mxu0 0.0
  %940 = vmatpush1.msra.mxu0 0.0
  %941 = vmatprep.subr.mxu0 0.0
  %942 = vmatpush1.msra.mxu0 0.0
  %943 = vmatprep.subr.mxu0 0.0
  %944 = vmatpush1.msra.mxu0 0.0
  %945 = vmatprep.subr.mxu0 0.0
  %946 = vmatpush1.msra.mxu0 0.0
  %947 = vmatprep.subr.mxu0 0.0
  %948 = vmatpush1.msra.mxu0 0.0
  %949 = vmatprep.subr.mxu0 0.0
  %950 = vmatpush1.msra.mxu0 0.0
  %951 = vmatprep.subr.mxu0 0.0
  %952 = vmatpush1.msra.mxu0 0.0
  %953 = vmatprep.mubr.f32.mxu0 0.0
  %954 = vmatmul.mubr.f32.gmra.mrb[0].mxu0 %v887
  %v955 = vpop.f32.mrb[0].mxu0
  %v956 = vadd.f32 0.0, %v955
  %v957 = vpop.f32.mrb[0].mxu0
  %958 = vdwg.mxu0
  %v959 = vld [vmem:[%s5] sm:$0x1]
  %v961 = vsel %vm662, %v959, 0
  %963 = vmatprep.subr.mxu0 0.0
  %964 = vmatpush1.msra.mxu0 %v547
  %965 = vmatprep.subr.mxu0 0.0
  %966 = vmatpush1.msra.mxu0 %v548
  %967 = vmatprep.subr.mxu0 0.0
  %968 = vmatpush1.msra.mxu0 0.0
  %969 = vmatprep.subr.mxu0 0.0
  %970 = vmatpush1.msra.mxu0 0.0
  %971 = vmatprep.subr.mxu0 0.0
  %972 = vmatpush1.msra.mxu0 0.0
  %973 = vmatprep.subr.mxu0 0.0
  %974 = vmatpush1.msra.mxu0 0.0
  %975 = vmatprep.subr.mxu0 0.0
  %976 = vmatpush1.msra.mxu0 0.0
  %977 = vmatprep.subr.mxu0 0.0
  %978 = vmatpush1.msra.mxu0 0.0
  %979 = vmatprep.subr.mxu0 0.0
  %980 = vmatpush1.msra.mxu0 0.0
  %981 = vmatprep.subr.mxu0 0.0
  %982 = vmatpush1.msra.mxu0 0.0
  %983 = vmatprep.subr.mxu0 0.0
  %984 = vmatpush1.msra.mxu0 0.0
  %985 = vmatprep.subr.mxu0 0.0
  %986 = vmatpush1.msra.mxu0 0.0
  %987 = vmatprep.subr.mxu0 0.0
  %988 = vmatpush1.msra.mxu0 0.0
  %989 = vmatprep.subr.mxu0 0.0
  %990 = vmatpush1.msra.mxu0 0.0
  %991 = vmatprep.subr.mxu0 0.0
  %992 = vmatpush1.msra.mxu0 0.0
  %993 = vmatprep.subr.mxu0 0.0
  %994 = vmatpush1.msra.mxu0 0.0
  %995 = vmatprep.subr.mxu0 0.0
  %996 = vmatpush1.msra.mxu0 0.0
  %997 = vmatprep.subr.mxu0 0.0
  %998 = vmatpush1.msra.mxu0 0.0
  %999 = vmatprep.subr.mxu0 0.0
  %1000 = vmatpush1.msra.mxu0 0.0
  %1001 = vmatprep.subr.mxu0 0.0
  %1002 = vmatpush1.msra.mxu0 0.0
  %1003 = vmatprep.subr.mxu0 0.0
  %1004 = vmatpush1.msra.mxu0 0.0
  %1005 = vmatprep.subr.mxu0 0.0
  %1006 = vmatpush1.msra.mxu0 0.0
  %1007 = vmatprep.subr.mxu0 0.0
  %1008 = vmatpush1.msra.mxu0 0.0
  %1009 = vmatprep.subr.mxu0 0.0
  %1010 = vmatpush1.msra.mxu0 0.0
  %1011 = vmatprep.subr.mxu0 0.0
  %1012 = vmatpush1.msra.mxu0 0.0
  %1013 = vmatprep.subr.mxu0 0.0
  %1014 = vmatpush1.msra.mxu0 0.0
  %1015 = vmatprep.subr.mxu0 0.0
  %1016 = vmatpush1.msra.mxu0 0.0
  %1017 = vmatprep.subr.mxu0 0.0
  %1018 = vmatpush1.msra.mxu0 0.0
  %1019 = vmatprep.subr.mxu0 0.0
  %1020 = vmatpush1.msra.mxu0 0.0
  %1021 = vmatprep.subr.mxu0 0.0
  %1022 = vmatpush1.msra.mxu0 0.0
  %1023 = vmatprep.subr.mxu0 0.0
  %1024 = vmatpush1.msra.mxu0 0.0
  %1025 = vmatprep.subr.mxu0 0.0
  %1026 = vmatpush1.msra.mxu0 0.0
  %1027 = vmatprep.mubr.f32.mxu0 0.0
  %1028 = vmatmul.mubr.f32.gmra.mrb[0].mxu0 %v961
  %v1029 = vpop.f32.mrb[0].mxu0
  %v1030 = vadd.f32 0.0, %v1029
  %v1031 = vpop.f32.mrb[0].mxu0
  %1032 = vdwg.mxu0
  %v1033 = vlaneseq
  %v1034 = vshrl.u32 %v1033, 7
  %v1035 = vsub.s32 0, %v1034
  %v1036 = vrot.slane %v956, %v1035
  %v1037 = vmul.f32 %v740, %v1036
  %v1038 = vmul.f32 %v741, %v1036
  %v1039 = vmul.f32 %v742, %v1036
  %v1040 = vmul.f32 %v743, %v1036
  %v1041 = vmul.f32 %v744, %v1036
  %v1042 = vmul.f32 %v745, %v1036
  %v1043 = vmul.f32 %v746, %v1036
  %v1044 = vmul.f32 %v747, %v1036
  %v1045 = vmul.f32 %v748, %v1036
  %v1046 = vmul.f32 %v749, %v1036
  %v1047 = vmul.f32 %v750, %v1036
  %v1048 = vmul.f32 %v751, %v1036
  %v1049 = vmul.f32 %v752, %v1036
  %v1050 = vmul.f32 %v753, %v1036
  %v1051 = vmul.f32 %v754, %v1036
  %v1052 = vmul.f32 %v755, %v1036
  %v1053 = vlaneseq
  %v1054 = vshrl.u32 %v1053, 7
  %v1055 = vsub.s32 0, %v1054
  %v1056 = vrot.slane %v1030, %v1055
  %v1057 = vadd.f32 %v1037, %v1056
  %v1058 = vadd.f32 %v1038, %v1056
  %v1059 = vadd.f32 %v1039, %v1056
  %v1060 = vadd.f32 %v1040, %v1056
  %v1061 = vadd.f32 %v1041, %v1056
  %v1062 = vadd.f32 %v1042, %v1056
  %v1063 = vadd.f32 %v1043, %v1056
  %v1064 = vadd.f32 %v1044, %v1056
  %v1065 = vadd.f32 %v1045, %v1056
  %v1066 = vadd.f32 %v1046, %v1056
  %v1067 = vadd.f32 %v1047, %v1056
  %v1068 = vadd.f32 %v1048, %v1056
  %v1069 = vadd.f32 %v1049, %v1056
  %v1070 = vadd.f32 %v1050, %v1056
  %v1071 = vadd.f32 %v1051, %v1056
  %v1072 = vadd.f32 %v1052, %v1056
  %v1073 = vmax.f32 %v1057, 0.0
  %v1074 = vmax.f32 %v1058, 0.0
  %v1075 = vmax.f32 %v1059, 0.0
  %v1076 = vmax.f32 %v1060, 0.0
  %v1077 = vmax.f32 %v1061, 0.0
  %v1078 = vmax.f32 %v1062, 0.0
  %v1079 = vmax.f32 %v1063, 0.0
  %v1080 = vmax.f32 %v1064, 0.0
  %v1081 = vmax.f32 %v1065, 0.0
  %v1082 = vmax.f32 %v1066, 0.0
  %v1083 = vmax.f32 %v1067, 0.0
  %v1084 = vmax.f32 %v1068, 0.0
  %v1085 = vmax.f32 %v1069, 0.0
  %v1086 = vmax.f32 %v1070, 0.0
  %v1087 = vmax.f32 %v1071, 0.0
  %v1088 = vmax.f32 %v1072, 0.0
  %1089 = vst.msk [vmem:[%s6] sm:$0xff] %vm549, %v1073
  %1090 = vst.msk [vmem:[%s6 + $0x8] sm:$0xff] %vm549, %v1074
  %1091 = vst.msk [vmem:[%s6 + $0x10] sm:$0xff] %vm549, %v1075
  %1092 = vst.msk [vmem:[%s6 + $0x18] sm:$0xff] %vm549, %v1076
  %1093 = vst.msk [vmem:[%s6 + $0x20] sm:$0xff] %vm549, %v1077
  %1094 = vst.msk [vmem:[%s6 + $0x28] sm:$0xff] %vm549, %v1078
  %1095 = vst.msk [vmem:[%s6 + $0x30] sm:$0xff] %vm549, %v1079
  %1096 = vst.msk [vmem:[%s6 + $0x38] sm:$0xff] %vm549, %v1080
  %1097 = vst.msk [vmem:[%s6 + $0x40] sm:$0xff] %vm549, %v1081
  %1098 = vst.msk [vmem:[%s6 + $0x48] sm:$0xff] %vm549, %v1082
  %1099 = vst.msk [vmem:[%s6 + $0x50] sm:$0xff] %vm549, %v1083
  %1100 = vst.msk [vmem:[%s6 + $0x58] sm:$0xff] %vm549, %v1084
  %1101 = vst.msk [vmem:[%s6 + $0x60] sm:$0xff] %vm549, %v1085
  %1102 = vst.msk [vmem:[%s6 + $0x68] sm:$0xff] %vm549, %v1086
  %1103 = vst.msk [vmem:[%s6 + $0x70] sm:$0xff] %vm549, %v1087
  %1104 = vst.msk [vmem:[%s6 + $0x78] sm:$0xff] %vm549, %v1088
  // Predicated region
  $region26: #{generator_forward.6} parent=0 // pred_check
    _
  $region27: #{generator_forward.6} parent=0 // pred_check_branch
    %1106 = sbr.rel (0) target = $region29
  $region28: #{generator_forward.6} parent=0 // pred_region
    _
  $region29: #{generator_forward.6} parent=0 // pred_fallthru
    _
  // Predicated region
  $region30: #{generator_forward.6} parent=0 // pred_check
    _
  $region31: #{generator_forward.6} parent=0 // pred_check_branch
    %1108 = sbr.rel (0) target = $region33
  $region32: #{generator_forward.6} parent=0 // pred_region
    _
  $region33: #{generator_forward.6} parent=0 // pred_fallthru
    _

// kernel: generator_forward.7
$region0: #{generator_forward.7}
  #allocation0 [shape = 'u32[]', space=smem, size = 0x4, offset = 0x4, fixed_abs, tag = 'smem constant byte address 0x4 - core index']
  #allocation1 [shape = 'u32[144,128]{1,0:T(1,128)}', space=vmem, size = 0x12000, scoped, tag = 'internal scratch']
  %s0 = inlined_call_operand.vmem [shape: bf16[512,144], index: 0, kind: input, shape index: {}]
  %s1 = inlined_call_operand.vmem [shape: bf16[144,12], index: 1, kind: input, shape index: {}]
  %s2 = inlined_call_operand.vmem [shape: f32[512,12], index: 2, kind: output, shape index: {}]
  %s3 = sld [smem:[#allocation0]]
  $region18: #{generator_forward.7} parent=0
    _
  %s5 = ssub.s32 1, %s3
  %s6 = scalar_select 0, %s5, %s3
  // Predicated region
  $region2: #{generator_forward.7} parent=0 // pred_check
    _
  $region3: #{generator_forward.7} parent=0 // pred_check_branch
    %8 = sbr.rel (0) target = $region5
  $region4: #{generator_forward.7} parent=0 // pred_region
    _
  $region5: #{generator_forward.7} parent=0 // pred_fallthru
    _
  // Predicated region
  $region6: #{generator_forward.7} parent=0 // pred_check
    _
  $region7: #{generator_forward.7} parent=0 // pred_check_branch
    %10 = sbr.rel (0) target = $region9
  $region8: #{generator_forward.7} parent=0 // pred_region
    _
  $region9: #{generator_forward.7} parent=0 // pred_fallthru
    _
  %v12 = vld [vmem:[%s0] sm:$0xff]
  %v13 = vld [vmem:[%s0 + $0x8] sm:$0xff]
  %v14 = vld [vmem:[%s0 + $0x10] sm:$0xff]
  %v15 = vld [vmem:[%s0 + $0x18] sm:$0xff]
  %v16 = vld [vmem:[%s0 + $0x20] sm:$0xff]
  %v17 = vld [vmem:[%s0 + $0x28] sm:$0xff]
  %v18 = vld [vmem:[%s0 + $0x30] sm:$0xff]
  %v19 = vld [vmem:[%s0 + $0x38] sm:$0xff]
  %v20 = vld [vmem:[%s0 + $0x40] sm:$0xff]
  %v21 = vld [vmem:[%s0 + $0x48] sm:$0xff]
  %v22 = vld [vmem:[%s0 + $0x50] sm:$0xff]
  %v23 = vld [vmem:[%s0 + $0x58] sm:$0xff]
  %v24 = vld [vmem:[%s0 + $0x60] sm:$0xff]
  %v25 = vld [vmem:[%s0 + $0x68] sm:$0xff]
  %v26 = vld [vmem:[%s0 + $0x70] sm:$0xff]
  %v27 = vld [vmem:[%s0 + $0x78] sm:$0xff]
  %v28 = vld [vmem:[%s0 + $0x80] sm:$0xff]
  %v29 = vld [vmem:[%s0 + $0x88] sm:$0xff]
  %v30 = vld [vmem:[%s0 + $0x90] sm:$0xff]
  %v31 = vld [vmem:[%s0 + $0x98] sm:$0xff]
  %v32 = vld [vmem:[%s0 + $0xa0] sm:$0xff]
  %v33 = vld [vmem:[%s0 + $0xa8] sm:$0xff]
  %v34 = vld [vmem:[%s0 + $0xb0] sm:$0xff]
  %v35 = vld [vmem:[%s0 + $0xb8] sm:$0xff]
  %v36 = vld [vmem:[%s0 + $0xc0] sm:$0xff]
  %v37 = vld [vmem:[%s0 + $0xc8] sm:$0xff]
  %v38 = vld [vmem:[%s0 + $0xd0] sm:$0xff]
  %v39 = vld [vmem:[%s0 + $0xd8] sm:$0xff]
  %v40 = vld [vmem:[%s0 + $0xe0] sm:$0xff]
  %v41 = vld [vmem:[%s0 + $0xe8] sm:$0xff]
  %v42 = vld [vmem:[%s0 + $0xf0] sm:$0xff]
  %v43 = vld [vmem:[%s0 + $0xf8] sm:$0xff]
  %v44 = vld [vmem:[%s0 + $0x100] sm:$0xff]
  %v45 = vld [vmem:[%s0 + $0x108] sm:$0xff]
  %v46 = vld [vmem:[%s0 + $0x110] sm:$0xff]
  %v47 = vld [vmem:[%s0 + $0x118] sm:$0xff]
  %v48 = vld [vmem:[%s0 + $0x120] sm:$0xff]
  %v49 = vld [vmem:[%s0 + $0x128] sm:$0xff]
  %v50 = vld [vmem:[%s0 + $0x130] sm:$0xff]
  %v51 = vld [vmem:[%s0 + $0x138] sm:$0xff]
  %v52 = vld [vmem:[%s0 + $0x140] sm:$0xff]
  %v53 = vld [vmem:[%s0 + $0x148] sm:$0xff]
  %v54 = vld [vmem:[%s0 + $0x150] sm:$0xff]
  %v55 = vld [vmem:[%s0 + $0x158] sm:$0xff]
  %v56 = vld [vmem:[%s0 + $0x160] sm:$0xff]
  %v57 = vld [vmem:[%s0 + $0x168] sm:$0xff]
  %v58 = vld [vmem:[%s0 + $0x170] sm:$0xff]
  %v59 = vld [vmem:[%s0 + $0x178] sm:$0xff]
  %v60 = vld [vmem:[%s0 + $0x180] sm:$0xff]
  %v61 = vld [vmem:[%s0 + $0x188] sm:$0xff]
  %v62 = vld [vmem:[%s0 + $0x190] sm:$0xff]
  %v63 = vld [vmem:[%s0 + $0x198] sm:$0xff]
  %v64 = vld [vmem:[%s0 + $0x1a0] sm:$0xff]
  %v65 = vld [vmem:[%s0 + $0x1a8] sm:$0xff]
  %v66 = vld [vmem:[%s0 + $0x1b0] sm:$0xff]
  %v67 = vld [vmem:[%s0 + $0x1b8] sm:$0xff]
  %v68 = vld [vmem:[%s0 + $0x1c0] sm:$0xff]
  %v69 = vld [vmem:[%s0 + $0x1c8] sm:$0xff]
  %v70 = vld [vmem:[%s0 + $0x1d0] sm:$0xff]
  %v71 = vld [vmem:[%s0 + $0x1d8] sm:$0xff]
  %v72 = vld [vmem:[%s0 + $0x1e0] sm:$0xff]
  %v73 = vld [vmem:[%s0 + $0x1e8] sm:$0xff]
  %v74 = vld [vmem:[%s0 + $0x1f0] sm:$0xff]
  %v75 = vld [vmem:[%s0 + $0x1f8] sm:$0xff]
  %v76 = vld [vmem:[%s1] sm:$0xf]
  %v77 = vld [vmem:[%s1 + $0x4] sm:$0xf]
  %v78 = vld [vmem:[%s1 + $0x8] sm:$0xf]
  %v79 = vld [vmem:[%s1 + $0xc] sm:$0xf]
  %v80 = vld [vmem:[%s1 + $0x10] sm:$0xf]
  %v81 = vld [vmem:[%s1 + $0x14] sm:$0xf]
  %v82 = vld [vmem:[%s1 + $0x18] sm:$0xf]
  %v83 = vld [vmem:[%s1 + $0x1c] sm:$0xf]
  %v84 = vld [vmem:[%s1 + $0x20] sm:$0xf]
  %v85 = vld [vmem:[%s1 + $0x24] sm:$0xf]
  %v86 = vld [vmem:[%s1 + $0x28] sm:$0xf]
  %v87 = vld [vmem:[%s1 + $0x2c] sm:$0xf]
  %v88 = vld [vmem:[%s1 + $0x30] sm:$0xf]
  %v89 = vld [vmem:[%s1 + $0x34] sm:$0xf]
  %v90 = vld [vmem:[%s1 + $0x38] sm:$0xf]
  %v91 = vld [vmem:[%s1 + $0x3c] sm:$0xf]
  %v92 = vld [vmem:[%s1 + $0x40] sm:$0xf]
  %v93 = vld [vmem:[%s1 + $0x44] sm:$0xf]
  %v158 = vunpack.c.l.b16 %v12
  %v159 = vunpack.c.h.b16 %v12
  %v160 = vunpack.c.l.b16 %v13
  %v161 = vunpack.c.h.b16 %v13
  %v162 = vunpack.c.l.b16 %v14
  %v163 = vunpack.c.h.b16 %v14
  %v164 = vunpack.c.l.b16 %v15
  %v165 = vunpack.c.h.b16 %v15
  %v166 = vunpack.c.l.b16 %v16
  %v167 = vunpack.c.h.b16 %v16
  %v168 = vunpack.c.l.b16 %v17
  %v169 = vunpack.c.h.b16 %v17
  %v170 = vunpack.c.l.b16 %v18
  %v171 = vunpack.c.h.b16 %v18
  %v172 = vunpack.c.l.b16 %v19
  %v173 = vunpack.c.h.b16 %v19
  %v174 = vunpack.c.l.b16 %v20
  %v175 = vunpack.c.h.b16 %v20
  %v176 = vunpack.c.l.b16 %v21
  %v177 = vunpack.c.h.b16 %v21
  %v178 = vunpack.c.l.b16 %v22
  %v179 = vunpack.c.h.b16 %v22
  %v180 = vunpack.c.l.b16 %v23
  %v181 = vunpack.c.h.b16 %v23
  %v182 = vunpack.c.l.b16 %v24
  %v183 = vunpack.c.h.b16 %v24
  %v184 = vunpack.c.l.b16 %v25
  %v185 = vunpack.c.h.b16 %v25
  %v186 = vunpack.c.l.b16 %v26
  %v187 = vunpack.c.h.b16 %v26
  %v188 = vunpack.c.l.b16 %v27
  %v189 = vunpack.c.h.b16 %v27
  %v190 = vunpack.c.l.b16 %v28
  %v191 = vunpack.c.h.b16 %v28
  %v192 = vunpack.c.l.b16 %v29
  %v193 = vunpack.c.h.b16 %v29
  %v194 = vunpack.c.l.b16 %v30
  %v195 = vunpack.c.h.b16 %v30
  %v196 = vunpack.c.l.b16 %v31
  %v197 = vunpack.c.h.b16 %v31
  %v198 = vunpack.c.l.b16 %v32
  %v199 = vunpack.c.h.b16 %v32
  %v200 = vunpack.c.l.b16 %v33
  %v201 = vunpack.c.h.b16 %v33
  %v202 = vunpack.c.l.b16 %v34
  %v203 = vunpack.c.h.b16 %v34
  %v204 = vunpack.c.l.b16 %v35
  %v205 = vunpack.c.h.b16 %v35
  %v206 = vunpack.c.l.b16 %v36
  %v207 = vunpack.c.h.b16 %v36
  %v208 = vunpack.c.l.b16 %v37
  %v209 = vunpack.c.h.b16 %v37
  %v210 = vunpack.c.l.b16 %v38
  %v211 = vunpack.c.h.b16 %v38
  %v212 = vunpack.c.l.b16 %v39
  %v213 = vunpack.c.h.b16 %v39
  %v214 = vunpack.c.l.b16 %v40
  %v215 = vunpack.c.h.b16 %v40
  %v216 = vunpack.c.l.b16 %v41
  %v217 = vunpack.c.h.b16 %v41
  %v218 = vunpack.c.l.b16 %v42
  %v219 = vunpack.c.h.b16 %v42
  %v220 = vunpack.c.l.b16 %v43
  %v221 = vunpack.c.h.b16 %v43
  %v222 = vunpack.c.l.b16 %v44
  %v223 = vunpack.c.h.b16 %v44
  %v224 = vunpack.c.l.b16 %v45
  %v225 = vunpack.c.h.b16 %v45
  %v226 = vunpack.c.l.b16 %v46
  %v227 = vunpack.c.h.b16 %v46
  %v228 = vunpack.c.l.b16 %v47
  %v229 = vunpack.c.h.b16 %v47
  %v230 = vunpack.c.l.b16 %v48
  %v231 = vunpack.c.h.b16 %v48
  %v232 = vunpack.c.l.b16 %v49
  %v233 = vunpack.c.h.b16 %v49
  %v234 = vunpack.c.l.b16 %v50
  %v235 = vunpack.c.h.b16 %v50
  %v236 = vunpack.c.l.b16 %v51
  %v237 = vunpack.c.h.b16 %v51
  %v238 = vunpack.c.l.b16 %v52
  %v239 = vunpack.c.h.b16 %v52
  %v240 = vunpack.c.l.b16 %v53
  %v241 = vunpack.c.h.b16 %v53
  %v242 = vunpack.c.l.b16 %v54
  %v243 = vunpack.c.h.b16 %v54
  %v244 = vunpack.c.l.b16 %v55
  %v245 = vunpack.c.h.b16 %v55
  %v246 = vunpack.c.l.b16 %v56
  %v247 = vunpack.c.h.b16 %v56
  %v248 = vunpack.c.l.b16 %v57
  %v249 = vunpack.c.h.b16 %v57
  %v250 = vunpack.c.l.b16 %v58
  %v251 = vunpack.c.h.b16 %v58
  %v252 = vunpack.c.l.b16 %v59
  %v253 = vunpack.c.h.b16 %v59
  %v254 = vunpack.c.l.b16 %v60
  %v255 = vunpack.c.h.b16 %v60
  %v256 = vunpack.c.l.b16 %v61
  %v257 = vunpack.c.h.b16 %v61
  %v258 = vunpack.c.l.b16 %v62
  %v259 = vunpack.c.h.b16 %v62
  %v260 = vunpack.c.l.b16 %v63
  %v261 = vunpack.c.h.b16 %v63
  %v262 = vunpack.c.l.b16 %v64
  %v263 = vunpack.c.h.b16 %v64
  %v264 = vunpack.c.l.b16 %v65
  %v265 = vunpack.c.h.b16 %v65
  %v266 = vunpack.c.l.b16 %v66
  %v267 = vunpack.c.h.b16 %v66
  %v268 = vunpack.c.l.b16 %v67
  %v269 = vunpack.c.h.b16 %v67
  %v270 = vunpack.c.l.b16 %v68
  %v271 = vunpack.c.h.b16 %v68
  %v272 = vunpack.c.l.b16 %v69
  %v273 = vunpack.c.h.b16 %v69
  %v274 = vunpack.c.l.b16 %v70
  %v275 = vunpack.c.h.b16 %v70
  %v276 = vunpack.c.l.b16 %v71
  %v277 = vunpack.c.h.b16 %v71
  %v278 = vunpack.c.l.b16 %v72
  %v279 = vunpack.c.h.b16 %v72
  %v280 = vunpack.c.l.b16 %v73
  %v281 = vunpack.c.h.b16 %v73
  %v282 = vunpack.c.l.b16 %v74
  %v283 = vunpack.c.h.b16 %v74
  %v284 = vunpack.c.l.b16 %v75
  %v285 = vunpack.c.h.b16 %v75
  %v286 = vpack.c.b16 %v160, %v158
  %v287 = vpack.c.b16 %v161, %v159
  %v288 = vpack.c.b16 %v164, %v162
  %v289 = vpack.c.b16 %v165, %v163
  %v290 = vpack.c.b16 %v168, %v166
  %v291 = vpack.c.b16 %v169, %v167
  %v292 = vpack.c.b16 %v172, %v170
  %v293 = vpack.c.b16 %v173, %v171
  %v294 = vpack.c.b16 %v176, %v174
  %v295 = vpack.c.b16 %v177, %v175
  %v296 = vpack.c.b16 %v180, %v178
  %v297 = vpack.c.b16 %v181, %v179
  %v298 = vpack.c.b16 %v184, %v182
  %v299 = vpack.c.b16 %v185, %v183
  %v300 = vpack.c.b16 %v188, %v186
  %v301 = vpack.c.b16 %v189, %v187
  %v302 = vpack.c.b16 %v192, %v190
  %v303 = vpack.c.b16 %v193, %v191
  %v304 = vpack.c.b16 %v196, %v194
  %v305 = vpack.c.b16 %v197, %v195
  %v306 = vpack.c.b16 %v200, %v198
  %v307 = vpack.c.b16 %v201, %v199
  %v308 = vpack.c.b16 %v204, %v202
  %v309 = vpack.c.b16 %v205, %v203
  %v310 = vpack.c.b16 %v208, %v206
  %v311 = vpack.c.b16 %v209, %v207
  %v312 = vpack.c.b16 %v212, %v210
  %v313 = vpack.c.b16 %v213, %v211
  %v314 = vpack.c.b16 %v216, %v214
  %v315 = vpack.c.b16 %v217, %v215
  %v316 = vpack.c.b16 %v220, %v218
  %v317 = vpack.c.b16 %v221, %v219
  %v318 = vpack.c.b16 %v224, %v222
  %v319 = vpack.c.b16 %v225, %v223
  %v320 = vpack.c.b16 %v228, %v226
  %v321 = vpack.c.b16 %v229, %v227
  %v322 = vpack.c.b16 %v232, %v230
  %v323 = vpack.c.b16 %v233, %v231
  %v324 = vpack.c.b16 %v236, %v234
  %v325 = vpack.c.b16 %v237, %v235
  %v326 = vpack.c.b16 %v240, %v238
  %v327 = vpack.c.b16 %v241, %v239
  %v328 = vpack.c.b16 %v244, %v242
  %v329 = vpack.c.b16 %v245, %v243
  %v330 = vpack.c.b16 %v248, %v246
  %v331 = vpack.c.b16 %v249, %v247
  %v332 = vpack.c.b16 %v252, %v250
  %v333 = vpack.c.b16 %v253, %v251
  %v334 = vpack.c.b16 %v256, %v254
  %v335 = vpack.c.b16 %v257, %v255
  %v336 = vpack.c.b16 %v260, %v258
  %v337 = vpack.c.b16 %v261, %v259
  %v338 = vpack.c.b16 %v264, %v262
  %v339 = vpack.c.b16 %v265, %v263
  %v340 = vpack.c.b16 %v268, %v266
  %v341 = vpack.c.b16 %v269, %v267
  %v342 = vpack.c.b16 %v272, %v270
  %v343 = vpack.c.b16 %v273, %v271
  %v344 = vpack.c.b16 %v276, %v274
  %v345 = vpack.c.b16 %v277, %v275
  %v346 = vpack.c.b16 %v280, %v278
  %v347 = vpack.c.b16 %v281, %v279
  %v348 = vpack.c.b16 %v284, %v282
  %v349 = vpack.c.b16 %v285, %v283
  %v400 = vunpack.c.l.b16 %v76
  %v401 = vunpack.c.l.b16 %v77
  %v402 = vunpack.c.l.b16 %v78
  %v403 = vunpack.c.l.b16 %v79
  %v404 = vunpack.c.l.b16 %v80
  %v405 = vunpack.c.l.b16 %v81
  %v406 = vunpack.c.l.b16 %v82
  %v407 = vunpack.c.l.b16 %v83
  %v408 = vunpack.c.l.b16 %v84
  %v409 = vunpack.c.l.b16 %v85
  %v410 = vunpack.c.l.b16 %v86
  %v411 = vunpack.c.l.b16 %v87
  %v412 = vunpack.c.l.b16 %v88
  %v413 = vunpack.c.l.b16 %v89
  %v414 = vunpack.c.l.b16 %v90
  %v415 = vunpack.c.l.b16 %v91
  %v416 = vunpack.c.l.b16 %v92
  %v417 = vunpack.c.l.b16 %v93
  %v418 = vpack.c.b16 %v401, %v400
  %v419 = vpack.c.b16 %v403, %v402
  %v420 = vpack.c.b16 %v405, %v404
  %v421 = vpack.c.b16 %v407, %v406
  %v422 = vpack.c.b16 %v409, %v408
  %v423 = vpack.c.b16 %v411, %v410
  %v424 = vpack.c.b16 %v413, %v412
  %v425 = vpack.c.b16 %v415, %v414
  %v426 = vpack.c.b16 %v417, %v416
  %vm436 = vcmask 130048
  %v438 = vsel %vm436, %v287, 0
  %v441 = vsel %vm436, %v289, 0
  %v444 = vsel %vm436, %v291, 0
  %v447 = vsel %vm436, %v293, 0
  %v450 = vsel %vm436, %v295, 0
  %v453 = vsel %vm436, %v297, 0
  %v456 = vsel %vm436, %v299, 0
  %v459 = vsel %vm436, %v301, 0
  %v462 = vsel %vm436, %v303, 0
  %v465 = vsel %vm436, %v305, 0
  %v468 = vsel %vm436, %v307, 0
  %v471 = vsel %vm436, %v309, 0
  %v474 = vsel %vm436, %v311, 0
  %v477 = vsel %vm436, %v313, 0
  %v480 = vsel %vm436, %v315, 0
  %v483 = vsel %vm436, %v317, 0
  %v486 = vsel %vm436, %v319, 0
  %v489 = vsel %vm436, %v321, 0
  %v492 = vsel %vm436, %v323, 0
  %v495 = vsel %vm436, %v325, 0
  %v498 = vsel %vm436, %v327, 0
  %v501 = vsel %vm436, %v329, 0
  %v504 = vsel %vm436, %v331, 0
  %v507 = vsel %vm436, %v333, 0
  %v510 = vsel %vm436, %v335, 0
  %v513 = vsel %vm436, %v337, 0
  %v516 = vsel %vm436, %v339, 0
  %v519 = vsel %vm436, %v341, 0
  %v522 = vsel %vm436, %v343, 0
  %v525 = vsel %vm436, %v345, 0
  %v528 = vsel %vm436, %v347, 0
  %v531 = vsel %vm436, %v349, 0
  %533 = vmatprep.subr.bf16.mxu0 0
  %534 = vmatpush1.bf16.msra.mxu0 %v418
  %535 = vmatprep.subr.bf16.mxu0 0
  %536 = vmatpush1.bf16.msra.mxu0 %v419
  %537 = vmatprep.subr.bf16.mxu0 0
  %538 = vmatpush1.bf16.msra.mxu0 %v420
  %539 = vmatprep.subr.bf16.mxu0 0
  %540 = vmatpush1.bf16.msra.mxu0 %v421
  %541 = vmatprep.subr.bf16.mxu0 0
  %542 = vmatpush1.bf16.msra.mxu0 %v422
  %543 = vmatprep.subr.bf16.mxu0 0
  %544 = vmatpush1.bf16.msra.mxu0 %v423
  %545 = vmatprep.subr.bf16.mxu0 0
  %546 = vmatpush1.bf16.msra.mxu0 %v424
  %547 = vmatprep.subr.bf16.mxu0 0
  %548 = vmatpush1.bf16.msra.mxu0 %v425
  %549 = vmatprep.subr.bf16.mxu0 0
  %550 = vmatpush1.bf16.msra.mxu0 %v426
  %551 = vmatprep.subr.bf16.mxu0 0
  %552 = vmatpush1.bf16.msra.mxu0 0
  %553 = vmatprep.subr.bf16.mxu0 0
  %554 = vmatpush1.bf16.msra.mxu0 0
  %555 = vmatprep.subr.bf16.mxu0 0
  %556 = vmatpush1.bf16.msra.mxu0 0
  %557 = vmatprep.subr.bf16.mxu0 0
  %558 = vmatpush1.bf16.msra.mxu0 0
  %559 = vmatprep.subr.bf16.mxu0 0
  %560 = vmatpush1.bf16.msra.mxu0 0
  %561 = vmatprep.subr.bf16.mxu0 0
  %562 = vmatpush1.bf16.msra.mxu0 0
  %563 = vmatprep.subr.bf16.mxu0 0
  %564 = vmatpush1.bf16.msra.mxu0 0
  %565 = vmatprep.mubr.bf16.mxu0 %v438
  %566 = vmatmul.mubr.bf16.gmra.mrb[0].mxu0 %v286
  %v567 = vpop.f32.mrb[0].mxu0
  %v568 = vadd.f32 0.0, %v567
  %v569 = vpop.f32.mrb[0].mxu0
  %v570 = vpop.f32.mrb[0].mxu0
  %v571 = vadd.f32 0.0, %v570
  %v572 = vpop.f32.mrb[0].mxu0
  %573 = vmatprep.mubr.bf16.mxu0 %v441
  %574 = vmatmul.mubr.bf16.gmra.mrb[0].mxu0 %v288
  %v575 = vpop.f32.mrb[0].mxu0
  %v576 = vadd.f32 0.0, %v575
  %v577 = vpop.f32.mrb[0].mxu0
  %v578 = vpop.f32.mrb[0].mxu0
  %v579 = vadd.f32 0.0, %v578
  %v580 = vpop.f32.mrb[0].mxu0
  %581 = vmatprep.mubr.bf16.mxu0 %v444
  %582 = vmatmul.mubr.bf16.gmra.mrb[0].mxu0 %v290
  %v583 = vpop.f32.mrb[0].mxu0
  %v584 = vadd.f32 0.0, %v583
  %v585 = vpop.f32.mrb[0].mxu0
  %v586 = vpop.f32.mrb[0].mxu0
  %v587 = vadd.f32 0.0, %v586
  %v588 = vpop.f32.mrb[0].mxu0
  %589 = vmatprep.mubr.bf16.mxu0 %v447
  %590 = vmatmul.mubr.bf16.gmra.mrb[0].mxu0 %v292
  %v591 = vpop.f32.mrb[0].mxu0
  %v592 = vadd.f32 0.0, %v591
  %v593 = vpop.f32.mrb[0].mxu0
  %v594 = vpop.f32.mrb[0].mxu0
  %v595 = vadd.f32 0.0, %v594
  %v596 = vpop.f32.mrb[0].mxu0
  %597 = vmatprep.mubr.bf16.mxu0 %v450
  %598 = vmatmul.mubr.bf16.gmra.mrb[0].mxu0 %v294
  %v599 = vpop.f32.mrb[0].mxu0
  %v600 = vadd.f32 0.0, %v599
  %v601 = vpop.f32.mrb[0].mxu0
  %v602 = vpop.f32.mrb[0].mxu0
  %v603 = vadd.f32 0.0, %v602
  %v604 = vpop.f32.mrb[0].mxu0
  %605 = vmatprep.mubr.bf16.mxu0 %v453
  %606 = vmatmul.mubr.bf16.gmra.mrb[0].mxu0 %v296
  %v607 = vpop.f32.mrb[0].mxu0
  %v608 = vadd.f32 0.0, %v607
  %v609 = vpop.f32.mrb[0].mxu0
  %v610 = vpop.f32.mrb[0].mxu0
  %v611 = vadd.f32 0.0, %v610
  %v612 = vpop.f32.mrb[0].mxu0
  %613 = vmatprep.mubr.bf16.mxu0 %v456
  %614 = vmatmul.mubr.bf16.gmra.mrb[0].mxu0 %v298
  %v615 = vpop.f32.mrb[0].mxu0
  %v616 = vadd.f32 0.0, %v615
  %v617 = vpop.f32.mrb[0].mxu0
  %v618 = vpop.f32.mrb[0].mxu0
  %v619 = vadd.f32 0.0, %v618
  %v620 = vpop.f32.mrb[0].mxu0
  %621 = vmatprep.mubr.bf16.mxu0 %v459
  %622 = vmatmul.mubr.bf16.gmra.mrb[0].mxu0 %v300
  %v623 = vpop.f32.mrb[0].mxu0
  %v624 = vadd.f32 0.0, %v623
  %v625 = vpop.f32.mrb[0].mxu0
  %v626 = vpop.f32.mrb[0].mxu0
  %v627 = vadd.f32 0.0, %v626
  %v628 = vpop.f32.mrb[0].mxu0
  %629 = vmatprep.mubr.bf16.mxu0 %v462
  %630 = vmatmul.mubr.bf16.gmra.mrb[0].mxu0 %v302
  %v631 = vpop.f32.mrb[0].mxu0
  %v632 = vadd.f32 0.0, %v631
  %v633 = vpop.f32.mrb[0].mxu0
  %v634 = vpop.f32.mrb[0].mxu0
  %v635 = vadd.f32 0.0, %v634
  %v636 = vpop.f32.mrb[0].mxu0
  %637 = vmatprep.mubr.bf16.mxu0 %v465
  %638 = vmatmul.mubr.bf16.gmra.mrb[0].mxu0 %v304
  %v639 = vpop.f32.mrb[0].mxu0
  %v640 = vadd.f32 0.0, %v639
  %v641 = vpop.f32.mrb[0].mxu0
  %v642 = vpop.f32.mrb[0].mxu0
  %v643 = vadd.f32 0.0, %v642
  %v644 = vpop.f32.mrb[0].mxu0
  %645 = vmatprep.mubr.bf16.mxu0 %v468
  %646 = vmatmul.mubr.bf16.gmra.mrb[0].mxu0 %v306
  %v647 = vpop.f32.mrb[0].mxu0
  %v648 = vadd.f32 0.0, %v647
  %v649 = vpop.f32.mrb[0].mxu0
  %v650 = vpop.f32.mrb[0].mxu0
  %v651 = vadd.f32 0.0, %v650
  %v652 = vpop.f32.mrb[0].mxu0
  %653 = vmatprep.mubr.bf16.mxu0 %v471
  %654 = vmatmul.mubr.bf16.gmra.mrb[0].mxu0 %v308
  %v655 = vpop.f32.mrb[0].mxu0
  %v656 = vadd.f32 0.0, %v655
  %v657 = vpop.f32.mrb[0].mxu0
  %v658 = vpop.f32.mrb[0].mxu0
  %v659 = vadd.f32 0.0, %v658
  %v660 = vpop.f32.mrb[0].mxu0
  %661 = vmatprep.mubr.bf16.mxu0 %v474
  %662 = vmatmul.mubr.bf16.gmra.mrb[0].mxu0 %v310
  %v663 = vpop.f32.mrb[0].mxu0
  %v664 = vadd.f32 0.0, %v663
  %v665 = vpop.f32.mrb[0].mxu0
  %v666 = vpop.f32.mrb[0].mxu0
  %v667 = vadd.f32 0.0, %v666
  %v668 = vpop.f32.mrb[0].mxu0
  %669 = vmatprep.mubr.bf16.mxu0 %v477
  %670 = vmatmul.mubr.bf16.gmra.mrb[0].mxu0 %v312
  %v671 = vpop.f32.mrb[0].mxu0
  %v672 = vadd.f32 0.0, %v671
  %v673 = vpop.f32.mrb[0].mxu0
  %v674 = vpop.f32.mrb[0].mxu0
  %v675 = vadd.f32 0.0, %v674
  %v676 = vpop.f32.mrb[0].mxu0
  %677 = vmatprep.mubr.bf16.mxu0 %v480
  %678 = vmatmul.mubr.bf16.gmra.mrb[0].mxu0 %v314
  %v679 = vpop.f32.mrb[0].mxu0
  %v680 = vadd.f32 0.0, %v679
  %v681 = vpop.f32.mrb[0].mxu0
  %v682 = vpop.f32.mrb[0].mxu0
  %v683 = vadd.f32 0.0, %v682
  %v684 = vpop.f32.mrb[0].mxu0
  %685 = vmatprep.mubr.bf16.mxu0 %v483
  %686 = vmatmul.mubr.bf16.gmra.mrb[0].mxu0 %v316
  %v687 = vpop.f32.mrb[0].mxu0
  %v688 = vadd.f32 0.0, %v687
  %v689 = vpop.f32.mrb[0].mxu0
  %v690 = vpop.f32.mrb[0].mxu0
  %v691 = vadd.f32 0.0, %v690
  %v692 = vpop.f32.mrb[0].mxu0
  %693 = vmatprep.mubr.bf16.mxu0 %v486
  %694 = vmatmul.mubr.bf16.gmra.mrb[0].mxu0 %v318
  %v695 = vpop.f32.mrb[0].mxu0
  %v696 = vadd.f32 0.0, %v695
  %v697 = vpop.f32.mrb[0].mxu0
  %v698 = vpop.f32.mrb[0].mxu0
  %v699 = vadd.f32 0.0, %v698
  %v700 = vpop.f32.mrb[0].mxu0
  %701 = vmatprep.mubr.bf16.mxu0 %v489
  %702 = vmatmul.mubr.bf16.gmra.mrb[0].mxu0 %v320
  %v703 = vpop.f32.mrb[0].mxu0
  %v704 = vadd.f32 0.0, %v703
  %v705 = vpop.f32.mrb[0].mxu0
  %v706 = vpop.f32.mrb[0].mxu0
  %v707 = vadd.f32 0.0, %v706
  %v708 = vpop.f32.mrb[0].mxu0
  %709 = vmatprep.mubr.bf16.mxu0 %v492
  %710 = vmatmul.mubr.bf16.gmra.mrb[0].mxu0 %v322
  %v711 = vpop.f32.mrb[0].mxu0
  %v712 = vadd.f32 0.0, %v711
  %v713 = vpop.f32.mrb[0].mxu0
  %v714 = vpop.f32.mrb[0].mxu0
  %v715 = vadd.f32 0.0, %v714
  %v716 = vpop.f32.mrb[0].mxu0
  %717 = vmatprep.mubr.bf16.mxu0 %v495
  %718 = vmatmul.mubr.bf16.gmra.mrb[0].mxu0 %v324
  %v719 = vpop.f32.mrb[0].mxu0
  %v720 = vadd.f32 0.0, %v719
  %v721 = vpop.f32.mrb[0].mxu0
  %v722 = vpop.f32.mrb[0].mxu0
  %v723 = vadd.f32 0.0, %v722
  %v724 = vpop.f32.mrb[0].mxu0
  %725 = vmatprep.mubr.bf16.mxu0 %v498
  %726 = vmatmul.mubr.bf16.gmra.mrb[0].mxu0 %v326
  %v727 = vpop.f32.mrb[0].mxu0
  %v728 = vadd.f32 0.0, %v727
  %v729 = vpop.f32.mrb[0].mxu0
  %v730 = vpop.f32.mrb[0].mxu0
  %v731 = vadd.f32 0.0, %v730
  %v732 = vpop.f32.mrb[0].mxu0
  %733 = vmatprep.mubr.bf16.mxu0 %v501
  %734 = vmatmul.mubr.bf16.gmra.mrb[0].mxu0 %v328
  %v735 = vpop.f32.mrb[0].mxu0
  %v736 = vadd.f32 0.0, %v735
  %v737 = vpop.f32.mrb[0].mxu0
  %v738 = vpop.f32.mrb[0].mxu0
  %v739 = vadd.f32 0.0, %v738
  %v740 = vpop.f32.mrb[0].mxu0
  %741 = vmatprep.mubr.bf16.mxu0 %v504
  %742 = vmatmul.mubr.bf16.gmra.mrb[0].mxu0 %v330
  %v743 = vpop.f32.mrb[0].mxu0
  %v744 = vadd.f32 0.0, %v743
  %v745 = vpop.f32.mrb[0].mxu0
  %v746 = vpop.f32.mrb[0].mxu0
  %v747 = vadd.f32 0.0, %v746
  %v748 = vpop.f32.mrb[0].mxu0
  %749 = vmatprep.mubr.bf16.mxu0 %v507
  %750 = vmatmul.mubr.bf16.gmra.mrb[0].mxu0 %v332
  %v751 = vpop.f32.mrb[0].mxu0
  %v752 = vadd.f32 0.0, %v751
  %v753 = vpop.f32.mrb[0].mxu0
  %v754 = vpop.f32.mrb[0].mxu0
  %v755 = vadd.f32 0.0, %v754
  %v756 = vpop.f32.mrb[0].mxu0
  %757 = vmatprep.mubr.bf16.mxu0 %v510
  %758 = vmatmul.mubr.bf16.gmra.mrb[0].mxu0 %v334
  %v759 = vpop.f32.mrb[0].mxu0
  %v760 = vadd.f32 0.0, %v759
  %v761 = vpop.f32.mrb[0].mxu0
  %v762 = vpop.f32.mrb[0].mxu0
  %v763 = vadd.f32 0.0, %v762
  %v764 = vpop.f32.mrb[0].mxu0
  %765 = vmatprep.mubr.bf16.mxu0 %v513
  %766 = vmatmul.mubr.bf16.gmra.mrb[0].mxu0 %v336
  %v767 = vpop.f32.mrb[0].mxu0
  %v768 = vadd.f32 0.0, %v767
  %v769 = vpop.f32.mrb[0].mxu0
  %v770 = vpop.f32.mrb[0].mxu0
  %v771 = vadd.f32 0.0, %v770
  %v772 = vpop.f32.mrb[0].mxu0
  %773 = vmatprep.mubr.bf16.mxu0 %v516
  %774 = vmatmul.mubr.bf16.gmra.mrb[0].mxu0 %v338
  %v775 = vpop.f32.mrb[0].mxu0
  %v776 = vadd.f32 0.0, %v775
  %v777 = vpop.f32.mrb[0].mxu0
  %v778 = vpop.f32.mrb[0].mxu0
  %v779 = vadd.f32 0.0, %v778
  %v780 = vpop.f32.mrb[0].mxu0
  %781 = vmatprep.mubr.bf16.mxu0 %v519
  %782 = vmatmul.mubr.bf16.gmra.mrb[0].mxu0 %v340
  %v783 = vpop.f32.mrb[0].mxu0
  %v784 = vadd.f32 0.0, %v783
  %v785 = vpop.f32.mrb[0].mxu0
  %v786 = vpop.f32.mrb[0].mxu0
  %v787 = vadd.f32 0.0, %v786
  %v788 = vpop.f32.mrb[0].mxu0
  %789 = vmatprep.mubr.bf16.mxu0 %v522
  %790 = vmatmul.mubr.bf16.gmra.mrb[0].mxu0 %v342
  %v791 = vpop.f32.mrb[0].mxu0
  %v792 = vadd.f32 0.0, %v791
  %v793 = vpop.f32.mrb[0].mxu0
  %v794 = vpop.f32.mrb[0].mxu0
  %v795 = vadd.f32 0.0, %v794
  %v796 = vpop.f32.mrb[0].mxu0
  %797 = vmatprep.mubr.bf16.mxu0 %v525
  %798 = vmatmul.mubr.bf16.gmra.mrb[0].mxu0 %v344
  %v799 = vpop.f32.mrb[0].mxu0
  %v800 = vadd.f32 0.0, %v799
  %v801 = vpop.f32.mrb[0].mxu0
  %v802 = vpop.f32.mrb[0].mxu0
  %v803 = vadd.f32 0.0, %v802
  %v804 = vpop.f32.mrb[0].mxu0
  %805 = vmatprep.mubr.bf16.mxu0 %v528
  %806 = vmatmul.mubr.bf16.gmra.mrb[0].mxu0 %v346
  %v807 = vpop.f32.mrb[0].mxu0
  %v808 = vadd.f32 0.0, %v807
  %v809 = vpop.f32.mrb[0].mxu0
  %v810 = vpop.f32.mrb[0].mxu0
  %v811 = vadd.f32 0.0, %v810
  %v812 = vpop.f32.mrb[0].mxu0
  %813 = vmatprep.mubr.bf16.mxu0 %v531
  %814 = vmatmul.mubr.bf16.gmra.mrb[0].mxu0 %v348
  %v815 = vpop.f32.mrb[0].mxu0
  %v816 = vadd.f32 0.0, %v815
  %v817 = vpop.f32.mrb[0].mxu0
  %v818 = vpop.f32.mrb[0].mxu0
  %v819 = vadd.f32 0.0, %v818
  %v820 = vpop.f32.mrb[0].mxu0
  %821 = vdwg.mxu0
  %v822 = vtanh.pop %v568
  %v823 = vtanh.pop %v571
  %v824 = vtanh.pop %v576
  %v825 = vtanh.pop %v579
  %v826 = vtanh.pop %v584
  %v827 = vtanh.pop %v587
  %v828 = vtanh.pop %v592
  %v829 = vtanh.pop %v595
  %v830 = vtanh.pop %v600
  %v831 = vtanh.pop %v603
  %v832 = vtanh.pop %v608
  %v833 = vtanh.pop %v611
  %v834 = vtanh.pop %v616
  %v835 = vtanh.pop %v619
  %v836 = vtanh.pop %v624
  %v837 = vtanh.pop %v627
  %v838 = vtanh.pop %v632
  %v839 = vtanh.pop %v635
  %v840 = vtanh.pop %v640
  %v841 = vtanh.pop %v643
  %v842 = vtanh.pop %v648
  %v843 = vtanh.pop %v651
  %v844 = vtanh.pop %v656
  %v845 = vtanh.pop %v659
  %v846 = vtanh.pop %v664
  %v847 = vtanh.pop %v667
  %v848 = vtanh.pop %v672
  %v849 = vtanh.pop %v675
  %v850 = vtanh.pop %v680
  %v851 = vtanh.pop %v683
  %v852 = vtanh.pop %v688
  %v853 = vtanh.pop %v691
  %v854 = vtanh.pop %v696
  %v855 = vtanh.pop %v699
  %v856 = vtanh.pop %v704
  %v857 = vtanh.pop %v707
  %v858 = vtanh.pop %v712
  %v859 = vtanh.pop %v715
  %v860 = vtanh.pop %v720
  %v861 = vtanh.pop %v723
  %v862 = vtanh.pop %v728
  %v863 = vtanh.pop %v731
  %v864 = vtanh.pop %v736
  %v865 = vtanh.pop %v739
  %v866 = vtanh.pop %v744
  %v867 = vtanh.pop %v747
  %v868 = vtanh.pop %v752
  %v869 = vtanh.pop %v755
  %v870 = vtanh.pop %v760
  %v871 = vtanh.pop %v763
  %v872 = vtanh.pop %v768
  %v873 = vtanh.pop %v771
  %v874 = vtanh.pop %v776
  %v875 = vtanh.pop %v779
  %v876 = vtanh.pop %v784
  %v877 = vtanh.pop %v787
  %v878 = vtanh.pop %v792
  %v879 = vtanh.pop %v795
  %v880 = vtanh.pop %v800
  %v881 = vtanh.pop %v803
  %v882 = vtanh.pop %v808
  %v883 = vtanh.pop %v811
  %v884 = vtanh.pop %v816
  %v885 = vtanh.pop %v819
  %vm886 = vcmask 97280
  %887 = vst.msk [vmem:[%s2] sm:$0xff] %vm886, %v822
  %888 = vst.msk [vmem:[%s2 + $0x8] sm:$0xff] %vm886, %v823
  %889 = vst.msk [vmem:[%s2 + $0x10] sm:$0xff] %vm886, %v824
  %890 = vst.msk [vmem:[%s2 + $0x18] sm:$0xff] %vm886, %v825
  %891 = vst.msk [vmem:[%s2 + $0x20] sm:$0xff] %vm886, %v826
  %892 = vst.msk [vmem:[%s2 + $0x28] sm:$0xff] %vm886, %v827
  %893 = vst.msk [vmem:[%s2 + $0x30] sm:$0xff] %vm886, %v828
  %894 = vst.msk [vmem:[%s2 + $0x38] sm:$0xff] %vm886, %v829
  %895 = vst.msk [vmem:[%s2 + $0x40] sm:$0xff] %vm886, %v830
  %896 = vst.msk [vmem:[%s2 + $0x48] sm:$0xff] %vm886, %v831
  %897 = vst.msk [vmem:[%s2 + $0x50] sm:$0xff] %vm886, %v832
  %898 = vst.msk [vmem:[%s2 + $0x58] sm:$0xff] %vm886, %v833
  %899 = vst.msk [vmem:[%s2 + $0x60] sm:$0xff] %vm886, %v834
  %900 = vst.msk [vmem:[%s2 + $0x68] sm:$0xff] %vm886, %v835
  %901 = vst.msk [vmem:[%s2 + $0x70] sm:$0xff] %vm886, %v836
  %902 = vst.msk [vmem:[%s2 + $0x78] sm:$0xff] %vm886, %v837
  %903 = vst.msk [vmem:[%s2 + $0x80] sm:$0xff] %vm886, %v838
  %904 = vst.msk [vmem:[%s2 + $0x88] sm:$0xff] %vm886, %v839
  %905 = vst.msk [vmem:[%s2 + $0x90] sm:$0xff] %vm886, %v840
  %906 = vst.msk [vmem:[%s2 + $0x98] sm:$0xff] %vm886, %v841
  %907 = vst.msk [vmem:[%s2 + $0xa0] sm:$0xff] %vm886, %v842
  %908 = vst.msk [vmem:[%s2 + $0xa8] sm:$0xff] %vm886, %v843
  %909 = vst.msk [vmem:[%s2 + $0xb0] sm:$0xff] %vm886, %v844
  %910 = vst.msk [vmem:[%s2 + $0xb8] sm:$0xff] %vm886, %v845
  %911 = vst.msk [vmem:[%s2 + $0xc0] sm:$0xff] %vm886, %v846
  %912 = vst.msk [vmem:[%s2 + $0xc8] sm:$0xff] %vm886, %v847
  %913 = vst.msk [vmem:[%s2 + $0xd0] sm:$0xff] %vm886, %v848
  %914 = vst.msk [vmem:[%s2 + $0xd8] sm:$0xff] %vm886, %v849
  %915 = vst.msk [vmem:[%s2 + $0xe0] sm:$0xff] %vm886, %v850
  %916 = vst.msk [vmem:[%s2 + $0xe8] sm:$0xff] %vm886, %v851
  %917 = vst.msk [vmem:[%s2 + $0xf0] sm:$0xff] %vm886, %v852
  %918 = vst.msk [vmem:[%s2 + $0xf8] sm:$0xff] %vm886, %v853
  %919 = vst.msk [vmem:[%s2 + $0x100] sm:$0xff] %vm886, %v854
  %920 = vst.msk [vmem:[%s2 + $0x108] sm:$0xff] %vm886, %v855
  %921 = vst.msk [vmem:[%s2 + $0x110] sm:$0xff] %vm886, %v856
  %922 = vst.msk [vmem:[%s2 + $0x118] sm:$0xff] %vm886, %v857
  %923 = vst.msk [vmem:[%s2 + $0x120] sm:$0xff] %vm886, %v858
  %924 = vst.msk [vmem:[%s2 + $0x128] sm:$0xff] %vm886, %v859
  %925 = vst.msk [vmem:[%s2 + $0x130] sm:$0xff] %vm886, %v860
  %926 = vst.msk [vmem:[%s2 + $0x138] sm:$0xff] %vm886, %v861
  %927 = vst.msk [vmem:[%s2 + $0x140] sm:$0xff] %vm886, %v862
  %928 = vst.msk [vmem:[%s2 + $0x148] sm:$0xff] %vm886, %v863
  %929 = vst.msk [vmem:[%s2 + $0x150] sm:$0xff] %vm886, %v864
  %930 = vst.msk [vmem:[%s2 + $0x158] sm:$0xff] %vm886, %v865
  %931 = vst.msk [vmem:[%s2 + $0x160] sm:$0xff] %vm886, %v866
  %932 = vst.msk [vmem:[%s2 + $0x168] sm:$0xff] %vm886, %v867
  %933 = vst.msk [vmem:[%s2 + $0x170] sm:$0xff] %vm886, %v868
  %934 = vst.msk [vmem:[%s2 + $0x178] sm:$0xff] %vm886, %v869
  %935 = vst.msk [vmem:[%s2 + $0x180] sm:$0xff] %vm886, %v870
  %936 = vst.msk [vmem:[%s2 + $0x188] sm:$0xff] %vm886, %v871
  %937 = vst.msk [vmem:[%s2 + $0x190] sm:$0xff] %vm886, %v872
  %938 = vst.msk [vmem:[%s2 + $0x198] sm:$0xff] %vm886, %v873
  %939 = vst.msk [vmem:[%s2 + $0x1a0] sm:$0xff] %vm886, %v874
  %940 = vst.msk [vmem:[%s2 + $0x1a8] sm:$0xff] %vm886, %v875
  %941 = vst.msk [vmem:[%s2 + $0x1b0] sm:$0xff] %vm886, %v876
  %942 = vst.msk [vmem:[%s2 + $0x1b8] sm:$0xff] %vm886, %v877
  %943 = vst.msk [vmem:[%s2 + $0x1c0] sm:$0xff] %vm886, %v878
  %944 = vst.msk [vmem:[%s2 + $0x1c8] sm:$0xff] %vm886, %v879
  %945 = vst.msk [vmem:[%s2 + $0x1d0] sm:$0xff] %vm886, %v880
  %946 = vst.msk [vmem:[%s2 + $0x1d8] sm:$0xff] %vm886, %v881
  %947 = vst.msk [vmem:[%s2 + $0x1e0] sm:$0xff] %vm886, %v882
  %948 = vst.msk [vmem:[%s2 + $0x1e8] sm:$0xff] %vm886, %v883
  %949 = vst.msk [vmem:[%s2 + $0x1f0] sm:$0xff] %vm886, %v884
  %950 = vst.msk [vmem:[%s2 + $0x1f8] sm:$0xff] %vm886, %v885
  // Predicated region
  $region10: #{generator_forward.7} parent=0 // pred_check
    _
  $region11: #{generator_forward.7} parent=0 // pred_check_branch
    %952 = sbr.rel (0) target = $region13
  $region12: #{generator_forward.7} parent=0 // pred_region
    _
  $region13: #{generator_forward.7} parent=0 // pred_fallthru
    _
  // Predicated region
  $region14: #{generator_forward.7} parent=0 // pred_check
    _
  $region15: #{generator_forward.7} parent=0 // pred_check_branch
    %954 = sbr.rel (0) target = $region17
  $region16: #{generator_forward.7} parent=0 // pred_region
    _
  $region17: #{generator_forward.7} parent=0 // pred_fallthru
    _

</llo_original>
